<compile_context>
chip_gen: v5e
topology: v5e:2x2
jax: 0.10.0
libtpu: 0.0.40
codegen_flags: <defaults>
</compile_context>

<pallas_src>
import functools

import jax
import jax.numpy as jnp
import numpy as np
from jax.experimental import pallas as pl
from jax.experimental.pallas import tpu as pltpu


def restyle_kernel(x_ref, avg_img_ref, lat_avg_ref,
                   wenc_x_ref, benc_ref, bdec_ref,
                   wenc_y_hbm, wdec_hbm,
                   z_out_ref,
                   wy_vmem, wd_vmem, dma_sem, *, iters):
    """Whole (small) problem resident in VMEM; kernel runs once (no grid).

    x_ref       : (Bp, F)  f32 flattened input image, batch padded to 16.
    avg_img_ref : (1, F)   f32 flattened avg_image (broadcast -> Y[0])
    lat_avg_ref : (1, S)   f32 flattened latent_avg (broadcast -> Z[0])
    wenc_x_ref  : (F, S)   bf16 encoder weight (x half of channel-concat), VMEM
    benc_ref    : (1, S)   f32 encoder bias
    bdec_ref    : (1, F)   f32 decoder bias
    wenc_y_hbm  : (F, S)   bf16 encoder weight (y half), raw HBM ref
    wdec_hbm    : (S, F)   bf16 decoder (synthesis) weight, raw HBM ref
    z_out_ref   : (Bp, S)  f32 Z[-1]
    wy_vmem     : (F, S)   bf16 VMEM scratch (landing buffer for wenc_y)
    wd_vmem     : (S, F)   bf16 VMEM scratch (landing buffer for wdec)
    dma_sem     : DMA semaphores (2,)
    """
    # Kick off the loop-weight DMAs first so they overlap with the hoisted
    # x-contribution matmul below (P4-style manual overlap, single-shot).
    cp_wy = pltpu.make_async_copy(wenc_y_hbm, wy_vmem, dma_sem.at[0])
    cp_wd = pltpu.make_async_copy(wdec_hbm, wd_vmem, dma_sem.at[1])
    cp_wy.start()
    cp_wd.start()

    x = x_ref[...]                                             # f32 (Bp, F)
    y0 = jnp.broadcast_to(avg_img_ref[...], x.shape)           # Y[0] = avg_image
    z0 = jnp.broadcast_to(lat_avg_ref[...], z_out_ref.shape)   # Z[0] = latent_avg
    bdec = bdec_ref[...]

    # x contribution + encoder bias are iteration-invariant -> hoist.
    # bf16 operands straight to the MXU, f32 accumulation.
    enc_xb = (jnp.dot(x.astype(jnp.bfloat16), wenc_x_ref[...],
                      preferred_element_type=jnp.float32)
              + benc_ref[...])

    # Block only now — the enc_x matmul above ran under the weight DMA.
    cp_wy.wait()
    cp_wd.wait()

    def body(_, carry):
        y, z = carry
        # z <- z + encoder(cat([x, y], channel_dim))   (split-weight form)
        enc = enc_xb + jnp.dot(y.astype(jnp.bfloat16), wy_vmem[...],
                               preferred_element_type=jnp.float32)
        z = z + enc
        # y <- decoder.synthesis(z)
        y = jnp.tanh(jnp.dot(z.astype(jnp.bfloat16), wd_vmem[...],
                             preferred_element_type=jnp.float32) + bdec)
        return y, z

    _, z = jax.lax.fori_loop(0, iters, body, (y0, z0), unroll=True)
    z_out_ref[...] = z
    # TODO(synk): real pSp encoder / StyleGAN2 synthesis (convs, modulated
    # convs, upsampling) are external injected modules; linear stand-ins here.


def restyle_forward(x, avg_image, latent_avg, params, iters=3):
    """x: (B, C, H, W) NCHW; avg_image: (C, H, W); latent_avg: (n_styles, D)."""
    B, C, H, W = x.shape
    F = C * H * W
    n_styles, D = latent_avg.shape
    S = n_styles * D
    wenc_x, wenc_y, benc, wdec, bdec = params

    # Pad batch to a multiple of 16 (bf16 packs 16 rows per sublane vreg) so
    # the bf16 MXU feed and the f32 output store stay unmasked / fully packed.
    Bp = max(16, ((B + 15) // 16) * 16)
    x_flat = jnp.zeros((Bp, F), jnp.float32).at[:B].set(
        x.reshape(B, F).astype(jnp.float32))
    avg_flat = avg_image.reshape(1, F).astype(jnp.float32)
    lat_flat = latent_avg.reshape(1, S).astype(jnp.float32)

    # Memory-space-only specs: VMEM operands are copied whole exactly once (no
    # grid => no pointless double-buffering); the two loop weights stay in HBM
    # and are DMA'd manually inside the kernel so the copy overlaps compute.
    vmem = pl.BlockSpec(memory_space=pltpu.MemorySpace.VMEM)
    hbm = pl.BlockSpec(memory_space=pl.ANY)

    def nbytes(a):
        return int(np.prod(a.shape)) * jnp.dtype(a.dtype).itemsize

    resident_bytes = (
        nbytes(x_flat) + nbytes(avg_flat) + nbytes(lat_flat)
        + nbytes(wenc_x) + nbytes(benc) + nbytes(bdec)
        + nbytes(wenc_y) + nbytes(wdec)            # VMEM landing scratch
        + Bp * S * 4)                              # f32 output
    # 2x headroom for unrolled-loop temporaries / compiler scratch; keep well
    # under the scoped default on every generation (v7x: 32 MiB of 64 MiB).
    vmem_limit = int(2 * resident_bytes + (4 << 20))

    kernel = functools.partial(restyle_kernel, iters=iters)
    z = pl.pallas_call(
        kernel,
        out_shape=jax.ShapeDtypeStruct((Bp, S), jnp.float32),
        in_specs=[vmem, vmem, vmem, vmem, vmem, vmem, hbm, hbm],
        out_specs=vmem,
        scratch_shapes=[
            pltpu.VMEM((F, S), jnp.bfloat16),      # wenc_y landing buffer
            pltpu.VMEM((S, F), jnp.bfloat16),      # wdec landing buffer
            pltpu.SemaphoreType.DMA((2,)),
        ],
        compiler_params=pltpu.CompilerParams(vmem_limit_bytes=vmem_limit),
    )(x_flat, avg_flat, lat_flat, wenc_x, benc, bdec, wenc_y, wdec)
    return z[:B].reshape(B, n_styles, D)


def restyle_ref(x, avg_image, latent_avg, params, iters=3):
    """Pure-JAX reference mirroring the PyTorch forward loop exactly.

    The spec uses bf16 weights and bf16 MXU operands with f32 accumulation
    (same dtype choices as the kernel), so it is the exact mathematical spec
    the kernel must reproduce up to FP summation-order differences.
    """
    wenc_x, wenc_y, benc, wdec, bdec = params
    B, C, H, W = x.shape
    F = C * H * W
    n_styles, D = latent_avg.shape
    wenc = jnp.concatenate([wenc_x, wenc_y], axis=0)            # bf16 (2F, S)

    y = jnp.broadcast_to(avg_image[None], x.shape)              # Y[0]
    z = jnp.broadcast_to(latent_avg[None],
                         (B, n_styles, D)).astype(jnp.float32)  # Z[0]
    for _ in range(iters):
        cat = jnp.concatenate([x, y], axis=1).reshape(B, 2 * F)  # (B, 2F)
        enc = jnp.dot(cat.astype(jnp.bfloat16), wenc,
                      preferred_element_type=jnp.float32) + benc
        z = z + enc.reshape(B, n_styles, D)
        y = jnp.tanh(jnp.dot(z.reshape(B, -1).astype(jnp.bfloat16), wdec,
                             preferred_element_type=jnp.float32)
                     + bdec).reshape(B, C, H, W)
    return z


if __name__ == "__main__":
    B, C, H, W = 2, 4, 16, 16
    n_styles, D = 8, 32
    F = C * H * W
    S = n_styles * D

    key = jax.random.PRNGKey(0)
    ks = jax.random.split(key, 8)
    x = jax.random.normal(ks[0], (B, C, H, W), jnp.float32)
    avg_image = jax.random.normal(ks[1], (C, H, W), jnp.float32)
    latent_avg = jax.random.normal(ks[2], (n_styles, D), jnp.float32) * 0.1
    # Weight matrices stored in bf16 (what the kernel streams / feeds the
    # MXU); biases f32.
    wenc_x = (jax.random.normal(ks[3], (F, S), jnp.float32) * 0.02).astype(jnp.bfloat16)
    wenc_y = (jax.random.normal(ks[4], (F, S), jnp.float32) * 0.02).astype(jnp.bfloat16)
    benc = jax.random.normal(ks[5], (1, S), jnp.float32) * 0.01
    wdec = (jax.random.normal(ks[6], (S, F), jnp.float32) * 0.05).astype(jnp.bfloat16)
    bdec = jax.random.normal(ks[7], (1, F), jnp.float32) * 0.01
    params = (wenc_x, wenc_y, benc, wdec, bdec)

    z = restyle_forward(x, avg_image, latent_avg, params, iters=3)
    jax.block_until_ready(z)

    z_ref = restyle_ref(x, avg_image, latent_avg, params, iters=3)
    np.testing.assert_allclose(np.asarray(z), np.asarray(z_ref),
                               rtol=1e-3, atol=1e-3)
    print("KERNEL_OK")
</pallas_src>

<mosaic_0001>
module attributes {stable_mosaic.version = 11 : i64} {
  func.func @restyle_kernel(%arg0: memref<16x1024xf32, #tpu.memory_space<vmem>>, %arg1: memref<1x1024xf32, #tpu.memory_space<vmem>>, %arg2: memref<1x256xf32, #tpu.memory_space<vmem>>, %arg3: memref<1024x256xbf16, #tpu.memory_space<vmem>>, %arg4: memref<1x256xf32, #tpu.memory_space<vmem>>, %arg5: memref<1x1024xf32, #tpu.memory_space<vmem>>, %arg6: memref<1024x256xbf16, #tpu.memory_space<any>>, %arg7: memref<256x1024xbf16, #tpu.memory_space<any>>, %arg8: memref<16x256xf32, #tpu.memory_space<vmem>>, %arg9: memref<1024x256xbf16, #tpu.memory_space<vmem>>, %arg10: memref<256x1024xbf16, #tpu.memory_space<vmem>>, %arg11: memref<2x!tpu.dma_semaphore, #tpu.memory_space<semaphore_mem>>) attributes {dimension_semantics = [], scalar_prefetch = 0 : i64, scratch_operands = 3 : i64, tpu.core_type = #tpu.core_type<tc>} {
    %c0_i32 = arith.constant 0 : i32
    %0 = tpu.memref_slice %arg11[%c0_i32] : memref<2x!tpu.dma_semaphore, #tpu.memory_space<semaphore_mem>> -> memref<1x!tpu.dma_semaphore, #tpu.memory_space<semaphore_mem>>
    %1 = tpu.memref_squeeze %0 : memref<1x!tpu.dma_semaphore, #tpu.memory_space<semaphore_mem>> -> memref<!tpu.dma_semaphore, #tpu.memory_space<semaphore_mem>>
    tpu.enqueue_dma source(%arg6 : memref<1024x256xbf16, #tpu.memory_space<any>>) target(%arg9 : memref<1024x256xbf16, #tpu.memory_space<vmem>>) target_semaphore(%1 : memref<!tpu.dma_semaphore, #tpu.memory_space<semaphore_mem>>)
    %c1_i32 = arith.constant 1 : i32
    %2 = tpu.memref_slice %arg11[%c1_i32] : memref<2x!tpu.dma_semaphore, #tpu.memory_space<semaphore_mem>> -> memref<1x!tpu.dma_semaphore, #tpu.memory_space<semaphore_mem>>
    %3 = tpu.memref_squeeze %2 : memref<1x!tpu.dma_semaphore, #tpu.memory_space<semaphore_mem>> -> memref<!tpu.dma_semaphore, #tpu.memory_space<semaphore_mem>>
    tpu.enqueue_dma source(%arg7 : memref<256x1024xbf16, #tpu.memory_space<any>>) target(%arg10 : memref<256x1024xbf16, #tpu.memory_space<vmem>>) target_semaphore(%3 : memref<!tpu.dma_semaphore, #tpu.memory_space<semaphore_mem>>)
    %c0 = arith.constant 0 : index
    %c0_0 = arith.constant 0 : index
    %4 = vector.load %arg0[%c0, %c0_0] : memref<16x1024xf32, #tpu.memory_space<vmem>>, vector<16x1024xf32>
    %c0_1 = arith.constant 0 : index
    %c0_2 = arith.constant 0 : index
    %5 = vector.load %arg1[%c0_1, %c0_2] : memref<1x1024xf32, #tpu.memory_space<vmem>>, vector<1x1024xf32>
    %6 = vector.shape_cast %5 : vector<1x1024xf32> to vector<1x1024xf32>
    %7 = vector.broadcast %6 : vector<1x1024xf32> to vector<16x1024xf32>
    %c0_3 = arith.constant 0 : index
    %c0_4 = arith.constant 0 : index
    %8 = vector.load %arg2[%c0_3, %c0_4] : memref<1x256xf32, #tpu.memory_space<vmem>>, vector<1x256xf32>
    %9 = vector.shape_cast %8 : vector<1x256xf32> to vector<1x256xf32>
    %10 = vector.broadcast %9 : vector<1x256xf32> to vector<16x256xf32>
    %c0_5 = arith.constant 0 : index
    %c0_6 = arith.constant 0 : index
    %11 = vector.load %arg5[%c0_5, %c0_6] : memref<1x1024xf32, #tpu.memory_space<vmem>>, vector<1x1024xf32>
    %12 = arith.truncf %4 : vector<16x1024xf32> to vector<16x1024xbf16>
    %c0_7 = arith.constant 0 : index
    %c0_8 = arith.constant 0 : index
    %13 = vector.load %arg3[%c0_7, %c0_8] : memref<1024x256xbf16, #tpu.memory_space<vmem>>, vector<1024x256xbf16>
    %cst = arith.constant dense<0.000000e+00> : vector<16x256xf32>
    %14 = tpu.matmul %12, %13, %cst {dimension_numbers = #tpu.dot_dimension_numbers<[1], [0], [0], [1], [0, 0, 1, 1], [], []>} : vector<16x1024xbf16>, vector<1024x256xbf16>, vector<16x256xf32> -> vector<16x256xf32>
    %c0_9 = arith.constant 0 : index
    %c0_10 = arith.constant 0 : index
    %15 = vector.load %arg4[%c0_9, %c0_10] : memref<1x256xf32, #tpu.memory_space<vmem>>, vector<1x256xf32>
    %16 = vector.broadcast %15 : vector<1x256xf32> to vector<16x256xf32>
    %17 = arith.addf %14, %16 : vector<16x256xf32>
    %c0_i32_11 = arith.constant 0 : i32
    %18 = tpu.memref_slice %arg11[%c0_i32_11] : memref<2x!tpu.dma_semaphore, #tpu.memory_space<semaphore_mem>> -> memref<1x!tpu.dma_semaphore, #tpu.memory_space<semaphore_mem>>
    %19 = tpu.memref_squeeze %18 : memref<1x!tpu.dma_semaphore, #tpu.memory_space<semaphore_mem>> -> memref<!tpu.dma_semaphore, #tpu.memory_space<semaphore_mem>>
    tpu.wait_dma2 semaphore(%19 : memref<!tpu.dma_semaphore, #tpu.memory_space<semaphore_mem>>) src(%arg6 : memref<1024x256xbf16, #tpu.memory_space<any>>) dst(%arg9 : memref<1024x256xbf16, #tpu.memory_space<vmem>>)
    %c1_i32_12 = arith.constant 1 : i32
    %20 = tpu.memref_slice %arg11[%c1_i32_12] : memref<2x!tpu.dma_semaphore, #tpu.memory_space<semaphore_mem>> -> memref<1x!tpu.dma_semaphore, #tpu.memory_space<semaphore_mem>>
    %21 = tpu.memref_squeeze %20 : memref<1x!tpu.dma_semaphore, #tpu.memory_space<semaphore_mem>> -> memref<!tpu.dma_semaphore, #tpu.memory_space<semaphore_mem>>
    tpu.wait_dma2 semaphore(%21 : memref<!tpu.dma_semaphore, #tpu.memory_space<semaphore_mem>>) src(%arg7 : memref<256x1024xbf16, #tpu.memory_space<any>>) dst(%arg10 : memref<256x1024xbf16, #tpu.memory_space<vmem>>)
    %c0_i32_13 = arith.constant 0 : i32
    %22 = arith.truncf %7 : vector<16x1024xf32> to vector<16x1024xbf16>
    %c0_14 = arith.constant 0 : index
    %c0_15 = arith.constant 0 : index
    %23 = vector.load %arg9[%c0_14, %c0_15] : memref<1024x256xbf16, #tpu.memory_space<vmem>>, vector<1024x256xbf16>
    %cst_16 = arith.constant dense<0.000000e+00> : vector<16x256xf32>
    %24 = tpu.matmul %22, %23, %cst_16 {dimension_numbers = #tpu.dot_dimension_numbers<[1], [0], [0], [1], [0, 0, 1, 1], [], []>} : vector<16x1024xbf16>, vector<1024x256xbf16>, vector<16x256xf32> -> vector<16x256xf32>
    %25 = arith.addf %17, %24 : vector<16x256xf32>
    %26 = arith.addf %10, %25 : vector<16x256xf32>
    %27 = arith.truncf %26 : vector<16x256xf32> to vector<16x256xbf16>
    %c0_17 = arith.constant 0 : index
    %c0_18 = arith.constant 0 : index
    %28 = vector.load %arg10[%c0_17, %c0_18] : memref<256x1024xbf16, #tpu.memory_space<vmem>>, vector<256x1024xbf16>
    %cst_19 = arith.constant dense<0.000000e+00> : vector<16x1024xf32>
    %29 = tpu.matmul %27, %28, %cst_19 {dimension_numbers = #tpu.dot_dimension_numbers<[1], [0], [0], [1], [0, 0, 1, 1], [], []>} : vector<16x256xbf16>, vector<256x1024xbf16>, vector<16x1024xf32> -> vector<16x1024xf32>
    %30 = vector.broadcast %11 : vector<1x1024xf32> to vector<16x1024xf32>
    %31 = arith.addf %29, %30 : vector<16x1024xf32>
    %32 = math.tanh %31 : vector<16x1024xf32>
    %c1_i32_20 = arith.constant 1 : i32
    %33 = arith.truncf %32 : vector<16x1024xf32> to vector<16x1024xbf16>
    %c0_21 = arith.constant 0 : index
    %c0_22 = arith.constant 0 : index
    %34 = vector.load %arg9[%c0_21, %c0_22] : memref<1024x256xbf16, #tpu.memory_space<vmem>>, vector<1024x256xbf16>
    %cst_23 = arith.constant dense<0.000000e+00> : vector<16x256xf32>
    %35 = tpu.matmul %33, %34, %cst_23 {dimension_numbers = #tpu.dot_dimension_numbers<[1], [0], [0], [1], [0, 0, 1, 1], [], []>} : vector<16x1024xbf16>, vector<1024x256xbf16>, vector<16x256xf32> -> vector<16x256xf32>
    %36 = arith.addf %17, %35 : vector<16x256xf32>
    %37 = arith.addf %26, %36 : vector<16x256xf32>
    %38 = arith.truncf %37 : vector<16x256xf32> to vector<16x256xbf16>
    %c0_24 = arith.constant 0 : index
    %c0_25 = arith.constant 0 : index
    %39 = vector.load %arg10[%c0_24, %c0_25] : memref<256x1024xbf16, #tpu.memory_space<vmem>>, vector<256x1024xbf16>
    %cst_26 = arith.constant dense<0.000000e+00> : vector<16x1024xf32>
    %40 = tpu.matmul %38, %39, %cst_26 {dimension_numbers = #tpu.dot_dimension_numbers<[1], [0], [0], [1], [0, 0, 1, 1], [], []>} : vector<16x256xbf16>, vector<256x1024xbf16>, vector<16x1024xf32> -> vector<16x1024xf32>
    %41 = vector.broadcast %11 : vector<1x1024xf32> to vector<16x1024xf32>
    %42 = arith.addf %40, %41 : vector<16x1024xf32>
    %43 = math.tanh %42 : vector<16x1024xf32>
    %c2_i32 = arith.constant 2 : i32
    %44 = arith.truncf %43 : vector<16x1024xf32> to vector<16x1024xbf16>
    %c0_27 = arith.constant 0 : index
    %c0_28 = arith.constant 0 : index
    %45 = vector.load %arg9[%c0_27, %c0_28] : memref<1024x256xbf16, #tpu.memory_space<vmem>>, vector<1024x256xbf16>
    %cst_29 = arith.constant dense<0.000000e+00> : vector<16x256xf32>
    %46 = tpu.matmul %44, %45, %cst_29 {dimension_numbers = #tpu.dot_dimension_numbers<[1], [0], [0], [1], [0, 0, 1, 1], [], []>} : vector<16x1024xbf16>, vector<1024x256xbf16>, vector<16x256xf32> -> vector<16x256xf32>
    %47 = arith.addf %17, %46 : vector<16x256xf32>
    %48 = arith.addf %37, %47 : vector<16x256xf32>
    %49 = arith.truncf %48 : vector<16x256xf32> to vector<16x256xbf16>
    %c0_30 = arith.constant 0 : index
    %c0_31 = arith.constant 0 : index
    %50 = vector.load %arg10[%c0_30, %c0_31] : memref<256x1024xbf16, #tpu.memory_space<vmem>>, vector<256x1024xbf16>
    %cst_32 = arith.constant dense<0.000000e+00> : vector<16x1024xf32>
    %51 = tpu.matmul %49, %50, %cst_32 {dimension_numbers = #tpu.dot_dimension_numbers<[1], [0], [0], [1], [0, 0, 1, 1], [], []>} : vector<16x256xbf16>, vector<256x1024xbf16>, vector<16x1024xf32> -> vector<16x1024xf32>
    %52 = vector.broadcast %11 : vector<1x1024xf32> to vector<16x1024xf32>
    %53 = arith.addf %51, %52 : vector<16x1024xf32>
    %54 = math.tanh %53 : vector<16x1024xf32>
    %c0_33 = arith.constant 0 : index
    %c0_34 = arith.constant 0 : index
    %55 = vector.load %arg8[%c0_33, %c0_34] : memref<16x256xf32, #tpu.memory_space<vmem>>, vector<16x256xf32>
    tpu.vector_store %arg8[%c0_33, %c0_34], %48 {strides = array<i32>} : memref<16x256xf32, #tpu.memory_space<vmem>>, vector<16x256xf32>,
    return
  }
}

</mosaic_0001>

<llo_original>
// kernel: tpu_custom_call.1
$region0: #{tpu_custom_call.1}
  #allocation0 [shape = 'u32[]', space=smem, size = 0x4, offset = 0x4, fixed_abs, tag = 'smem constant byte address 0x4 - core index']
  #allocation1 [shape = 'u32[72,128]{1,0:T(1,128)}', space=vmem, size = 0x9000, scoped, tag = 'internal scratch']
  #allocation2 [shape = 'bf16[1024,256]{1,0:T(8,128)(2,1)}', space=vmem, size = 0x80000, scoped, tag = 'scratch operand']
  #allocation3 [shape = 'bf16[256,1024]{1,0:T(8,128)(2,1)}', space=vmem, size = 0x80000, scoped, tag = 'scratch operand']
  #allocation4 [shape = 's32[2]{0}', space=sflag, size = 0x8, scoped, tag = 'scratch operand']
  #allocation15 [shape = 's32[]', space=sflag, size = 0x4, offset = 0, fixed_abs, tag = 'sflag constant byte address 0x0 - dummy sync flag']
  #allocation16 [shape = 's32[]', space=sflag, size = 0x4, offset = 0, fixed_abs, tag = 'sflag constant byte address 0x0 - dummy sync flag']
  #allocation17 [shape = 'u32[]', space=smem, size = 0x4, offset = 0x44, fixed_abs, tag = 'smem constant byte address 0x44 - assertion arg 0']
  #allocation18 [shape = 'u32[]', space=smem, size = 0x4, offset = 0x48, fixed_abs, tag = 'smem constant byte address 0x48 - assertion arg 1']
  #allocation19 [shape = 's32[]', space=sflag, size = 0x4, offset = 0, fixed_abs, tag = 'sflag constant byte address 0x0 - dummy sync flag']
  #allocation20 [shape = 's32[]', space=sflag, size = 0x4, offset = 0, fixed_abs, tag = 'sflag constant byte address 0x0 - dummy sync flag']
  %s0 = inlined_call_operand.hbm [shape: f32[16,1024], index: 0, kind: input, shape index: {}]
  %s1 = inlined_call_operand.hbm [shape: f32[1,1024], index: 1, kind: input, shape index: {}]
  %s2 = inlined_call_operand.hbm [shape: f32[1,256], index: 2, kind: input, shape index: {}]
  %s3 = inlined_call_operand.hbm [shape: bf16[1024,256], index: 3, kind: input, shape index: {}]
  %s4 = inlined_call_operand.vmem [shape: f32[1,256], index: 4, kind: input, shape index: {}]
  %s5 = inlined_call_operand.hbm [shape: f32[1,1024], index: 5, kind: input, shape index: {}]
  %s6 = inlined_call_operand.hbm [shape: bf16[1024,256], index: 6, kind: input, shape index: {}]
  %s7 = inlined_call_operand.hbm [shape: bf16[256,1024], index: 7, kind: input, shape index: {}]
  %s8 = inlined_call_operand.hbm [shape: f32[16,256], index: 8, kind: output, shape index: {}]
  %s9 = sld [smem:[#allocation0]]
  $region62: #{tpu_custom_call.1} parent=0
    _
  %s11 = ssub.s32 1, %s9
  %s12 = scalar_select 0, %s11, %s9
  $region1: #{tpu_custom_call.1} parent=0
    #allocation5 [shape = 'u8[65536]{0}', space=vmem, size = 0x10000, scoped, tag = 'input window, operand 0, single buffered']
    #allocation6 [shape = 's32[1]{0}', space=sflag, size = 0x4, scoped, tag = 'scoped memory for tpu_custom_call.1']
    #allocation7 [shape = 's32[1]{0}', space=sflag, size = 0x4, scoped, tag = 'scoped memory for tpu_custom_call.1']
    #allocation8 [shape = 'u8[4096]{0}', space=vmem, size = 0x1000, scoped, tag = 'input window, operand 1, single buffered']
    #allocation9 [shape = 's32[1]{0}', space=sflag, size = 0x4, scoped, tag = 'scoped memory for tpu_custom_call.1']
    #allocation10 [shape = 'u8[1024]{0}', space=vmem, size = 0x400, scoped, tag = 'input window, operand 2, single buffered']
    #allocation11 [shape = 'u8[524288]{0}', space=vmem, size = 0x80000, scoped, tag = 'input window, operand 3, single buffered']
    #allocation12 [shape = 's32[1]{0}', space=sflag, size = 0x4, scoped, tag = 'scoped memory for tpu_custom_call.1']
    #allocation13 [shape = 'u8[4096]{0}', space=vmem, size = 0x1000, scoped, tag = 'input window, operand 5, single buffered']
    #allocation14 [shape = 'u8[16384]{0}', space=vmem, size = 0x4000, scoped, tag = 'output window, operand 0, single buffered']
    %13 = vsyncpa [#allocation6], 0
    %14 = vsyncpa [#allocation9], 0
    %15 = vsyncpa [#allocation12], 0
    %16 = vsyncpa [#allocation7], 0
    // Predicated region
    $region2: #{tpu_custom_call.1} parent=1 // pred_check
      _
    $region3: #{tpu_custom_call.1} parent=1 // pred_check_branch
      %18 = sbr.rel (0) target = $region5
    $region4: #{tpu_custom_call.1} parent=1 // pred_region
      %20 = vsyncadd [#allocation6], 0
      %s21 = sshll.u32 %s0, 4
      %s22 = int_to_ptr.hbm [resolvable:$true] %s21
      %s23 = sshll.u32 [#allocation5], 4
      %s24 = int_to_ptr.vmem [resolvable:$true] %s23
      %29 = dma.hbm_to_vmem [thread:$0]  %s22, 2048, %s24, [#allocation6], 1024, 1024, 64
    $region5: #{tpu_custom_call.1} parent=1 // pred_fallthru
      _
    // Predicated region
    $region6: #{tpu_custom_call.1} parent=1 // pred_check
      _
    $region7: #{tpu_custom_call.1} parent=1 // pred_check_branch
      %31 = sbr.rel (0) target = $region9
    $region8: #{tpu_custom_call.1} parent=1 // pred_region
      %33 = vsyncadd [#allocation9], 0
      %s35 = sshll.u32 %s1, 4
      %s36 = int_to_ptr.hbm [resolvable:$true] %s35
      %s37 = sshll.u32 [#allocation8], 4
      %s38 = int_to_ptr.vmem [resolvable:$true] %s37
      %40 = dma.hbm_to_vmem [thread:$0]  %s36, 128, %s38, [#allocation9]
    $region9: #{tpu_custom_call.1} parent=1 // pred_fallthru
      _
    // Predicated region
    $region10: #{tpu_custom_call.1} parent=1 // pred_check
      _
    $region11: #{tpu_custom_call.1} parent=1 // pred_check_branch
      %42 = sbr.rel (0) target = $region13
    $region12: #{tpu_custom_call.1} parent=1 // pred_region
      %44 = vsyncadd [#allocation9], 0
      %s46 = sshll.u32 %s2, 4
      %s47 = int_to_ptr.hbm [resolvable:$true] %s46
      %s48 = sshll.u32 [#allocation10], 4
      %s49 = int_to_ptr.vmem [resolvable:$true] %s48
      %51 = dma.hbm_to_vmem [thread:$0]  %s47, 32, %s49, [#allocation9]
    $region13: #{tpu_custom_call.1} parent=1 // pred_fallthru
      _
    // Predicated region
    $region14: #{tpu_custom_call.1} parent=1 // pred_check
      _
    $region15: #{tpu_custom_call.1} parent=1 // pred_check_branch
      %53 = sbr.rel (0) target = $region17
    $region16: #{tpu_custom_call.1} parent=1 // pred_region
      %55 = vsyncadd [#allocation12], 0
      %s56 = sshll.u32 %s3, 4
      %s57 = int_to_ptr.hbm [resolvable:$true] %s56
      %s58 = sshll.u32 [#allocation11], 4
      %s59 = int_to_ptr.vmem [resolvable:$true] %s58
      %64 = dma.hbm_to_vmem [thread:$0]  %s57, 16384, %s59, [#allocation12], 128, 128, 8
    $region17: #{tpu_custom_call.1} parent=1 // pred_fallthru
      _
    // Predicated region
    $region18: #{tpu_custom_call.1} parent=1 // pred_check
      _
    $region19: #{tpu_custom_call.1} parent=1 // pred_check_branch
      %66 = sbr.rel (0) target = $region21
    $region20: #{tpu_custom_call.1} parent=1 // pred_region
      _
    $region21: #{tpu_custom_call.1} parent=1 // pred_fallthru
      _
    // Predicated region
    $region22: #{tpu_custom_call.1} parent=1 // pred_check
      _
    $region23: #{tpu_custom_call.1} parent=1 // pred_check_branch
      %68 = sbr.rel (0) target = $region25
    $region24: #{tpu_custom_call.1} parent=1 // pred_region
      %70 = vsyncadd [#allocation12], 0
      %s72 = sshll.u32 %s5, 4
      %s73 = int_to_ptr.hbm [resolvable:$true] %s72
      %s74 = sshll.u32 [#allocation13], 4
      %s75 = int_to_ptr.vmem [resolvable:$true] %s74
      %77 = dma.hbm_to_vmem [thread:$0]  %s73, 128, %s75, [#allocation12]
    $region25: #{tpu_custom_call.1} parent=1 // pred_fallthru
      _
    // Predicated region
    $region26: #{tpu_custom_call.1} parent=1 // pred_check
      _
    $region27: #{tpu_custom_call.1} parent=1 // pred_check_branch
      %79 = sbr.rel (0) target = $region29
    $region28: #{tpu_custom_call.1} parent=1 // pred_region
      %81 = dma.done [#allocation6], 2048
    $region29: #{tpu_custom_call.1} parent=1 // pred_fallthru
      _
    // Predicated region
    $region30: #{tpu_custom_call.1} parent=1 // pred_check
      _
    $region31: #{tpu_custom_call.1} parent=1 // pred_check_branch
      %83 = sbr.rel (0) target = $region33
    $region32: #{tpu_custom_call.1} parent=1 // pred_region
      %85 = dma.done [#allocation9], 128
    $region33: #{tpu_custom_call.1} parent=1 // pred_fallthru
      _
    // Predicated region
    $region34: #{tpu_custom_call.1} parent=1 // pred_check
      _
    $region35: #{tpu_custom_call.1} parent=1 // pred_check_branch
      %87 = sbr.rel (0) target = $region37
    $region36: #{tpu_custom_call.1} parent=1 // pred_region
      %89 = dma.done [#allocation9], 32
    $region37: #{tpu_custom_call.1} parent=1 // pred_fallthru
      _
    // Predicated region
    $region38: #{tpu_custom_call.1} parent=1 // pred_check
      _
    $region39: #{tpu_custom_call.1} parent=1 // pred_check_branch
      %91 = sbr.rel (0) target = $region41
    $region40: #{tpu_custom_call.1} parent=1 // pred_region
      %93 = dma.done [#allocation12], 16384
    $region41: #{tpu_custom_call.1} parent=1 // pred_fallthru
      _
    // Predicated region
    $region42: #{tpu_custom_call.1} parent=1 // pred_check
      _
    $region43: #{tpu_custom_call.1} parent=1 // pred_check_branch
      %95 = sbr.rel (0) target = $region45
    $region44: #{tpu_custom_call.1} parent=1 // pred_region
      %97 = dma.done [#allocation12], 128
    $region45: #{tpu_custom_call.1} parent=1 // pred_fallthru
      _
    // Predicated region
    $region46: #{tpu_custom_call.1} parent=1 // pred_check
      _
    $region47: #{tpu_custom_call.1} parent=1 // pred_check_branch
      %99 = sbr.rel target = $region49
    $region48: #{tpu_custom_call.1} parent=1 // pred_region
      %100 = sst [smem:[#allocation17]] [#allocation16]
      %101 = sst [smem:[#allocation18]] [#allocation15]
    $region49: #{tpu_custom_call.1} parent=1 // pred_fallthru
      _
    %103 = shalt.err (0)
    %s105 = sshll.u32 %s6, 4
    %s106 = int_to_ptr.hbm [resolvable:$true] %s105
    %s107 = sshll.u32 [#allocation2], 4
    %s108 = int_to_ptr.vmem [resolvable:$true] %s107
    %110 = dma.hbm_to_vmem [thread:$0]  %s106, 16384, %s108, [#allocation4]
    %s111 = scalar_lea.sflag [#allocation4], 1
    // Predicated region
    $region50: #{tpu_custom_call.1} parent=1 // pred_check
      _
    $region51: #{tpu_custom_call.1} parent=1 // pred_check_branch
      %113 = sbr.rel target = $region53
    $region52: #{tpu_custom_call.1} parent=1 // pred_region
      %114 = sst [smem:[#allocation17]] [#allocation20]
      %115 = sst [smem:[#allocation18]] [#allocation19]
    $region53: #{tpu_custom_call.1} parent=1 // pred_fallthru
      _
    %117 = shalt.err (0)
    %s119 = sshll.u32 %s7, 4
    %s120 = int_to_ptr.hbm [resolvable:$true] %s119
    %s121 = sshll.u32 [#allocation3], 4
    %s122 = int_to_ptr.vmem [resolvable:$true] %s121
    %124 = dma.hbm_to_vmem [thread:$0]  %s120, 16384, %s122, %s111
    %v125 = vld [vmem:[#allocation5] sm:$0xff]
    %v126 = vld [vmem:[#allocation5 + $0x8] sm:$0xff]
    %v127 = vld [vmem:[#allocation5 + $0x10] sm:$0xff]
    %v128 = vld [vmem:[#allocation5 + $0x18] sm:$0xff]
    %v129 = vld [vmem:[#allocation5 + $0x20] sm:$0xff]
    %v130 = vld [vmem:[#allocation5 + $0x28] sm:$0xff]
    %v131 = vld [vmem:[#allocation5 + $0x30] sm:$0xff]
    %v132 = vld [vmem:[#allocation5 + $0x38] sm:$0xff]
    %v133 = vld [vmem:[#allocation5 + $0x40] sm:$0xff]
    %v134 = vld [vmem:[#allocation5 + $0x48] sm:$0xff]
    %v135 = vld [vmem:[#allocation5 + $0x50] sm:$0xff]
    %v136 = vld [vmem:[#allocation5 + $0x58] sm:$0xff]
    %v137 = vld [vmem:[#allocation5 + $0x60] sm:$0xff]
    %v138 = vld [vmem:[#allocation5 + $0x68] sm:$0xff]
    %v139 = vld [vmem:[#allocation5 + $0x70] sm:$0xff]
    %v140 = vld [vmem:[#allocation5 + $0x78] sm:$0xff]
    %v141 = vld [vmem:[#allocation8] sm:$0xff]
    %v143 = vperm.slane %v141, 0
    %v144 = vperm.slane %v141, 1
    %v145 = vperm.slane %v141, 2
    %v146 = vperm.slane %v141, 3
    %v147 = vperm.slane %v141, 4
    %v148 = vperm.slane %v141, 5
    %v149 = vperm.slane %v141, 6
    %v150 = vperm.slane %v141, 7
    %v159 = vld [vmem:[#allocation10] sm:$0x3]
    %v161 = vperm.slane %v159, 0
    %v162 = vperm.slane %v159, 1
    %v165 = vld [vmem:[#allocation13] sm:$0xff]
    %v166 = vpack.c.bf16 %v133, %v125
    %v167 = vpack.c.bf16 %v134, %v126
    %v168 = vpack.c.bf16 %v135, %v127
    %v169 = vpack.c.bf16 %v136, %v128
    %v170 = vpack.c.bf16 %v137, %v129
    %v171 = vpack.c.bf16 %v138, %v130
    %v172 = vpack.c.bf16 %v139, %v131
    %v173 = vpack.c.bf16 %v140, %v132
    %v174 = vld [vmem:[#allocation11] sm:$0xff]
    %v175 = vld [vmem:[#allocation11 + $0x8] sm:$0xff]
    %v176 = vld [vmem:[#allocation11 + $0x10] sm:$0xff]
    %v177 = vld [vmem:[#allocation11 + $0x18] sm:$0xff]
    %v178 = vld [vmem:[#allocation11 + $0x20] sm:$0xff]
    %v179 = vld [vmem:[#allocation11 + $0x28] sm:$0xff]
    %v180 = vld [vmem:[#allocation11 + $0x30] sm:$0xff]
    %v181 = vld [vmem:[#allocation11 + $0x38] sm:$0xff]
    %v182 = vld [vmem:[#allocation11 + $0x40] sm:$0xff]
    %v183 = vld [vmem:[#allocation11 + $0x48] sm:$0xff]
    %v184 = vld [vmem:[#allocation11 + $0x50] sm:$0xff]
    %v185 = vld [vmem:[#allocation11 + $0x58] sm:$0xff]
    %v186 = vld [vmem:[#allocation11 + $0x60] sm:$0xff]
    %v187 = vld [vmem:[#allocation11 + $0x68] sm:$0xff]
    %v188 = vld [vmem:[#allocation11 + $0x70] sm:$0xff]
    %v189 = vld [vmem:[#allocation11 + $0x78] sm:$0xff]
    %v190 = vld [vmem:[#allocation11 + $0x80] sm:$0xff]
    %v191 = vld [vmem:[#allocation11 + $0x88] sm:$0xff]
    %v192 = vld [vmem:[#allocation11 + $0x90] sm:$0xff]
    %v193 = vld [vmem:[#allocation11 + $0x98] sm:$0xff]
    %v194 = vld [vmem:[#allocation11 + $0xa0] sm:$0xff]
    %v195 = vld [vmem:[#allocation11 + $0xa8] sm:$0xff]
    %v196 = vld [vmem:[#allocation11 + $0xb0] sm:$0xff]
    %v197 = vld [vmem:[#allocation11 + $0xb8] sm:$0xff]
    %v198 = vld [vmem:[#allocation11 + $0xc0] sm:$0xff]
    %v199 = vld [vmem:[#allocation11 + $0xc8] sm:$0xff]
    %v200 = vld [vmem:[#allocation11 + $0xd0] sm:$0xff]
    %v201 = vld [vmem:[#allocation11 + $0xd8] sm:$0xff]
    %v202 = vld [vmem:[#allocation11 + $0xe0] sm:$0xff]
    %v203 = vld [vmem:[#allocation11 + $0xe8] sm:$0xff]
    %v204 = vld [vmem:[#allocation11 + $0xf0] sm:$0xff]
    %v205 = vld [vmem:[#allocation11 + $0xf8] sm:$0xff]
    %v206 = vld [vmem:[#allocation11 + $0x100] sm:$0xff]
    %v207 = vld [vmem:[#allocation11 + $0x108] sm:$0xff]
    %v208 = vld [vmem:[#allocation11 + $0x110] sm:$0xff]
    %v209 = vld [vmem:[#allocation11 + $0x118] sm:$0xff]
    %v210 = vld [vmem:[#allocation11 + $0x120] sm:$0xff]
    %v211 = vld [vmem:[#allocation11 + $0x128] sm:$0xff]
    %v212 = vld [vmem:[#allocation11 + $0x130] sm:$0xff]
    %v213 = vld [vmem:[#allocation11 + $0x138] sm:$0xff]
    %v214 = vld [vmem:[#allocation11 + $0x140] sm:$0xff]
    %v215 = vld [vmem:[#allocation11 + $0x148] sm:$0xff]
    %v216 = vld [vmem:[#allocation11 + $0x150] sm:$0xff]
    %v217 = vld [vmem:[#allocation11 + $0x158] sm:$0xff]
    %v218 = vld [vmem:[#allocation11 + $0x160] sm:$0xff]
    %v219 = vld [vmem:[#allocation11 + $0x168] sm:$0xff]
    %v220 = vld [vmem:[#allocation11 + $0x170] sm:$0xff]
    %v221 = vld [vmem:[#allocation11 + $0x178] sm:$0xff]
    %v222 = vld [vmem:[#allocation11 + $0x180] sm:$0xff]
    %v223 = vld [vmem:[#allocation11 + $0x188] sm:$0xff]
    %v224 = vld [vmem:[#allocation11 + $0x190] sm:$0xff]
    %v225 = vld [vmem:[#allocation11 + $0x198] sm:$0xff]
    %v226 = vld [vmem:[#allocation11 + $0x1a0] sm:$0xff]
    %v227 = vld [vmem:[#allocation11 + $0x1a8] sm:$0xff]
    %v228 = vld [vmem:[#allocation11 + $0x1b0] sm:$0xff]
    %v229 = vld [vmem:[#allocation11 + $0x1b8] sm:$0xff]
    %v230 = vld [vmem:[#allocation11 + $0x1c0] sm:$0xff]
    %v231 = vld [vmem:[#allocation11 + $0x1c8] sm:$0xff]
    %v232 = vld [vmem:[#allocation11 + $0x1d0] sm:$0xff]
    %v233 = vld [vmem:[#allocation11 + $0x1d8] sm:$0xff]
    %v234 = vld [vmem:[#allocation11 + $0x1e0] sm:$0xff]
    %v235 = vld [vmem:[#allocation11 + $0x1e8] sm:$0xff]
    %v236 = vld [vmem:[#allocation11 + $0x1f0] sm:$0xff]
    %v237 = vld [vmem:[#allocation11 + $0x1f8] sm:$0xff]
    %v238 = vld [vmem:[#allocation11 + $0x200] sm:$0xff]
    %v239 = vld [vmem:[#allocation11 + $0x208] sm:$0xff]
    %v240 = vld [vmem:[#allocation11 + $0x210] sm:$0xff]
    %v241 = vld [vmem:[#allocation11 + $0x218] sm:$0xff]
    %v242 = vld [vmem:[#allocation11 + $0x220] sm:$0xff]
    %v243 = vld [vmem:[#allocation11 + $0x228] sm:$0xff]
    %v244 = vld [vmem:[#allocation11 + $0x230] sm:$0xff]
    %v245 = vld [vmem:[#allocation11 + $0x238] sm:$0xff]
    %v246 = vld [vmem:[#allocation11 + $0x240] sm:$0xff]
    %v247 = vld [vmem:[#allocation11 + $0x248] sm:$0xff]
    %v248 = vld [vmem:[#allocation11 + $0x250] sm:$0xff]
    %v249 = vld [vmem:[#allocation11 + $0x258] sm:$0xff]
    %v250 = vld [vmem:[#allocation11 + $0x260] sm:$0xff]
    %v251 = vld [vmem:[#allocation11 + $0x268] sm:$0xff]
    %v252 = vld [vmem:[#allocation11 + $0x270] sm:$0xff]
    %v253 = vld [vmem:[#allocation11 + $0x278] sm:$0xff]
    %v254 = vld [vmem:[#allocation11 + $0x280] sm:$0xff]
    %v255 = vld [vmem:[#allocation11 + $0x288] sm:$0xff]
    %v256 = vld [vmem:[#allocation11 + $0x290] sm:$0xff]
    %v257 = vld [vmem:[#allocation11 + $0x298] sm:$0xff]
    %v258 = vld [vmem:[#allocation11 + $0x2a0] sm:$0xff]
    %v259 = vld [vmem:[#allocation11 + $0x2a8] sm:$0xff]
    %v260 = vld [vmem:[#allocation11 + $0x2b0] sm:$0xff]
    %v261 = vld [vmem:[#allocation11 + $0x2b8] sm:$0xff]
    %v262 = vld [vmem:[#allocation11 + $0x2c0] sm:$0xff]
    %v263 = vld [vmem:[#allocation11 + $0x2c8] sm:$0xff]
    %v264 = vld [vmem:[#allocation11 + $0x2d0] sm:$0xff]
    %v265 = vld [vmem:[#allocation11 + $0x2d8] sm:$0xff]
    %v266 = vld [vmem:[#allocation11 + $0x2e0] sm:$0xff]
    %v267 = vld [vmem:[#allocation11 + $0x2e8] sm:$0xff]
    %v268 = vld [vmem:[#allocation11 + $0x2f0] sm:$0xff]
    %v269 = vld [vmem:[#allocation11 + $0x2f8] sm:$0xff]
    %v270 = vld [vmem:[#allocation11 + $0x300] sm:$0xff]
    %v271 = vld [vmem:[#allocation11 + $0x308] sm:$0xff]
    %v272 = vld [vmem:[#allocation11 + $0x310] sm:$0xff]
    %v273 = vld [vmem:[#allocation11 + $0x318] sm:$0xff]
    %v274 = vld [vmem:[#allocation11 + $0x320] sm:$0xff]
    %v275 = vld [vmem:[#allocation11 + $0x328] sm:$0xff]
    %v276 = vld [vmem:[#allocation11 + $0x330] sm:$0xff]
    %v277 = vld [vmem:[#allocation11 + $0x338] sm:$0xff]
    %v278 = vld [vmem:[#allocation11 + $0x340] sm:$0xff]
    %v279 = vld [vmem:[#allocation11 + $0x348] sm:$0xff]
    %v280 = vld [vmem:[#allocation11 + $0x350] sm:$0xff]
    %v281 = vld [vmem:[#allocation11 + $0x358] sm:$0xff]
    %v282 = vld [vmem:[#allocation11 + $0x360] sm:$0xff]
    %v283 = vld [vmem:[#allocation11 + $0x368] sm:$0xff]
    %v284 = vld [vmem:[#allocation11 + $0x370] sm:$0xff]
    %v285 = vld [vmem:[#allocation11 + $0x378] sm:$0xff]
    %v286 = vld [vmem:[#allocation11 + $0x380] sm:$0xff]
    %v287 = vld [vmem:[#allocation11 + $0x388] sm:$0xff]
    %v288 = vld [vmem:[#allocation11 + $0x390] sm:$0xff]
    %v289 = vld [vmem:[#allocation11 + $0x398] sm:$0xff]
    %v290 = vld [vmem:[#allocation11 + $0x3a0] sm:$0xff]
    %v291 = vld [vmem:[#allocation11 + $0x3a8] sm:$0xff]
    %v292 = vld [vmem:[#allocation11 + $0x3b0] sm:$0xff]
    %v293 = vld [vmem:[#allocation11 + $0x3b8] sm:$0xff]
    %v294 = vld [vmem:[#allocation11 + $0x3c0] sm:$0xff]
    %v295 = vld [vmem:[#allocation11 + $0x3c8] sm:$0xff]
    %v296 = vld [vmem:[#allocation11 + $0x3d0] sm:$0xff]
    %v297 = vld [vmem:[#allocation11 + $0x3d8] sm:$0xff]
    %v298 = vld [vmem:[#allocation11 + $0x3e0] sm:$0xff]
    %v299 = vld [vmem:[#allocation11 + $0x3e8] sm:$0xff]
    %v300 = vld [vmem:[#allocation11 + $0x3f0] sm:$0xff]
    %v301 = vld [vmem:[#allocation11 + $0x3f8] sm:$0xff]
    %v302 = vld [vmem:[%s4] sm:$0x3]
    %v304 = vperm.slane %v302, 0
    %v305 = vperm.slane %v302, 1
    %v436 = vunpack.c.l.b16 %v174
    %v437 = vunpack.c.h.b16 %v174
    %v438 = vunpack.c.l.b16 %v175
    %v439 = vunpack.c.h.b16 %v175
    %v440 = vunpack.c.l.b16 %v176
    %v441 = vunpack.c.h.b16 %v176
    %v442 = vunpack.c.l.b16 %v177
    %v443 = vunpack.c.h.b16 %v177
    %v444 = vunpack.c.l.b16 %v178
    %v445 = vunpack.c.h.b16 %v178
    %v446 = vunpack.c.l.b16 %v179
    %v447 = vunpack.c.h.b16 %v179
    %v448 = vunpack.c.l.b16 %v180
    %v449 = vunpack.c.h.b16 %v180
    %v450 = vunpack.c.l.b16 %v181
    %v451 = vunpack.c.h.b16 %v181
    %v452 = vunpack.c.l.b16 %v182
    %v453 = vunpack.c.h.b16 %v182
    %v454 = vunpack.c.l.b16 %v183
    %v455 = vunpack.c.h.b16 %v183
    %v456 = vunpack.c.l.b16 %v184
    %v457 = vunpack.c.h.b16 %v184
    %v458 = vunpack.c.l.b16 %v185
    %v459 = vunpack.c.h.b16 %v185
    %v460 = vunpack.c.l.b16 %v186
    %v461 = vunpack.c.h.b16 %v186
    %v462 = vunpack.c.l.b16 %v187
    %v463 = vunpack.c.h.b16 %v187
    %v464 = vunpack.c.l.b16 %v188
    %v465 = vunpack.c.h.b16 %v188
    %v466 = vunpack.c.l.b16 %v189
    %v467 = vunpack.c.h.b16 %v189
    %v468 = vunpack.c.l.b16 %v190
    %v469 = vunpack.c.h.b16 %v190
    %v470 = vunpack.c.l.b16 %v191
    %v471 = vunpack.c.h.b16 %v191
    %v472 = vunpack.c.l.b16 %v192
    %v473 = vunpack.c.h.b16 %v192
    %v474 = vunpack.c.l.b16 %v193
    %v475 = vunpack.c.h.b16 %v193
    %v476 = vunpack.c.l.b16 %v194
    %v477 = vunpack.c.h.b16 %v194
    %v478 = vunpack.c.l.b16 %v195
    %v479 = vunpack.c.h.b16 %v195
    %v480 = vunpack.c.l.b16 %v196
    %v481 = vunpack.c.h.b16 %v196
    %v482 = vunpack.c.l.b16 %v197
    %v483 = vunpack.c.h.b16 %v197
    %v484 = vunpack.c.l.b16 %v198
    %v485 = vunpack.c.h.b16 %v198
    %v486 = vunpack.c.l.b16 %v199
    %v487 = vunpack.c.h.b16 %v199
    %v488 = vunpack.c.l.b16 %v200
    %v489 = vunpack.c.h.b16 %v200
    %v490 = vunpack.c.l.b16 %v201
    %v491 = vunpack.c.h.b16 %v201
    %v492 = vunpack.c.l.b16 %v202
    %v493 = vunpack.c.h.b16 %v202
    %v494 = vunpack.c.l.b16 %v203
    %v495 = vunpack.c.h.b16 %v203
    %v496 = vunpack.c.l.b16 %v204
    %v497 = vunpack.c.h.b16 %v204
    %v498 = vunpack.c.l.b16 %v205
    %v499 = vunpack.c.h.b16 %v205
    %v500 = vunpack.c.l.b16 %v206
    %v501 = vunpack.c.h.b16 %v206
    %v502 = vunpack.c.l.b16 %v207
    %v503 = vunpack.c.h.b16 %v207
    %v504 = vunpack.c.l.b16 %v208
    %v505 = vunpack.c.h.b16 %v208
    %v506 = vunpack.c.l.b16 %v209
    %v507 = vunpack.c.h.b16 %v209
    %v508 = vunpack.c.l.b16 %v210
    %v509 = vunpack.c.h.b16 %v210
    %v510 = vunpack.c.l.b16 %v211
    %v511 = vunpack.c.h.b16 %v211
    %v512 = vunpack.c.l.b16 %v212
    %v513 = vunpack.c.h.b16 %v212
    %v514 = vunpack.c.l.b16 %v213
    %v515 = vunpack.c.h.b16 %v213
    %v516 = vunpack.c.l.b16 %v214
    %v517 = vunpack.c.h.b16 %v214
    %v518 = vunpack.c.l.b16 %v215
    %v519 = vunpack.c.h.b16 %v215
    %v520 = vunpack.c.l.b16 %v216
    %v521 = vunpack.c.h.b16 %v216
    %v522 = vunpack.c.l.b16 %v217
    %v523 = vunpack.c.h.b16 %v217
    %v524 = vunpack.c.l.b16 %v218
    %v525 = vunpack.c.h.b16 %v218
    %v526 = vunpack.c.l.b16 %v219
    %v527 = vunpack.c.h.b16 %v219
    %v528 = vunpack.c.l.b16 %v220
    %v529 = vunpack.c.h.b16 %v220
    %v530 = vunpack.c.l.b16 %v221
    %v531 = vunpack.c.h.b16 %v221
    %v532 = vunpack.c.l.b16 %v222
    %v533 = vunpack.c.h.b16 %v222
    %v534 = vunpack.c.l.b16 %v223
    %v535 = vunpack.c.h.b16 %v223
    %v536 = vunpack.c.l.b16 %v224
    %v537 = vunpack.c.h.b16 %v224
    %v538 = vunpack.c.l.b16 %v225
    %v539 = vunpack.c.h.b16 %v225
    %v540 = vunpack.c.l.b16 %v226
    %v541 = vunpack.c.h.b16 %v226
    %v542 = vunpack.c.l.b16 %v227
    %v543 = vunpack.c.h.b16 %v227
    %v544 = vunpack.c.l.b16 %v228
    %v545 = vunpack.c.h.b16 %v228
    %v546 = vunpack.c.l.b16 %v229
    %v547 = vunpack.c.h.b16 %v229
    %v548 = vunpack.c.l.b16 %v230
    %v549 = vunpack.c.h.b16 %v230
    %v550 = vunpack.c.l.b16 %v231
    %v551 = vunpack.c.h.b16 %v231
    %v552 = vunpack.c.l.b16 %v232
    %v553 = vunpack.c.h.b16 %v232
    %v554 = vunpack.c.l.b16 %v233
    %v555 = vunpack.c.h.b16 %v233
    %v556 = vunpack.c.l.b16 %v234
    %v557 = vunpack.c.h.b16 %v234
    %v558 = vunpack.c.l.b16 %v235
    %v559 = vunpack.c.h.b16 %v235
    %v560 = vunpack.c.l.b16 %v236
    %v561 = vunpack.c.h.b16 %v236
    %v562 = vunpack.c.l.b16 %v237
    %v563 = vunpack.c.h.b16 %v237
    %v564 = vunpack.c.l.b16 %v238
    %v565 = vunpack.c.h.b16 %v238
    %v566 = vunpack.c.l.b16 %v239
    %v567 = vunpack.c.h.b16 %v239
    %v568 = vunpack.c.l.b16 %v240
    %v569 = vunpack.c.h.b16 %v240
    %v570 = vunpack.c.l.b16 %v241
    %v571 = vunpack.c.h.b16 %v241
    %v572 = vunpack.c.l.b16 %v242
    %v573 = vunpack.c.h.b16 %v242
    %v574 = vunpack.c.l.b16 %v243
    %v575 = vunpack.c.h.b16 %v243
    %v576 = vunpack.c.l.b16 %v244
    %v577 = vunpack.c.h.b16 %v244
    %v578 = vunpack.c.l.b16 %v245
    %v579 = vunpack.c.h.b16 %v245
    %v580 = vunpack.c.l.b16 %v246
    %v581 = vunpack.c.h.b16 %v246
    %v582 = vunpack.c.l.b16 %v247
    %v583 = vunpack.c.h.b16 %v247
    %v584 = vunpack.c.l.b16 %v248
    %v585 = vunpack.c.h.b16 %v248
    %v586 = vunpack.c.l.b16 %v249
    %v587 = vunpack.c.h.b16 %v249
    %v588 = vunpack.c.l.b16 %v250
    %v589 = vunpack.c.h.b16 %v250
    %v590 = vunpack.c.l.b16 %v251
    %v591 = vunpack.c.h.b16 %v251
    %v592 = vunpack.c.l.b16 %v252
    %v593 = vunpack.c.h.b16 %v252
    %v594 = vunpack.c.l.b16 %v253
    %v595 = vunpack.c.h.b16 %v253
    %v596 = vunpack.c.l.b16 %v254
    %v597 = vunpack.c.h.b16 %v254
    %v598 = vunpack.c.l.b16 %v255
    %v599 = vunpack.c.h.b16 %v255
    %v600 = vunpack.c.l.b16 %v256
    %v601 = vunpack.c.h.b16 %v256
    %v602 = vunpack.c.l.b16 %v257
    %v603 = vunpack.c.h.b16 %v257
    %v604 = vunpack.c.l.b16 %v258
    %v605 = vunpack.c.h.b16 %v258
    %v606 = vunpack.c.l.b16 %v259
    %v607 = vunpack.c.h.b16 %v259
    %v608 = vunpack.c.l.b16 %v260
    %v609 = vunpack.c.h.b16 %v260
    %v610 = vunpack.c.l.b16 %v261
    %v611 = vunpack.c.h.b16 %v261
    %v612 = vunpack.c.l.b16 %v262
    %v613 = vunpack.c.h.b16 %v262
    %v614 = vunpack.c.l.b16 %v263
    %v615 = vunpack.c.h.b16 %v263
    %v616 = vunpack.c.l.b16 %v264
    %v617 = vunpack.c.h.b16 %v264
    %v618 = vunpack.c.l.b16 %v265
    %v619 = vunpack.c.h.b16 %v265
    %v620 = vunpack.c.l.b16 %v266
    %v621 = vunpack.c.h.b16 %v266
    %v622 = vunpack.c.l.b16 %v267
    %v623 = vunpack.c.h.b16 %v267
    %v624 = vunpack.c.l.b16 %v268
    %v625 = vunpack.c.h.b16 %v268
    %v626 = vunpack.c.l.b16 %v269
    %v627 = vunpack.c.h.b16 %v269
    %v628 = vunpack.c.l.b16 %v270
    %v629 = vunpack.c.h.b16 %v270
    %v630 = vunpack.c.l.b16 %v271
    %v631 = vunpack.c.h.b16 %v271
    %v632 = vunpack.c.l.b16 %v272
    %v633 = vunpack.c.h.b16 %v272
    %v634 = vunpack.c.l.b16 %v273
    %v635 = vunpack.c.h.b16 %v273
    %v636 = vunpack.c.l.b16 %v274
    %v637 = vunpack.c.h.b16 %v274
    %v638 = vunpack.c.l.b16 %v275
    %v639 = vunpack.c.h.b16 %v275
    %v640 = vunpack.c.l.b16 %v276
    %v641 = vunpack.c.h.b16 %v276
    %v642 = vunpack.c.l.b16 %v277
    %v643 = vunpack.c.h.b16 %v277
    %v644 = vunpack.c.l.b16 %v278
    %v645 = vunpack.c.h.b16 %v278
    %v646 = vunpack.c.l.b16 %v279
    %v647 = vunpack.c.h.b16 %v279
    %v648 = vunpack.c.l.b16 %v280
    %v649 = vunpack.c.h.b16 %v280
    %v650 = vunpack.c.l.b16 %v281
    %v651 = vunpack.c.h.b16 %v281
    %v652 = vunpack.c.l.b16 %v282
    %v653 = vunpack.c.h.b16 %v282
    %v654 = vunpack.c.l.b16 %v283
    %v655 = vunpack.c.h.b16 %v283
    %v656 = vunpack.c.l.b16 %v284
    %v657 = vunpack.c.h.b16 %v284
    %v658 = vunpack.c.l.b16 %v285
    %v659 = vunpack.c.h.b16 %v285
    %v660 = vunpack.c.l.b16 %v286
    %v661 = vunpack.c.h.b16 %v286
    %v662 = vunpack.c.l.b16 %v287
    %v663 = vunpack.c.h.b16 %v287
    %v664 = vunpack.c.l.b16 %v288
    %v665 = vunpack.c.h.b16 %v288
    %v666 = vunpack.c.l.b16 %v289
    %v667 = vunpack.c.h.b16 %v289
    %v668 = vunpack.c.l.b16 %v290
    %v669 = vunpack.c.h.b16 %v290
    %v670 = vunpack.c.l.b16 %v291
    %v671 = vunpack.c.h.b16 %v291
    %v672 = vunpack.c.l.b16 %v292
    %v673 = vunpack.c.h.b16 %v292
    %v674 = vunpack.c.l.b16 %v293
    %v675 = vunpack.c.h.b16 %v293
    %v676 = vunpack.c.l.b16 %v294
    %v677 = vunpack.c.h.b16 %v294
    %v678 = vunpack.c.l.b16 %v295
    %v679 = vunpack.c.h.b16 %v295
    %v680 = vunpack.c.l.b16 %v296
    %v681 = vunpack.c.h.b16 %v296
    %v682 = vunpack.c.l.b16 %v297
    %v683 = vunpack.c.h.b16 %v297
    %v684 = vunpack.c.l.b16 %v298
    %v685 = vunpack.c.h.b16 %v298
    %v686 = vunpack.c.l.b16 %v299
    %v687 = vunpack.c.h.b16 %v299
    %v688 = vunpack.c.l.b16 %v300
    %v689 = vunpack.c.h.b16 %v300
    %v690 = vunpack.c.l.b16 %v301
    %v691 = vunpack.c.h.b16 %v301
    %v692 = vpack.c.b16 %v438, %v436
    %v693 = vpack.c.b16 %v439, %v437
    %v694 = vpack.c.b16 %v442, %v440
    %v695 = vpack.c.b16 %v443, %v441
    %v696 = vpack.c.b16 %v446, %v444
    %v697 = vpack.c.b16 %v447, %v445
    %v698 = vpack.c.b16 %v450, %v448
    %v699 = vpack.c.b16 %v451, %v449
    %v700 = vpack.c.b16 %v454, %v452
    %v701 = vpack.c.b16 %v455, %v453
    %v702 = vpack.c.b16 %v458, %v456
    %v703 = vpack.c.b16 %v459, %v457
    %v704 = vpack.c.b16 %v462, %v460
    %v705 = vpack.c.b16 %v463, %v461
    %v706 = vpack.c.b16 %v466, %v464
    %v707 = vpack.c.b16 %v467, %v465
    %v708 = vpack.c.b16 %v470, %v468
    %v709 = vpack.c.b16 %v471, %v469
    %v710 = vpack.c.b16 %v474, %v472
    %v711 = vpack.c.b16 %v475, %v473
    %v712 = vpack.c.b16 %v478, %v476
    %v713 = vpack.c.b16 %v479, %v477
    %v714 = vpack.c.b16 %v482, %v480
    %v715 = vpack.c.b16 %v483, %v481
    %v716 = vpack.c.b16 %v486, %v484
    %v717 = vpack.c.b16 %v487, %v485
    %v718 = vpack.c.b16 %v490, %v488
    %v719 = vpack.c.b16 %v491, %v489
    %v720 = vpack.c.b16 %v494, %v492
    %v721 = vpack.c.b16 %v495, %v493
    %v722 = vpack.c.b16 %v498, %v496
    %v723 = vpack.c.b16 %v499, %v497
    %v724 = vpack.c.b16 %v502, %v500
    %v725 = vpack.c.b16 %v503, %v501
    %v726 = vpack.c.b16 %v506, %v504
    %v727 = vpack.c.b16 %v507, %v505
    %v728 = vpack.c.b16 %v510, %v508
    %v729 = vpack.c.b16 %v511, %v509
    %v730 = vpack.c.b16 %v514, %v512
    %v731 = vpack.c.b16 %v515, %v513
    %v732 = vpack.c.b16 %v518, %v516
    %v733 = vpack.c.b16 %v519, %v517
    %v734 = vpack.c.b16 %v522, %v520
    %v735 = vpack.c.b16 %v523, %v521
    %v736 = vpack.c.b16 %v526, %v524
    %v737 = vpack.c.b16 %v527, %v525
    %v738 = vpack.c.b16 %v530, %v528
    %v739 = vpack.c.b16 %v531, %v529
    %v740 = vpack.c.b16 %v534, %v532
    %v741 = vpack.c.b16 %v535, %v533
    %v742 = vpack.c.b16 %v538, %v536
    %v743 = vpack.c.b16 %v539, %v537
    %v744 = vpack.c.b16 %v542, %v540
    %v745 = vpack.c.b16 %v543, %v541
    %v746 = vpack.c.b16 %v546, %v544
    %v747 = vpack.c.b16 %v547, %v545
    %v748 = vpack.c.b16 %v550, %v548
    %v749 = vpack.c.b16 %v551, %v549
    %v750 = vpack.c.b16 %v554, %v552
    %v751 = vpack.c.b16 %v555, %v553
    %v752 = vpack.c.b16 %v558, %v556
    %v753 = vpack.c.b16 %v559, %v557
    %v754 = vpack.c.b16 %v562, %v560
    %v755 = vpack.c.b16 %v563, %v561
    %v756 = vpack.c.b16 %v566, %v564
    %v757 = vpack.c.b16 %v567, %v565
    %v758 = vpack.c.b16 %v570, %v568
    %v759 = vpack.c.b16 %v571, %v569
    %v760 = vpack.c.b16 %v574, %v572
    %v761 = vpack.c.b16 %v575, %v573
    %v762 = vpack.c.b16 %v578, %v576
    %v763 = vpack.c.b16 %v579, %v577
    %v764 = vpack.c.b16 %v582, %v580
    %v765 = vpack.c.b16 %v583, %v581
    %v766 = vpack.c.b16 %v586, %v584
    %v767 = vpack.c.b16 %v587, %v585
    %v768 = vpack.c.b16 %v590, %v588
    %v769 = vpack.c.b16 %v591, %v589
    %v770 = vpack.c.b16 %v594, %v592
    %v771 = vpack.c.b16 %v595, %v593
    %v772 = vpack.c.b16 %v598, %v596
    %v773 = vpack.c.b16 %v599, %v597
    %v774 = vpack.c.b16 %v602, %v600
    %v775 = vpack.c.b16 %v603, %v601
    %v776 = vpack.c.b16 %v606, %v604
    %v777 = vpack.c.b16 %v607, %v605
    %v778 = vpack.c.b16 %v610, %v608
    %v779 = vpack.c.b16 %v611, %v609
    %v780 = vpack.c.b16 %v614, %v612
    %v781 = vpack.c.b16 %v615, %v613
    %v782 = vpack.c.b16 %v618, %v616
    %v783 = vpack.c.b16 %v619, %v617
    %v784 = vpack.c.b16 %v622, %v620
    %v785 = vpack.c.b16 %v623, %v621
    %v786 = vpack.c.b16 %v626, %v624
    %v787 = vpack.c.b16 %v627, %v625
    %v788 = vpack.c.b16 %v630, %v628
    %v789 = vpack.c.b16 %v631, %v629
    %v790 = vpack.c.b16 %v634, %v632
    %v791 = vpack.c.b16 %v635, %v633
    %v792 = vpack.c.b16 %v638, %v636
    %v793 = vpack.c.b16 %v639, %v637
    %v794 = vpack.c.b16 %v642, %v640
    %v795 = vpack.c.b16 %v643, %v641
    %v796 = vpack.c.b16 %v646, %v644
    %v797 = vpack.c.b16 %v647, %v645
    %v798 = vpack.c.b16 %v650, %v648
    %v799 = vpack.c.b16 %v651, %v649
    %v800 = vpack.c.b16 %v654, %v652
    %v801 = vpack.c.b16 %v655, %v653
    %v802 = vpack.c.b16 %v658, %v656
    %v803 = vpack.c.b16 %v659, %v657
    %v804 = vpack.c.b16 %v662, %v660
    %v805 = vpack.c.b16 %v663, %v661
    %v806 = vpack.c.b16 %v666, %v664
    %v807 = vpack.c.b16 %v667, %v665
    %v808 = vpack.c.b16 %v670, %v668
    %v809 = vpack.c.b16 %v671, %v669
    %v810 = vpack.c.b16 %v674, %v672
    %v811 = vpack.c.b16 %v675, %v673
    %v812 = vpack.c.b16 %v678, %v676
    %v813 = vpack.c.b16 %v679, %v677
    %v814 = vpack.c.b16 %v682, %v680
    %v815 = vpack.c.b16 %v683, %v681
    %v816 = vpack.c.b16 %v686, %v684
    %v817 = vpack.c.b16 %v687, %v685
    %v818 = vpack.c.b16 %v690, %v688
    %v819 = vpack.c.b16 %v691, %v689
    %948 = vmatpush.bf16.msra.mxu0 %v706
    %949 = vmatpush.bf16.msra.mxu0 %v704
    %950 = vmatpush.bf16.msra.mxu0 %v702
    %951 = vmatpush.bf16.msra.mxu0 %v700
    %952 = vmatpush.bf16.msra.mxu0 %v698
    %953 = vmatpush.bf16.msra.mxu0 %v696
    %954 = vmatpush.bf16.msra.mxu0 %v694
    %955 = vmatpush.bf16.msra.mxu0 %v692
    %956 = vmatmul.bf16.gmra.mxu0 %v166
    %v957 = vpop.f32.mrf.mxu0
    %v958 = vadd.f32 %v304, %v957
    %v959 = vpop.f32.mrf.mxu0
    %v960 = vadd.f32 %v304, %v959
    %961 = vdwg.mxu0
    %962 = vmatpush.bf16.msra.mxu0 %v722
    %963 = vmatpush.bf16.msra.mxu0 %v720
    %964 = vmatpush.bf16.msra.mxu0 %v718
    %965 = vmatpush.bf16.msra.mxu0 %v716
    %966 = vmatpush.bf16.msra.mxu0 %v714
    %967 = vmatpush.bf16.msra.mxu0 %v712
    %968 = vmatpush.bf16.msra.mxu0 %v710
    %969 = vmatpush.bf16.msra.mxu0 %v708
    %970 = vmatmul.bf16.gmra.mxu0 %v167
    %v971 = vpop.f32.mrf.mxu0
    %v972 = vadd.f32 %v958, %v971
    %v973 = vpop.f32.mrf.mxu0
    %v974 = vadd.f32 %v960, %v973
    %975 = vdwg.mxu0
    %976 = vmatpush.bf16.msra.mxu0 %v738
    %977 = vmatpush.bf16.msra.mxu0 %v736
    %978 = vmatpush.bf16.msra.mxu0 %v734
    %979 = vmatpush.bf16.msra.mxu0 %v732
    %980 = vmatpush.bf16.msra.mxu0 %v730
    %981 = vmatpush.bf16.msra.mxu0 %v728
    %982 = vmatpush.bf16.msra.mxu0 %v726
    %983 = vmatpush.bf16.msra.mxu0 %v724
    %984 = vmatmul.bf16.gmra.mxu0 %v168
    %v985 = vpop.f32.mrf.mxu0
    %v986 = vadd.f32 %v972, %v985
    %v987 = vpop.f32.mrf.mxu0
    %v988 = vadd.f32 %v974, %v987
    %989 = vdwg.mxu0
    %990 = vmatpush.bf16.msra.mxu0 %v754
    %991 = vmatpush.bf16.msra.mxu0 %v752
    %992 = vmatpush.bf16.msra.mxu0 %v750
    %993 = vmatpush.bf16.msra.mxu0 %v748
    %994 = vmatpush.bf16.msra.mxu0 %v746
    %995 = vmatpush.bf16.msra.mxu0 %v744
    %996 = vmatpush.bf16.msra.mxu0 %v742
    %997 = vmatpush.bf16.msra.mxu0 %v740
    %998 = vmatmul.bf16.gmra.mxu0 %v169
    %v999 = vpop.f32.mrf.mxu0
    %v1000 = vadd.f32 %v986, %v999
    %v1001 = vpop.f32.mrf.mxu0
    %v1002 = vadd.f32 %v988, %v1001
    %1003 = vdwg.mxu0
    %1004 = vmatpush.bf16.msra.mxu0 %v770
    %1005 = vmatpush.bf16.msra.mxu0 %v768
    %1006 = vmatpush.bf16.msra.mxu0 %v766
    %1007 = vmatpush.bf16.msra.mxu0 %v764
    %1008 = vmatpush.bf16.msra.mxu0 %v762
    %1009 = vmatpush.bf16.msra.mxu0 %v760
    %1010 = vmatpush.bf16.msra.mxu0 %v758
    %1011 = vmatpush.bf16.msra.mxu0 %v756
    %1012 = vmatmul.bf16.gmra.mxu0 %v170
    %v1013 = vpop.f32.mrf.mxu0
    %v1014 = vadd.f32 %v1000, %v1013
    %v1015 = vpop.f32.mrf.mxu0
    %v1016 = vadd.f32 %v1002, %v1015
    %1017 = vdwg.mxu0
    %1018 = vmatpush.bf16.msra.mxu0 %v786
    %1019 = vmatpush.bf16.msra.mxu0 %v784
    %1020 = vmatpush.bf16.msra.mxu0 %v782
    %1021 = vmatpush.bf16.msra.mxu0 %v780
    %1022 = vmatpush.bf16.msra.mxu0 %v778
    %1023 = vmatpush.bf16.msra.mxu0 %v776
    %1024 = vmatpush.bf16.msra.mxu0 %v774
    %1025 = vmatpush.bf16.msra.mxu0 %v772
    %1026 = vmatmul.bf16.gmra.mxu0 %v171
    %v1027 = vpop.f32.mrf.mxu0
    %v1028 = vadd.f32 %v1014, %v1027
    %v1029 = vpop.f32.mrf.mxu0
    %v1030 = vadd.f32 %v1016, %v1029
    %1031 = vdwg.mxu0
    %1032 = vmatpush.bf16.msra.mxu0 %v802
    %1033 = vmatpush.bf16.msra.mxu0 %v800
    %1034 = vmatpush.bf16.msra.mxu0 %v798
    %1035 = vmatpush.bf16.msra.mxu0 %v796
    %1036 = vmatpush.bf16.msra.mxu0 %v794
    %1037 = vmatpush.bf16.msra.mxu0 %v792
    %1038 = vmatpush.bf16.msra.mxu0 %v790
    %1039 = vmatpush.bf16.msra.mxu0 %v788
    %1040 = vmatmul.bf16.gmra.mxu0 %v172
    %v1041 = vpop.f32.mrf.mxu0
    %v1042 = vadd.f32 %v1028, %v1041
    %v1043 = vpop.f32.mrf.mxu0
    %v1044 = vadd.f32 %v1030, %v1043
    %1045 = vdwg.mxu0
    %1046 = vmatpush.bf16.msra.mxu0 %v818
    %1047 = vmatpush.bf16.msra.mxu0 %v816
    %1048 = vmatpush.bf16.msra.mxu0 %v814
    %1049 = vmatpush.bf16.msra.mxu0 %v812
    %1050 = vmatpush.bf16.msra.mxu0 %v810
    %1051 = vmatpush.bf16.msra.mxu0 %v808
    %1052 = vmatpush.bf16.msra.mxu0 %v806
    %1053 = vmatpush.bf16.msra.mxu0 %v804
    %1054 = vmatmul.bf16.gmra.mxu0 %v173
    %v1055 = vpop.f32.mrf.mxu0
    %v1056 = vadd.f32 %v1042, %v1055
    %v1057 = vpop.f32.mrf.mxu0
    %v1058 = vadd.f32 %v1044, %v1057
    %1059 = vdwg.mxu0
    %1060 = vmatpush.bf16.msra.mxu0 %v707
    %1061 = vmatpush.bf16.msra.mxu0 %v705
    %1062 = vmatpush.bf16.msra.mxu0 %v703
    %1063 = vmatpush.bf16.msra.mxu0 %v701
    %1064 = vmatpush.bf16.msra.mxu0 %v699
    %1065 = vmatpush.bf16.msra.mxu0 %v697
    %1066 = vmatpush.bf16.msra.mxu0 %v695
    %1067 = vmatpush.bf16.msra.mxu0 %v693
    %1068 = vmatmul.bf16.gmra.mxu0 %v166
    %v1069 = vpop.f32.mrf.mxu0
    %v1070 = vadd.f32 %v305, %v1069
    %v1071 = vpop.f32.mrf.mxu0
    %v1072 = vadd.f32 %v305, %v1071
    %1073 = vdwg.mxu0
    %1074 = vmatpush.bf16.msra.mxu0 %v723
    %1075 = vmatpush.bf16.msra.mxu0 %v721
    %1076 = vmatpush.bf16.msra.mxu0 %v719
    %1077 = vmatpush.bf16.msra.mxu0 %v717
    %1078 = vmatpush.bf16.msra.mxu0 %v715
    %1079 = vmatpush.bf16.msra.mxu0 %v713
    %1080 = vmatpush.bf16.msra.mxu0 %v711
    %1081 = vmatpush.bf16.msra.mxu0 %v709
    %1082 = vmatmul.bf16.gmra.mxu0 %v167
    %v1083 = vpop.f32.mrf.mxu0
    %v1084 = vadd.f32 %v1070, %v1083
    %v1085 = vpop.f32.mrf.mxu0
    %v1086 = vadd.f32 %v1072, %v1085
    %1087 = vdwg.mxu0
    %1088 = vmatpush.bf16.msra.mxu0 %v739
    %1089 = vmatpush.bf16.msra.mxu0 %v737
    %1090 = vmatpush.bf16.msra.mxu0 %v735
    %1091 = vmatpush.bf16.msra.mxu0 %v733
    %1092 = vmatpush.bf16.msra.mxu0 %v731
    %1093 = vmatpush.bf16.msra.mxu0 %v729
    %1094 = vmatpush.bf16.msra.mxu0 %v727
    %1095 = vmatpush.bf16.msra.mxu0 %v725
    %1096 = vmatmul.bf16.gmra.mxu0 %v168
    %v1097 = vpop.f32.mrf.mxu0
    %v1098 = vadd.f32 %v1084, %v1097
    %v1099 = vpop.f32.mrf.mxu0
    %v1100 = vadd.f32 %v1086, %v1099
    %1101 = vdwg.mxu0
    %1102 = vmatpush.bf16.msra.mxu0 %v755
    %1103 = vmatpush.bf16.msra.mxu0 %v753
    %1104 = vmatpush.bf16.msra.mxu0 %v751
    %1105 = vmatpush.bf16.msra.mxu0 %v749
    %1106 = vmatpush.bf16.msra.mxu0 %v747
    %1107 = vmatpush.bf16.msra.mxu0 %v745
    %1108 = vmatpush.bf16.msra.mxu0 %v743
    %1109 = vmatpush.bf16.msra.mxu0 %v741
    %1110 = vmatmul.bf16.gmra.mxu0 %v169
    %v1111 = vpop.f32.mrf.mxu0
    %v1112 = vadd.f32 %v1098, %v1111
    %v1113 = vpop.f32.mrf.mxu0
    %v1114 = vadd.f32 %v1100, %v1113
    %1115 = vdwg.mxu0
    %1116 = vmatpush.bf16.msra.mxu0 %v771
    %1117 = vmatpush.bf16.msra.mxu0 %v769
    %1118 = vmatpush.bf16.msra.mxu0 %v767
    %1119 = vmatpush.bf16.msra.mxu0 %v765
    %1120 = vmatpush.bf16.msra.mxu0 %v763
    %1121 = vmatpush.bf16.msra.mxu0 %v761
    %1122 = vmatpush.bf16.msra.mxu0 %v759
    %1123 = vmatpush.bf16.msra.mxu0 %v757
    %1124 = vmatmul.bf16.gmra.mxu0 %v170
    %v1125 = vpop.f32.mrf.mxu0
    %v1126 = vadd.f32 %v1112, %v1125
    %v1127 = vpop.f32.mrf.mxu0
    %v1128 = vadd.f32 %v1114, %v1127
    %1129 = vdwg.mxu0
    %1130 = vmatpush.bf16.msra.mxu0 %v787
    %1131 = vmatpush.bf16.msra.mxu0 %v785
    %1132 = vmatpush.bf16.msra.mxu0 %v783
    %1133 = vmatpush.bf16.msra.mxu0 %v781
    %1134 = vmatpush.bf16.msra.mxu0 %v779
    %1135 = vmatpush.bf16.msra.mxu0 %v777
    %1136 = vmatpush.bf16.msra.mxu0 %v775
    %1137 = vmatpush.bf16.msra.mxu0 %v773
    %1138 = vmatmul.bf16.gmra.mxu0 %v171
    %v1139 = vpop.f32.mrf.mxu0
    %v1140 = vadd.f32 %v1126, %v1139
    %v1141 = vpop.f32.mrf.mxu0
    %v1142 = vadd.f32 %v1128, %v1141
    %1143 = vdwg.mxu0
    %1144 = vmatpush.bf16.msra.mxu0 %v803
    %1145 = vmatpush.bf16.msra.mxu0 %v801
    %1146 = vmatpush.bf16.msra.mxu0 %v799
    %1147 = vmatpush.bf16.msra.mxu0 %v797
    %1148 = vmatpush.bf16.msra.mxu0 %v795
    %1149 = vmatpush.bf16.msra.mxu0 %v793
    %1150 = vmatpush.bf16.msra.mxu0 %v791
    %1151 = vmatpush.bf16.msra.mxu0 %v789
    %1152 = vmatmul.bf16.gmra.mxu0 %v172
    %v1153 = vpop.f32.mrf.mxu0
    %v1154 = vadd.f32 %v1140, %v1153
    %v1155 = vpop.f32.mrf.mxu0
    %v1156 = vadd.f32 %v1142, %v1155
    %1157 = vdwg.mxu0
    %1158 = vmatpush.bf16.msra.mxu0 %v819
    %1159 = vmatpush.bf16.msra.mxu0 %v817
    %1160 = vmatpush.bf16.msra.mxu0 %v815
    %1161 = vmatpush.bf16.msra.mxu0 %v813
    %1162 = vmatpush.bf16.msra.mxu0 %v811
    %1163 = vmatpush.bf16.msra.mxu0 %v809
    %1164 = vmatpush.bf16.msra.mxu0 %v807
    %1165 = vmatpush.bf16.msra.mxu0 %v805
    %1166 = vmatmul.bf16.gmra.mxu0 %v173
    %v1167 = vpop.f32.mrf.mxu0
    %v1168 = vadd.f32 %v1154, %v1167
    %v1169 = vpop.f32.mrf.mxu0
    %v1170 = vadd.f32 %v1156, %v1169
    %1171 = vdwg.mxu0
    %s1172 = smul.u32 4, 128
    %s1173 = smul.u32 %s1172, 2
    %s1174 = sshll.u32 %s1173, 4
    %1175 = dma.done [#allocation4], %s1174
    %s1176 = smul.u32 4, 32
    %s1177 = smul.u32 %s1176, 8
    %s1178 = sshll.u32 %s1177, 4
    %1179 = dma.done %s111, %s1178
    %v1180 = vpack.c.bf16 %v143, %v143
    %v1181 = vpack.c.bf16 %v144, %v144
    %v1182 = vpack.c.bf16 %v145, %v145
    %v1183 = vpack.c.bf16 %v146, %v146
    %v1184 = vpack.c.bf16 %v147, %v147
    %v1185 = vpack.c.bf16 %v148, %v148
    %v1186 = vpack.c.bf16 %v149, %v149
    %v1187 = vpack.c.bf16 %v150, %v150
    %v1188 = vld [vmem:[#allocation2] sm:$0xff]
    %v1189 = vld [vmem:[#allocation2 + $0x8] sm:$0xff]
    %v1190 = vld [vmem:[#allocation2 + $0x10] sm:$0xff]
    %v1191 = vld [vmem:[#allocation2 + $0x18] sm:$0xff]
    %v1192 = vld [vmem:[#allocation2 + $0x20] sm:$0xff]
    %v1193 = vld [vmem:[#allocation2 + $0x28] sm:$0xff]
    %v1194 = vld [vmem:[#allocation2 + $0x30] sm:$0xff]
    %v1195 = vld [vmem:[#allocation2 + $0x38] sm:$0xff]
    %v1196 = vld [vmem:[#allocation2 + $0x40] sm:$0xff]
    %v1197 = vld [vmem:[#allocation2 + $0x48] sm:$0xff]
    %v1198 = vld [vmem:[#allocation2 + $0x50] sm:$0xff]
    %v1199 = vld [vmem:[#allocation2 + $0x58] sm:$0xff]
    %v1200 = vld [vmem:[#allocation2 + $0x60] sm:$0xff]
    %v1201 = vld [vmem:[#allocation2 + $0x68] sm:$0xff]
    %v1202 = vld [vmem:[#allocation2 + $0x70] sm:$0xff]
    %v1203 = vld [vmem:[#allocation2 + $0x78] sm:$0xff]
    %v1204 = vld [vmem:[#allocation2 + $0x80] sm:$0xff]
    %v1205 = vld [vmem:[#allocation2 + $0x88] sm:$0xff]
    %v1206 = vld [vmem:[#allocation2 + $0x90] sm:$0xff]
    %v1207 = vld [vmem:[#allocation2 + $0x98] sm:$0xff]
    %v1208 = vld [vmem:[#allocation2 + $0xa0] sm:$0xff]
    %v1209 = vld [vmem:[#allocation2 + $0xa8] sm:$0xff]
    %v1210 = vld [vmem:[#allocation2 + $0xb0] sm:$0xff]
    %v1211 = vld [vmem:[#allocation2 + $0xb8] sm:$0xff]
    %v1212 = vld [vmem:[#allocation2 + $0xc0] sm:$0xff]
    %v1213 = vld [vmem:[#allocation2 + $0xc8] sm:$0xff]
    %v1214 = vld [vmem:[#allocation2 + $0xd0] sm:$0xff]
    %v1215 = vld [vmem:[#allocation2 + $0xd8] sm:$0xff]
    %v1216 = vld [vmem:[#allocation2 + $0xe0] sm:$0xff]
    %v1217 = vld [vmem:[#allocation2 + $0xe8] sm:$0xff]
    %v1218 = vld [vmem:[#allocation2 + $0xf0] sm:$0xff]
    %v1219 = vld [vmem:[#allocation2 + $0xf8] sm:$0xff]
    %v1220 = vld [vmem:[#allocation2 + $0x100] sm:$0xff]
    %v1221 = vld [vmem:[#allocation2 + $0x108] sm:$0xff]
    %v1222 = vld [vmem:[#allocation2 + $0x110] sm:$0xff]
    %v1223 = vld [vmem:[#allocation2 + $0x118] sm:$0xff]
    %v1224 = vld [vmem:[#allocation2 + $0x120] sm:$0xff]
    %v1225 = vld [vmem:[#allocation2 + $0x128] sm:$0xff]
    %v1226 = vld [vmem:[#allocation2 + $0x130] sm:$0xff]
    %v1227 = vld [vmem:[#allocation2 + $0x138] sm:$0xff]
    %v1228 = vld [vmem:[#allocation2 + $0x140] sm:$0xff]
    %v1229 = vld [vmem:[#allocation2 + $0x148] sm:$0xff]
    %v1230 = vld [vmem:[#allocation2 + $0x150] sm:$0xff]
    %v1231 = vld [vmem:[#allocation2 + $0x158] sm:$0xff]
    %v1232 = vld [vmem:[#allocation2 + $0x160] sm:$0xff]
    %v1233 = vld [vmem:[#allocation2 + $0x168] sm:$0xff]
    %v1234 = vld [vmem:[#allocation2 + $0x170] sm:$0xff]
    %v1235 = vld [vmem:[#allocation2 + $0x178] sm:$0xff]
    %v1236 = vld [vmem:[#allocation2 + $0x180] sm:$0xff]
    %v1237 = vld [vmem:[#allocation2 + $0x188] sm:$0xff]
    %v1238 = vld [vmem:[#allocation2 + $0x190] sm:$0xff]
    %v1239 = vld [vmem:[#allocation2 + $0x198] sm:$0xff]
    %v1240 = vld [vmem:[#allocation2 + $0x1a0] sm:$0xff]
    %v1241 = vld [vmem:[#allocation2 + $0x1a8] sm:$0xff]
    %v1242 = vld [vmem:[#allocation2 + $0x1b0] sm:$0xff]
    %v1243 = vld [vmem:[#allocation2 + $0x1b8] sm:$0xff]
    %v1244 = vld [vmem:[#allocation2 + $0x1c0] sm:$0xff]
    %v1245 = vld [vmem:[#allocation2 + $0x1c8] sm:$0xff]
    %v1246 = vld [vmem:[#allocation2 + $0x1d0] sm:$0xff]
    %v1247 = vld [vmem:[#allocation2 + $0x1d8] sm:$0xff]
    %v1248 = vld [vmem:[#allocation2 + $0x1e0] sm:$0xff]
    %v1249 = vld [vmem:[#allocation2 + $0x1e8] sm:$0xff]
    %v1250 = vld [vmem:[#allocation2 + $0x1f0] sm:$0xff]
    %v1251 = vld [vmem:[#allocation2 + $0x1f8] sm:$0xff]
    %v1252 = vld [vmem:[#allocation2 + $0x200] sm:$0xff]
    %v1253 = vld [vmem:[#allocation2 + $0x208] sm:$0xff]
    %v1254 = vld [vmem:[#allocation2 + $0x210] sm:$0xff]
    %v1255 = vld [vmem:[#allocation2 + $0x218] sm:$0xff]
    %v1256 = vld [vmem:[#allocation2 + $0x220] sm:$0xff]
    %v1257 = vld [vmem:[#allocation2 + $0x228] sm:$0xff]
    %v1258 = vld [vmem:[#allocation2 + $0x230] sm:$0xff]
    %v1259 = vld [vmem:[#allocation2 + $0x238] sm:$0xff]
    %v1260 = vld [vmem:[#allocation2 + $0x240] sm:$0xff]
    %v1261 = vld [vmem:[#allocation2 + $0x248] sm:$0xff]
    %v1262 = vld [vmem:[#allocation2 + $0x250] sm:$0xff]
    %v1263 = vld [vmem:[#allocation2 + $0x258] sm:$0xff]
    %v1264 = vld [vmem:[#allocation2 + $0x260] sm:$0xff]
    %v1265 = vld [vmem:[#allocation2 + $0x268] sm:$0xff]
    %v1266 = vld [vmem:[#allocation2 + $0x270] sm:$0xff]
    %v1267 = vld [vmem:[#allocation2 + $0x278] sm:$0xff]
    %v1268 = vld [vmem:[#allocation2 + $0x280] sm:$0xff]
    %v1269 = vld [vmem:[#allocation2 + $0x288] sm:$0xff]
    %v1270 = vld [vmem:[#allocation2 + $0x290] sm:$0xff]
    %v1271 = vld [vmem:[#allocation2 + $0x298] sm:$0xff]
    %v1272 = vld [vmem:[#allocation2 + $0x2a0] sm:$0xff]
    %v1273 = vld [vmem:[#allocation2 + $0x2a8] sm:$0xff]
    %v1274 = vld [vmem:[#allocation2 + $0x2b0] sm:$0xff]
    %v1275 = vld [vmem:[#allocation2 + $0x2b8] sm:$0xff]
    %v1276 = vld [vmem:[#allocation2 + $0x2c0] sm:$0xff]
    %v1277 = vld [vmem:[#allocation2 + $0x2c8] sm:$0xff]
    %v1278 = vld [vmem:[#allocation2 + $0x2d0] sm:$0xff]
    %v1279 = vld [vmem:[#allocation2 + $0x2d8] sm:$0xff]
    %v1280 = vld [vmem:[#allocation2 + $0x2e0] sm:$0xff]
    %v1281 = vld [vmem:[#allocation2 + $0x2e8] sm:$0xff]
    %v1282 = vld [vmem:[#allocation2 + $0x2f0] sm:$0xff]
    %v1283 = vld [vmem:[#allocation2 + $0x2f8] sm:$0xff]
    %v1284 = vld [vmem:[#allocation2 + $0x300] sm:$0xff]
    %v1285 = vld [vmem:[#allocation2 + $0x308] sm:$0xff]
    %v1286 = vld [vmem:[#allocation2 + $0x310] sm:$0xff]
    %v1287 = vld [vmem:[#allocation2 + $0x318] sm:$0xff]
    %v1288 = vld [vmem:[#allocation2 + $0x320] sm:$0xff]
    %v1289 = vld [vmem:[#allocation2 + $0x328] sm:$0xff]
    %v1290 = vld [vmem:[#allocation2 + $0x330] sm:$0xff]
    %v1291 = vld [vmem:[#allocation2 + $0x338] sm:$0xff]
    %v1292 = vld [vmem:[#allocation2 + $0x340] sm:$0xff]
    %v1293 = vld [vmem:[#allocation2 + $0x348] sm:$0xff]
    %v1294 = vld [vmem:[#allocation2 + $0x350] sm:$0xff]
    %v1295 = vld [vmem:[#allocation2 + $0x358] sm:$0xff]
    %v1296 = vld [vmem:[#allocation2 + $0x360] sm:$0xff]
    %v1297 = vld [vmem:[#allocation2 + $0x368] sm:$0xff]
    %v1298 = vld [vmem:[#allocation2 + $0x370] sm:$0xff]
    %v1299 = vld [vmem:[#allocation2 + $0x378] sm:$0xff]
    %v1300 = vld [vmem:[#allocation2 + $0x380] sm:$0xff]
    %v1301 = vld [vmem:[#allocation2 + $0x388] sm:$0xff]
    %v1302 = vld [vmem:[#allocation2 + $0x390] sm:$0xff]
    %v1303 = vld [vmem:[#allocation2 + $0x398] sm:$0xff]
    %v1304 = vld [vmem:[#allocation2 + $0x3a0] sm:$0xff]
    %v1305 = vld [vmem:[#allocation2 + $0x3a8] sm:$0xff]
    %v1306 = vld [vmem:[#allocation2 + $0x3b0] sm:$0xff]
    %v1307 = vld [vmem:[#allocation2 + $0x3b8] sm:$0xff]
    %v1308 = vld [vmem:[#allocation2 + $0x3c0] sm:$0xff]
    %v1309 = vld [vmem:[#allocation2 + $0x3c8] sm:$0xff]
    %v1310 = vld [vmem:[#allocation2 + $0x3d0] sm:$0xff]
    %v1311 = vld [vmem:[#allocation2 + $0x3d8] sm:$0xff]
    %v1312 = vld [vmem:[#allocation2 + $0x3e0] sm:$0xff]
    %v1313 = vld [vmem:[#allocation2 + $0x3e8] sm:$0xff]
    %v1314 = vld [vmem:[#allocation2 + $0x3f0] sm:$0xff]
    %v1315 = vld [vmem:[#allocation2 + $0x3f8] sm:$0xff]
    %v1444 = vunpack.c.l.b16 %v1188
    %v1445 = vunpack.c.h.b16 %v1188
    %v1446 = vunpack.c.l.b16 %v1189
    %v1447 = vunpack.c.h.b16 %v1189
    %v1448 = vunpack.c.l.b16 %v1190
    %v1449 = vunpack.c.h.b16 %v1190
    %v1450 = vunpack.c.l.b16 %v1191
    %v1451 = vunpack.c.h.b16 %v1191
    %v1452 = vunpack.c.l.b16 %v1192
    %v1453 = vunpack.c.h.b16 %v1192
    %v1454 = vunpack.c.l.b16 %v1193
    %v1455 = vunpack.c.h.b16 %v1193
    %v1456 = vunpack.c.l.b16 %v1194
    %v1457 = vunpack.c.h.b16 %v1194
    %v1458 = vunpack.c.l.b16 %v1195
    %v1459 = vunpack.c.h.b16 %v1195
    %v1460 = vunpack.c.l.b16 %v1196
    %v1461 = vunpack.c.h.b16 %v1196
    %v1462 = vunpack.c.l.b16 %v1197
    %v1463 = vunpack.c.h.b16 %v1197
    %v1464 = vunpack.c.l.b16 %v1198
    %v1465 = vunpack.c.h.b16 %v1198
    %v1466 = vunpack.c.l.b16 %v1199
    %v1467 = vunpack.c.h.b16 %v1199
    %v1468 = vunpack.c.l.b16 %v1200
    %v1469 = vunpack.c.h.b16 %v1200
    %v1470 = vunpack.c.l.b16 %v1201
    %v1471 = vunpack.c.h.b16 %v1201
    %v1472 = vunpack.c.l.b16 %v1202
    %v1473 = vunpack.c.h.b16 %v1202
    %v1474 = vunpack.c.l.b16 %v1203
    %v1475 = vunpack.c.h.b16 %v1203
    %v1476 = vunpack.c.l.b16 %v1204
    %v1477 = vunpack.c.h.b16 %v1204
    %v1478 = vunpack.c.l.b16 %v1205
    %v1479 = vunpack.c.h.b16 %v1205
    %v1480 = vunpack.c.l.b16 %v1206
    %v1481 = vunpack.c.h.b16 %v1206
    %v1482 = vunpack.c.l.b16 %v1207
    %v1483 = vunpack.c.h.b16 %v1207
    %v1484 = vunpack.c.l.b16 %v1208
    %v1485 = vunpack.c.h.b16 %v1208
    %v1486 = vunpack.c.l.b16 %v1209
    %v1487 = vunpack.c.h.b16 %v1209
    %v1488 = vunpack.c.l.b16 %v1210
    %v1489 = vunpack.c.h.b16 %v1210
    %v1490 = vunpack.c.l.b16 %v1211
    %v1491 = vunpack.c.h.b16 %v1211
    %v1492 = vunpack.c.l.b16 %v1212
    %v1493 = vunpack.c.h.b16 %v1212
    %v1494 = vunpack.c.l.b16 %v1213
    %v1495 = vunpack.c.h.b16 %v1213
    %v1496 = vunpack.c.l.b16 %v1214
    %v1497 = vunpack.c.h.b16 %v1214
    %v1498 = vunpack.c.l.b16 %v1215
    %v1499 = vunpack.c.h.b16 %v1215
    %v1500 = vunpack.c.l.b16 %v1216
    %v1501 = vunpack.c.h.b16 %v1216
    %v1502 = vunpack.c.l.b16 %v1217
    %v1503 = vunpack.c.h.b16 %v1217
    %v1504 = vunpack.c.l.b16 %v1218
    %v1505 = vunpack.c.h.b16 %v1218
    %v1506 = vunpack.c.l.b16 %v1219
    %v1507 = vunpack.c.h.b16 %v1219
    %v1508 = vunpack.c.l.b16 %v1220
    %v1509 = vunpack.c.h.b16 %v1220
    %v1510 = vunpack.c.l.b16 %v1221
    %v1511 = vunpack.c.h.b16 %v1221
    %v1512 = vunpack.c.l.b16 %v1222
    %v1513 = vunpack.c.h.b16 %v1222
    %v1514 = vunpack.c.l.b16 %v1223
    %v1515 = vunpack.c.h.b16 %v1223
    %v1516 = vunpack.c.l.b16 %v1224
    %v1517 = vunpack.c.h.b16 %v1224
    %v1518 = vunpack.c.l.b16 %v1225
    %v1519 = vunpack.c.h.b16 %v1225
    %v1520 = vunpack.c.l.b16 %v1226
    %v1521 = vunpack.c.h.b16 %v1226
    %v1522 = vunpack.c.l.b16 %v1227
    %v1523 = vunpack.c.h.b16 %v1227
    %v1524 = vunpack.c.l.b16 %v1228
    %v1525 = vunpack.c.h.b16 %v1228
    %v1526 = vunpack.c.l.b16 %v1229
    %v1527 = vunpack.c.h.b16 %v1229
    %v1528 = vunpack.c.l.b16 %v1230
    %v1529 = vunpack.c.h.b16 %v1230
    %v1530 = vunpack.c.l.b16 %v1231
    %v1531 = vunpack.c.h.b16 %v1231
    %v1532 = vunpack.c.l.b16 %v1232
    %v1533 = vunpack.c.h.b16 %v1232
    %v1534 = vunpack.c.l.b16 %v1233
    %v1535 = vunpack.c.h.b16 %v1233
    %v1536 = vunpack.c.l.b16 %v1234
    %v1537 = vunpack.c.h.b16 %v1234
    %v1538 = vunpack.c.l.b16 %v1235
    %v1539 = vunpack.c.h.b16 %v1235
    %v1540 = vunpack.c.l.b16 %v1236
    %v1541 = vunpack.c.h.b16 %v1236
    %v1542 = vunpack.c.l.b16 %v1237
    %v1543 = vunpack.c.h.b16 %v1237
    %v1544 = vunpack.c.l.b16 %v1238
    %v1545 = vunpack.c.h.b16 %v1238
    %v1546 = vunpack.c.l.b16 %v1239
    %v1547 = vunpack.c.h.b16 %v1239
    %v1548 = vunpack.c.l.b16 %v1240
    %v1549 = vunpack.c.h.b16 %v1240
    %v1550 = vunpack.c.l.b16 %v1241
    %v1551 = vunpack.c.h.b16 %v1241
    %v1552 = vunpack.c.l.b16 %v1242
    %v1553 = vunpack.c.h.b16 %v1242
    %v1554 = vunpack.c.l.b16 %v1243
    %v1555 = vunpack.c.h.b16 %v1243
    %v1556 = vunpack.c.l.b16 %v1244
    %v1557 = vunpack.c.h.b16 %v1244
    %v1558 = vunpack.c.l.b16 %v1245
    %v1559 = vunpack.c.h.b16 %v1245
    %v1560 = vunpack.c.l.b16 %v1246
    %v1561 = vunpack.c.h.b16 %v1246
    %v1562 = vunpack.c.l.b16 %v1247
    %v1563 = vunpack.c.h.b16 %v1247
    %v1564 = vunpack.c.l.b16 %v1248
    %v1565 = vunpack.c.h.b16 %v1248
    %v1566 = vunpack.c.l.b16 %v1249
    %v1567 = vunpack.c.h.b16 %v1249
    %v1568 = vunpack.c.l.b16 %v1250
    %v1569 = vunpack.c.h.b16 %v1250
    %v1570 = vunpack.c.l.b16 %v1251
    %v1571 = vunpack.c.h.b16 %v1251
    %v1572 = vunpack.c.l.b16 %v1252
    %v1573 = vunpack.c.h.b16 %v1252
    %v1574 = vunpack.c.l.b16 %v1253
    %v1575 = vunpack.c.h.b16 %v1253
    %v1576 = vunpack.c.l.b16 %v1254
    %v1577 = vunpack.c.h.b16 %v1254
    %v1578 = vunpack.c.l.b16 %v1255
    %v1579 = vunpack.c.h.b16 %v1255
    %v1580 = vunpack.c.l.b16 %v1256
    %v1581 = vunpack.c.h.b16 %v1256
    %v1582 = vunpack.c.l.b16 %v1257
    %v1583 = vunpack.c.h.b16 %v1257
    %v1584 = vunpack.c.l.b16 %v1258
    %v1585 = vunpack.c.h.b16 %v1258
    %v1586 = vunpack.c.l.b16 %v1259
    %v1587 = vunpack.c.h.b16 %v1259
    %v1588 = vunpack.c.l.b16 %v1260
    %v1589 = vunpack.c.h.b16 %v1260
    %v1590 = vunpack.c.l.b16 %v1261
    %v1591 = vunpack.c.h.b16 %v1261
    %v1592 = vunpack.c.l.b16 %v1262
    %v1593 = vunpack.c.h.b16 %v1262
    %v1594 = vunpack.c.l.b16 %v1263
    %v1595 = vunpack.c.h.b16 %v1263
    %v1596 = vunpack.c.l.b16 %v1264
    %v1597 = vunpack.c.h.b16 %v1264
    %v1598 = vunpack.c.l.b16 %v1265
    %v1599 = vunpack.c.h.b16 %v1265
    %v1600 = vunpack.c.l.b16 %v1266
    %v1601 = vunpack.c.h.b16 %v1266
    %v1602 = vunpack.c.l.b16 %v1267
    %v1603 = vunpack.c.h.b16 %v1267
    %v1604 = vunpack.c.l.b16 %v1268
    %v1605 = vunpack.c.h.b16 %v1268
    %v1606 = vunpack.c.l.b16 %v1269
    %v1607 = vunpack.c.h.b16 %v1269
    %v1608 = vunpack.c.l.b16 %v1270
    %v1609 = vunpack.c.h.b16 %v1270
    %v1610 = vunpack.c.l.b16 %v1271
    %v1611 = vunpack.c.h.b16 %v1271
    %v1612 = vunpack.c.l.b16 %v1272
    %v1613 = vunpack.c.h.b16 %v1272
    %v1614 = vunpack.c.l.b16 %v1273
    %v1615 = vunpack.c.h.b16 %v1273
    %v1616 = vunpack.c.l.b16 %v1274
    %v1617 = vunpack.c.h.b16 %v1274
    %v1618 = vunpack.c.l.b16 %v1275
    %v1619 = vunpack.c.h.b16 %v1275
    %v1620 = vunpack.c.l.b16 %v1276
    %v1621 = vunpack.c.h.b16 %v1276
    %v1622 = vunpack.c.l.b16 %v1277
    %v1623 = vunpack.c.h.b16 %v1277
    %v1624 = vunpack.c.l.b16 %v1278
    %v1625 = vunpack.c.h.b16 %v1278
    %v1626 = vunpack.c.l.b16 %v1279
    %v1627 = vunpack.c.h.b16 %v1279
    %v1628 = vunpack.c.l.b16 %v1280
    %v1629 = vunpack.c.h.b16 %v1280
    %v1630 = vunpack.c.l.b16 %v1281
    %v1631 = vunpack.c.h.b16 %v1281
    %v1632 = vunpack.c.l.b16 %v1282
    %v1633 = vunpack.c.h.b16 %v1282
    %v1634 = vunpack.c.l.b16 %v1283
    %v1635 = vunpack.c.h.b16 %v1283
    %v1636 = vunpack.c.l.b16 %v1284
    %v1637 = vunpack.c.h.b16 %v1284
    %v1638 = vunpack.c.l.b16 %v1285
    %v1639 = vunpack.c.h.b16 %v1285
    %v1640 = vunpack.c.l.b16 %v1286
    %v1641 = vunpack.c.h.b16 %v1286
    %v1642 = vunpack.c.l.b16 %v1287
    %v1643 = vunpack.c.h.b16 %v1287
    %v1644 = vunpack.c.l.b16 %v1288
    %v1645 = vunpack.c.h.b16 %v1288
    %v1646 = vunpack.c.l.b16 %v1289
    %v1647 = vunpack.c.h.b16 %v1289
    %v1648 = vunpack.c.l.b16 %v1290
    %v1649 = vunpack.c.h.b16 %v1290
    %v1650 = vunpack.c.l.b16 %v1291
    %v1651 = vunpack.c.h.b16 %v1291
    %v1652 = vunpack.c.l.b16 %v1292
    %v1653 = vunpack.c.h.b16 %v1292
    %v1654 = vunpack.c.l.b16 %v1293
    %v1655 = vunpack.c.h.b16 %v1293
    %v1656 = vunpack.c.l.b16 %v1294
    %v1657 = vunpack.c.h.b16 %v1294
    %v1658 = vunpack.c.l.b16 %v1295
    %v1659 = vunpack.c.h.b16 %v1295
    %v1660 = vunpack.c.l.b16 %v1296
    %v1661 = vunpack.c.h.b16 %v1296
    %v1662 = vunpack.c.l.b16 %v1297
    %v1663 = vunpack.c.h.b16 %v1297
    %v1664 = vunpack.c.l.b16 %v1298
    %v1665 = vunpack.c.h.b16 %v1298
    %v1666 = vunpack.c.l.b16 %v1299
    %v1667 = vunpack.c.h.b16 %v1299
    %v1668 = vunpack.c.l.b16 %v1300
    %v1669 = vunpack.c.h.b16 %v1300
    %v1670 = vunpack.c.l.b16 %v1301
    %v1671 = vunpack.c.h.b16 %v1301
    %v1672 = vunpack.c.l.b16 %v1302
    %v1673 = vunpack.c.h.b16 %v1302
    %v1674 = vunpack.c.l.b16 %v1303
    %v1675 = vunpack.c.h.b16 %v1303
    %v1676 = vunpack.c.l.b16 %v1304
    %v1677 = vunpack.c.h.b16 %v1304
    %v1678 = vunpack.c.l.b16 %v1305
    %v1679 = vunpack.c.h.b16 %v1305
    %v1680 = vunpack.c.l.b16 %v1306
    %v1681 = vunpack.c.h.b16 %v1306
    %v1682 = vunpack.c.l.b16 %v1307
    %v1683 = vunpack.c.h.b16 %v1307
    %v1684 = vunpack.c.l.b16 %v1308
    %v1685 = vunpack.c.h.b16 %v1308
    %v1686 = vunpack.c.l.b16 %v1309
    %v1687 = vunpack.c.h.b16 %v1309
    %v1688 = vunpack.c.l.b16 %v1310
    %v1689 = vunpack.c.h.b16 %v1310
    %v1690 = vunpack.c.l.b16 %v1311
    %v1691 = vunpack.c.h.b16 %v1311
    %v1692 = vunpack.c.l.b16 %v1312
    %v1693 = vunpack.c.h.b16 %v1312
    %v1694 = vunpack.c.l.b16 %v1313
    %v1695 = vunpack.c.h.b16 %v1313
    %v1696 = vunpack.c.l.b16 %v1314
    %v1697 = vunpack.c.h.b16 %v1314
    %v1698 = vunpack.c.l.b16 %v1315
    %v1699 = vunpack.c.h.b16 %v1315
    %v1700 = vpack.c.b16 %v1446, %v1444
    %v1701 = vpack.c.b16 %v1447, %v1445
    %v1702 = vpack.c.b16 %v1450, %v1448
    %v1703 = vpack.c.b16 %v1451, %v1449
    %v1704 = vpack.c.b16 %v1454, %v1452
    %v1705 = vpack.c.b16 %v1455, %v1453
    %v1706 = vpack.c.b16 %v1458, %v1456
    %v1707 = vpack.c.b16 %v1459, %v1457
    %v1708 = vpack.c.b16 %v1462, %v1460
    %v1709 = vpack.c.b16 %v1463, %v1461
    %v1710 = vpack.c.b16 %v1466, %v1464
    %v1711 = vpack.c.b16 %v1467, %v1465
    %v1712 = vpack.c.b16 %v1470, %v1468
    %v1713 = vpack.c.b16 %v1471, %v1469
    %v1714 = vpack.c.b16 %v1474, %v1472
    %v1715 = vpack.c.b16 %v1475, %v1473
    %v1716 = vpack.c.b16 %v1478, %v1476
    %v1717 = vpack.c.b16 %v1479, %v1477
    %v1718 = vpack.c.b16 %v1482, %v1480
    %v1719 = vpack.c.b16 %v1483, %v1481
    %v1720 = vpack.c.b16 %v1486, %v1484
    %v1721 = vpack.c.b16 %v1487, %v1485
    %v1722 = vpack.c.b16 %v1490, %v1488
    %v1723 = vpack.c.b16 %v1491, %v1489
    %v1724 = vpack.c.b16 %v1494, %v1492
    %v1725 = vpack.c.b16 %v1495, %v1493
    %v1726 = vpack.c.b16 %v1498, %v1496
    %v1727 = vpack.c.b16 %v1499, %v1497
    %v1728 = vpack.c.b16 %v1502, %v1500
    %v1729 = vpack.c.b16 %v1503, %v1501
    %v1730 = vpack.c.b16 %v1506, %v1504
    %v1731 = vpack.c.b16 %v1507, %v1505
    %v1732 = vpack.c.b16 %v1510, %v1508
    %v1733 = vpack.c.b16 %v1511, %v1509
    %v1734 = vpack.c.b16 %v1514, %v1512
    %v1735 = vpack.c.b16 %v1515, %v1513
    %v1736 = vpack.c.b16 %v1518, %v1516
    %v1737 = vpack.c.b16 %v1519, %v1517
    %v1738 = vpack.c.b16 %v1522, %v1520
    %v1739 = vpack.c.b16 %v1523, %v1521
    %v1740 = vpack.c.b16 %v1526, %v1524
    %v1741 = vpack.c.b16 %v1527, %v1525
    %v1742 = vpack.c.b16 %v1530, %v1528
    %v1743 = vpack.c.b16 %v1531, %v1529
    %v1744 = vpack.c.b16 %v1534, %v1532
    %v1745 = vpack.c.b16 %v1535, %v1533
    %v1746 = vpack.c.b16 %v1538, %v1536
    %v1747 = vpack.c.b16 %v1539, %v1537
    %v1748 = vpack.c.b16 %v1542, %v1540
    %v1749 = vpack.c.b16 %v1543, %v1541
    %v1750 = vpack.c.b16 %v1546, %v1544
    %v1751 = vpack.c.b16 %v1547, %v1545
    %v1752 = vpack.c.b16 %v1550, %v1548
    %v1753 = vpack.c.b16 %v1551, %v1549
    %v1754 = vpack.c.b16 %v1554, %v1552
    %v1755 = vpack.c.b16 %v1555, %v1553
    %v1756 = vpack.c.b16 %v1558, %v1556
    %v1757 = vpack.c.b16 %v1559, %v1557
    %v1758 = vpack.c.b16 %v1562, %v1560
    %v1759 = vpack.c.b16 %v1563, %v1561
    %v1760 = vpack.c.b16 %v1566, %v1564
    %v1761 = vpack.c.b16 %v1567, %v1565
    %v1762 = vpack.c.b16 %v1570, %v1568
    %v1763 = vpack.c.b16 %v1571, %v1569
    %v1764 = vpack.c.b16 %v1574, %v1572
    %v1765 = vpack.c.b16 %v1575, %v1573
    %v1766 = vpack.c.b16 %v1578, %v1576
    %v1767 = vpack.c.b16 %v1579, %v1577
    %v1768 = vpack.c.b16 %v1582, %v1580
    %v1769 = vpack.c.b16 %v1583, %v1581
    %v1770 = vpack.c.b16 %v1586, %v1584
    %v1771 = vpack.c.b16 %v1587, %v1585
    %v1772 = vpack.c.b16 %v1590, %v1588
    %v1773 = vpack.c.b16 %v1591, %v1589
    %v1774 = vpack.c.b16 %v1594, %v1592
    %v1775 = vpack.c.b16 %v1595, %v1593
    %v1776 = vpack.c.b16 %v1598, %v1596
    %v1777 = vpack.c.b16 %v1599, %v1597
    %v1778 = vpack.c.b16 %v1602, %v1600
    %v1779 = vpack.c.b16 %v1603, %v1601
    %v1780 = vpack.c.b16 %v1606, %v1604
    %v1781 = vpack.c.b16 %v1607, %v1605
    %v1782 = vpack.c.b16 %v1610, %v1608
    %v1783 = vpack.c.b16 %v1611, %v1609
    %v1784 = vpack.c.b16 %v1614, %v1612
    %v1785 = vpack.c.b16 %v1615, %v1613
    %v1786 = vpack.c.b16 %v1618, %v1616
    %v1787 = vpack.c.b16 %v1619, %v1617
    %v1788 = vpack.c.b16 %v1622, %v1620
    %v1789 = vpack.c.b16 %v1623, %v1621
    %v1790 = vpack.c.b16 %v1626, %v1624
    %v1791 = vpack.c.b16 %v1627, %v1625
    %v1792 = vpack.c.b16 %v1630, %v1628
    %v1793 = vpack.c.b16 %v1631, %v1629
    %v1794 = vpack.c.b16 %v1634, %v1632
    %v1795 = vpack.c.b16 %v1635, %v1633
    %v1796 = vpack.c.b16 %v1638, %v1636
    %v1797 = vpack.c.b16 %v1639, %v1637
    %v1798 = vpack.c.b16 %v1642, %v1640
    %v1799 = vpack.c.b16 %v1643, %v1641
    %v1800 = vpack.c.b16 %v1646, %v1644
    %v1801 = vpack.c.b16 %v1647, %v1645
    %v1802 = vpack.c.b16 %v1650, %v1648
    %v1803 = vpack.c.b16 %v1651, %v1649
    %v1804 = vpack.c.b16 %v1654, %v1652
    %v1805 = vpack.c.b16 %v1655, %v1653
    %v1806 = vpack.c.b16 %v1658, %v1656
    %v1807 = vpack.c.b16 %v1659, %v1657
    %v1808 = vpack.c.b16 %v1662, %v1660
    %v1809 = vpack.c.b16 %v1663, %v1661
    %v1810 = vpack.c.b16 %v1666, %v1664
    %v1811 = vpack.c.b16 %v1667, %v1665
    %v1812 = vpack.c.b16 %v1670, %v1668
    %v1813 = vpack.c.b16 %v1671, %v1669
    %v1814 = vpack.c.b16 %v1674, %v1672
    %v1815 = vpack.c.b16 %v1675, %v1673
    %v1816 = vpack.c.b16 %v1678, %v1676
    %v1817 = vpack.c.b16 %v1679, %v1677
    %v1818 = vpack.c.b16 %v1682, %v1680
    %v1819 = vpack.c.b16 %v1683, %v1681
    %v1820 = vpack.c.b16 %v1686, %v1684
    %v1821 = vpack.c.b16 %v1687, %v1685
    %v1822 = vpack.c.b16 %v1690, %v1688
    %v1823 = vpack.c.b16 %v1691, %v1689
    %v1824 = vpack.c.b16 %v1694, %v1692
    %v1825 = vpack.c.b16 %v1695, %v1693
    %v1826 = vpack.c.b16 %v1698, %v1696
    %v1827 = vpack.c.b16 %v1699, %v1697
    %1956 = vmatpush.bf16.msra.mxu0 %v1714
    %1957 = vmatpush.bf16.msra.mxu0 %v1712
    %1958 = vmatpush.bf16.msra.mxu0 %v1710
    %1959 = vmatpush.bf16.msra.mxu0 %v1708
    %1960 = vmatpush.bf16.msra.mxu0 %v1706
    %1961 = vmatpush.bf16.msra.mxu0 %v1704
    %1962 = vmatpush.bf16.msra.mxu0 %v1702
    %1963 = vmatpush.bf16.msra.mxu0 %v1700
    %1964 = vmatmul.bf16.gmra.mxu0 %v1180
    %v1965 = vpop.f32.mrf.mxu0
    %v1966 = vadd.f32 0.0, %v1965
    %v1967 = vpop.f32.mrf.mxu0
    %v1968 = vadd.f32 0.0, %v1967
    %1969 = vdwg.mxu0
    %1970 = vmatpush.bf16.msra.mxu0 %v1730
    %1971 = vmatpush.bf16.msra.mxu0 %v1728
    %1972 = vmatpush.bf16.msra.mxu0 %v1726
    %1973 = vmatpush.bf16.msra.mxu0 %v1724
    %1974 = vmatpush.bf16.msra.mxu0 %v1722
    %1975 = vmatpush.bf16.msra.mxu0 %v1720
    %1976 = vmatpush.bf16.msra.mxu0 %v1718
    %1977 = vmatpush.bf16.msra.mxu0 %v1716
    %1978 = vmatmul.bf16.gmra.mxu0 %v1181
    %v1979 = vpop.f32.mrf.mxu0
    %v1980 = vadd.f32 %v1966, %v1979
    %v1981 = vpop.f32.mrf.mxu0
    %v1982 = vadd.f32 %v1968, %v1981
    %1983 = vdwg.mxu0
    %1984 = vmatpush.bf16.msra.mxu0 %v1746
    %1985 = vmatpush.bf16.msra.mxu0 %v1744
    %1986 = vmatpush.bf16.msra.mxu0 %v1742
    %1987 = vmatpush.bf16.msra.mxu0 %v1740
    %1988 = vmatpush.bf16.msra.mxu0 %v1738
    %1989 = vmatpush.bf16.msra.mxu0 %v1736
    %1990 = vmatpush.bf16.msra.mxu0 %v1734
    %1991 = vmatpush.bf16.msra.mxu0 %v1732
    %1992 = vmatmul.bf16.gmra.mxu0 %v1182
    %v1993 = vpop.f32.mrf.mxu0
    %v1994 = vadd.f32 %v1980, %v1993
    %v1995 = vpop.f32.mrf.mxu0
    %v1996 = vadd.f32 %v1982, %v1995
    %1997 = vdwg.mxu0
    %1998 = vmatpush.bf16.msra.mxu0 %v1762
    %1999 = vmatpush.bf16.msra.mxu0 %v1760
    %2000 = vmatpush.bf16.msra.mxu0 %v1758
    %2001 = vmatpush.bf16.msra.mxu0 %v1756
    %2002 = vmatpush.bf16.msra.mxu0 %v1754
    %2003 = vmatpush.bf16.msra.mxu0 %v1752
    %2004 = vmatpush.bf16.msra.mxu0 %v1750
    %2005 = vmatpush.bf16.msra.mxu0 %v1748
    %2006 = vmatmul.bf16.gmra.mxu0 %v1183
    %v2007 = vpop.f32.mrf.mxu0
    %v2008 = vadd.f32 %v1994, %v2007
    %v2009 = vpop.f32.mrf.mxu0
    %v2010 = vadd.f32 %v1996, %v2009
    %2011 = vdwg.mxu0
    %2012 = vmatpush.bf16.msra.mxu0 %v1778
    %2013 = vmatpush.bf16.msra.mxu0 %v1776
    %2014 = vmatpush.bf16.msra.mxu0 %v1774
    %2015 = vmatpush.bf16.msra.mxu0 %v1772
    %2016 = vmatpush.bf16.msra.mxu0 %v1770
    %2017 = vmatpush.bf16.msra.mxu0 %v1768
    %2018 = vmatpush.bf16.msra.mxu0 %v1766
    %2019 = vmatpush.bf16.msra.mxu0 %v1764
    %2020 = vmatmul.bf16.gmra.mxu0 %v1184
    %v2021 = vpop.f32.mrf.mxu0
    %v2022 = vadd.f32 %v2008, %v2021
    %v2023 = vpop.f32.mrf.mxu0
    %v2024 = vadd.f32 %v2010, %v2023
    %2025 = vdwg.mxu0
    %2026 = vmatpush.bf16.msra.mxu0 %v1794
    %2027 = vmatpush.bf16.msra.mxu0 %v1792
    %2028 = vmatpush.bf16.msra.mxu0 %v1790
    %2029 = vmatpush.bf16.msra.mxu0 %v1788
    %2030 = vmatpush.bf16.msra.mxu0 %v1786
    %2031 = vmatpush.bf16.msra.mxu0 %v1784
    %2032 = vmatpush.bf16.msra.mxu0 %v1782
    %2033 = vmatpush.bf16.msra.mxu0 %v1780
    %2034 = vmatmul.bf16.gmra.mxu0 %v1185
    %v2035 = vpop.f32.mrf.mxu0
    %v2036 = vadd.f32 %v2022, %v2035
    %v2037 = vpop.f32.mrf.mxu0
    %v2038 = vadd.f32 %v2024, %v2037
    %2039 = vdwg.mxu0
    %2040 = vmatpush.bf16.msra.mxu0 %v1810
    %2041 = vmatpush.bf16.msra.mxu0 %v1808
    %2042 = vmatpush.bf16.msra.mxu0 %v1806
    %2043 = vmatpush.bf16.msra.mxu0 %v1804
    %2044 = vmatpush.bf16.msra.mxu0 %v1802
    %2045 = vmatpush.bf16.msra.mxu0 %v1800
    %2046 = vmatpush.bf16.msra.mxu0 %v1798
    %2047 = vmatpush.bf16.msra.mxu0 %v1796
    %2048 = vmatmul.bf16.gmra.mxu0 %v1186
    %v2049 = vpop.f32.mrf.mxu0
    %v2050 = vadd.f32 %v2036, %v2049
    %v2051 = vpop.f32.mrf.mxu0
    %v2052 = vadd.f32 %v2038, %v2051
    %2053 = vdwg.mxu0
    %2054 = vmatpush.bf16.msra.mxu0 %v1826
    %2055 = vmatpush.bf16.msra.mxu0 %v1824
    %2056 = vmatpush.bf16.msra.mxu0 %v1822
    %2057 = vmatpush.bf16.msra.mxu0 %v1820
    %2058 = vmatpush.bf16.msra.mxu0 %v1818
    %2059 = vmatpush.bf16.msra.mxu0 %v1816
    %2060 = vmatpush.bf16.msra.mxu0 %v1814
    %2061 = vmatpush.bf16.msra.mxu0 %v1812
    %2062 = vmatmul.bf16.gmra.mxu0 %v1187
    %v2063 = vpop.f32.mrf.mxu0
    %v2064 = vadd.f32 %v2050, %v2063
    %v2065 = vpop.f32.mrf.mxu0
    %v2066 = vadd.f32 %v2052, %v2065
    %2067 = vdwg.mxu0
    %2068 = vmatpush.bf16.msra.mxu0 %v1715
    %2069 = vmatpush.bf16.msra.mxu0 %v1713
    %2070 = vmatpush.bf16.msra.mxu0 %v1711
    %2071 = vmatpush.bf16.msra.mxu0 %v1709
    %2072 = vmatpush.bf16.msra.mxu0 %v1707
    %2073 = vmatpush.bf16.msra.mxu0 %v1705
    %2074 = vmatpush.bf16.msra.mxu0 %v1703
    %2075 = vmatpush.bf16.msra.mxu0 %v1701
    %2076 = vmatmul.bf16.gmra.mxu0 %v1180
    %v2077 = vpop.f32.mrf.mxu0
    %v2078 = vadd.f32 0.0, %v2077
    %v2079 = vpop.f32.mrf.mxu0
    %v2080 = vadd.f32 0.0, %v2079
    %2081 = vdwg.mxu0
    %2082 = vmatpush.bf16.msra.mxu0 %v1731
    %2083 = vmatpush.bf16.msra.mxu0 %v1729
    %2084 = vmatpush.bf16.msra.mxu0 %v1727
    %2085 = vmatpush.bf16.msra.mxu0 %v1725
    %2086 = vmatpush.bf16.msra.mxu0 %v1723
    %2087 = vmatpush.bf16.msra.mxu0 %v1721
    %2088 = vmatpush.bf16.msra.mxu0 %v1719
    %2089 = vmatpush.bf16.msra.mxu0 %v1717
    %2090 = vmatmul.bf16.gmra.mxu0 %v1181
    %v2091 = vpop.f32.mrf.mxu0
    %v2092 = vadd.f32 %v2078, %v2091
    %v2093 = vpop.f32.mrf.mxu0
    %v2094 = vadd.f32 %v2080, %v2093
    %2095 = vdwg.mxu0
    %2096 = vmatpush.bf16.msra.mxu0 %v1747
    %2097 = vmatpush.bf16.msra.mxu0 %v1745
    %2098 = vmatpush.bf16.msra.mxu0 %v1743
    %2099 = vmatpush.bf16.msra.mxu0 %v1741
    %2100 = vmatpush.bf16.msra.mxu0 %v1739
    %2101 = vmatpush.bf16.msra.mxu0 %v1737
    %2102 = vmatpush.bf16.msra.mxu0 %v1735
    %2103 = vmatpush.bf16.msra.mxu0 %v1733
    %2104 = vmatmul.bf16.gmra.mxu0 %v1182
    %v2105 = vpop.f32.mrf.mxu0
    %v2106 = vadd.f32 %v2092, %v2105
    %v2107 = vpop.f32.mrf.mxu0
    %v2108 = vadd.f32 %v2094, %v2107
    %2109 = vdwg.mxu0
    %2110 = vmatpush.bf16.msra.mxu0 %v1763
    %2111 = vmatpush.bf16.msra.mxu0 %v1761
    %2112 = vmatpush.bf16.msra.mxu0 %v1759
    %2113 = vmatpush.bf16.msra.mxu0 %v1757
    %2114 = vmatpush.bf16.msra.mxu0 %v1755
    %2115 = vmatpush.bf16.msra.mxu0 %v1753
    %2116 = vmatpush.bf16.msra.mxu0 %v1751
    %2117 = vmatpush.bf16.msra.mxu0 %v1749
    %2118 = vmatmul.bf16.gmra.mxu0 %v1183
    %v2119 = vpop.f32.mrf.mxu0
    %v2120 = vadd.f32 %v2106, %v2119
    %v2121 = vpop.f32.mrf.mxu0
    %v2122 = vadd.f32 %v2108, %v2121
    %2123 = vdwg.mxu0
    %2124 = vmatpush.bf16.msra.mxu0 %v1779
    %2125 = vmatpush.bf16.msra.mxu0 %v1777
    %2126 = vmatpush.bf16.msra.mxu0 %v1775
    %2127 = vmatpush.bf16.msra.mxu0 %v1773
    %2128 = vmatpush.bf16.msra.mxu0 %v1771
    %2129 = vmatpush.bf16.msra.mxu0 %v1769
    %2130 = vmatpush.bf16.msra.mxu0 %v1767
    %2131 = vmatpush.bf16.msra.mxu0 %v1765
    %2132 = vmatmul.bf16.gmra.mxu0 %v1184
    %v2133 = vpop.f32.mrf.mxu0
    %v2134 = vadd.f32 %v2120, %v2133
    %v2135 = vpop.f32.mrf.mxu0
    %v2136 = vadd.f32 %v2122, %v2135
    %2137 = vdwg.mxu0
    %2138 = vmatpush.bf16.msra.mxu0 %v1795
    %2139 = vmatpush.bf16.msra.mxu0 %v1793
    %2140 = vmatpush.bf16.msra.mxu0 %v1791
    %2141 = vmatpush.bf16.msra.mxu0 %v1789
    %2142 = vmatpush.bf16.msra.mxu0 %v1787
    %2143 = vmatpush.bf16.msra.mxu0 %v1785
    %2144 = vmatpush.bf16.msra.mxu0 %v1783
    %2145 = vmatpush.bf16.msra.mxu0 %v1781
    %2146 = vmatmul.bf16.gmra.mxu0 %v1185
    %v2147 = vpop.f32.mrf.mxu0
    %v2148 = vadd.f32 %v2134, %v2147
    %v2149 = vpop.f32.mrf.mxu0
    %v2150 = vadd.f32 %v2136, %v2149
    %2151 = vdwg.mxu0
    %2152 = vmatpush.bf16.msra.mxu0 %v1811
    %2153 = vmatpush.bf16.msra.mxu0 %v1809
    %2154 = vmatpush.bf16.msra.mxu0 %v1807
    %2155 = vmatpush.bf16.msra.mxu0 %v1805
    %2156 = vmatpush.bf16.msra.mxu0 %v1803
    %2157 = vmatpush.bf16.msra.mxu0 %v1801
    %2158 = vmatpush.bf16.msra.mxu0 %v1799
    %2159 = vmatpush.bf16.msra.mxu0 %v1797
    %2160 = vmatmul.bf16.gmra.mxu0 %v1186
    %v2161 = vpop.f32.mrf.mxu0
    %v2162 = vadd.f32 %v2148, %v2161
    %v2163 = vpop.f32.mrf.mxu0
    %v2164 = vadd.f32 %v2150, %v2163
    %2165 = vdwg.mxu0
    %2166 = vmatpush.bf16.msra.mxu0 %v1827
    %2167 = vmatpush.bf16.msra.mxu0 %v1825
    %2168 = vmatpush.bf16.msra.mxu0 %v1823
    %2169 = vmatpush.bf16.msra.mxu0 %v1821
    %2170 = vmatpush.bf16.msra.mxu0 %v1819
    %2171 = vmatpush.bf16.msra.mxu0 %v1817
    %2172 = vmatpush.bf16.msra.mxu0 %v1815
    %2173 = vmatpush.bf16.msra.mxu0 %v1813
    %2174 = vmatmul.bf16.gmra.mxu0 %v1187
    %v2175 = vpop.f32.mrf.mxu0
    %v2176 = vadd.f32 %v2162, %v2175
    %v2177 = vpop.f32.mrf.mxu0
    %v2178 = vadd.f32 %v2164, %v2177
    %2179 = vdwg.mxu0
    %v2180 = vadd.f32 %v1056, %v2064
    %v2181 = vadd.f32 %v1168, %v2176
    %v2182 = vadd.f32 %v1058, %v2066
    %v2183 = vadd.f32 %v1170, %v2178
    %v2184 = vadd.f32 %v161, %v2180
    %v2185 = vadd.f32 %v162, %v2181
    %v2186 = vadd.f32 %v161, %v2182
    %v2187 = vadd.f32 %v162, %v2183
    %v2188 = vpack.c.bf16 %v2186, %v2184
    %v2189 = vpack.c.bf16 %v2187, %v2185
    %v2190 = vld [vmem:[#allocation3] sm:$0xff]
    %v2191 = vld [vmem:[#allocation3 + $0x8] sm:$0xff]
    %v2192 = vld [vmem:[#allocation3 + $0x10] sm:$0xff]
    %v2193 = vld [vmem:[#allocation3 + $0x18] sm:$0xff]
    %v2194 = vld [vmem:[#allocation3 + $0x20] sm:$0xff]
    %v2195 = vld [vmem:[#allocation3 + $0x28] sm:$0xff]
    %v2196 = vld [vmem:[#allocation3 + $0x30] sm:$0xff]
    %v2197 = vld [vmem:[#allocation3 + $0x38] sm:$0xff]
    %v2198 = vld [vmem:[#allocation3 + $0x40] sm:$0xff]
    %v2199 = vld [vmem:[#allocation3 + $0x48] sm:$0xff]
    %v2200 = vld [vmem:[#allocation3 + $0x50] sm:$0xff]
    %v2201 = vld [vmem:[#allocation3 + $0x58] sm:$0xff]
    %v2202 = vld [vmem:[#allocation3 + $0x60] sm:$0xff]
    %v2203 = vld [vmem:[#allocation3 + $0x68] sm:$0xff]
    %v2204 = vld [vmem:[#allocation3 + $0x70] sm:$0xff]
    %v2205 = vld [vmem:[#allocation3 + $0x78] sm:$0xff]
    %v2206 = vld [vmem:[#allocation3 + $0x80] sm:$0xff]
    %v2207 = vld [vmem:[#allocation3 + $0x88] sm:$0xff]
    %v2208 = vld [vmem:[#allocation3 + $0x90] sm:$0xff]
    %v2209 = vld [vmem:[#allocation3 + $0x98] sm:$0xff]
    %v2210 = vld [vmem:[#allocation3 + $0xa0] sm:$0xff]
    %v2211 = vld [vmem:[#allocation3 + $0xa8] sm:$0xff]
    %v2212 = vld [vmem:[#allocation3 + $0xb0] sm:$0xff]
    %v2213 = vld [vmem:[#allocation3 + $0xb8] sm:$0xff]
    %v2214 = vld [vmem:[#allocation3 + $0xc0] sm:$0xff]
    %v2215 = vld [vmem:[#allocation3 + $0xc8] sm:$0xff]
    %v2216 = vld [vmem:[#allocation3 + $0xd0] sm:$0xff]
    %v2217 = vld [vmem:[#allocation3 + $0xd8] sm:$0xff]
    %v2218 = vld [vmem:[#allocation3 + $0xe0] sm:$0xff]
    %v2219 = vld [vmem:[#allocation3 + $0xe8] sm:$0xff]
    %v2220 = vld [vmem:[#allocation3 + $0xf0] sm:$0xff]
    %v2221 = vld [vmem:[#allocation3 + $0xf8] sm:$0xff]
    %v2222 = vld [vmem:[#allocation3 + $0x100] sm:$0xff]
    %v2223 = vld [vmem:[#allocation3 + $0x108] sm:$0xff]
    %v2224 = vld [vmem:[#allocation3 + $0x110] sm:$0xff]
    %v2225 = vld [vmem:[#allocation3 + $0x118] sm:$0xff]
    %v2226 = vld [vmem:[#allocation3 + $0x120] sm:$0xff]
    %v2227 = vld [vmem:[#allocation3 + $0x128] sm:$0xff]
    %v2228 = vld [vmem:[#allocation3 + $0x130] sm:$0xff]
    %v2229 = vld [vmem:[#allocation3 + $0x138] sm:$0xff]
    %v2230 = vld [vmem:[#allocation3 + $0x140] sm:$0xff]
    %v2231 = vld [vmem:[#allocation3 + $0x148] sm:$0xff]
    %v2232 = vld [vmem:[#allocation3 + $0x150] sm:$0xff]
    %v2233 = vld [vmem:[#allocation3 + $0x158] sm:$0xff]
    %v2234 = vld [vmem:[#allocation3 + $0x160] sm:$0xff]
    %v2235 = vld [vmem:[#allocation3 + $0x168] sm:$0xff]
    %v2236 = vld [vmem:[#allocation3 + $0x170] sm:$0xff]
    %v2237 = vld [vmem:[#allocation3 + $0x178] sm:$0xff]
    %v2238 = vld [vmem:[#allocation3 + $0x180] sm:$0xff]
    %v2239 = vld [vmem:[#allocation3 + $0x188] sm:$0xff]
    %v2240 = vld [vmem:[#allocation3 + $0x190] sm:$0xff]
    %v2241 = vld [vmem:[#allocation3 + $0x198] sm:$0xff]
    %v2242 = vld [vmem:[#allocation3 + $0x1a0] sm:$0xff]
    %v2243 = vld [vmem:[#allocation3 + $0x1a8] sm:$0xff]
    %v2244 = vld [vmem:[#allocation3 + $0x1b0] sm:$0xff]
    %v2245 = vld [vmem:[#allocation3 + $0x1b8] sm:$0xff]
    %v2246 = vld [vmem:[#allocation3 + $0x1c0] sm:$0xff]
    %v2247 = vld [vmem:[#allocation3 + $0x1c8] sm:$0xff]
    %v2248 = vld [vmem:[#allocation3 + $0x1d0] sm:$0xff]
    %v2249 = vld [vmem:[#allocation3 + $0x1d8] sm:$0xff]
    %v2250 = vld [vmem:[#allocation3 + $0x1e0] sm:$0xff]
    %v2251 = vld [vmem:[#allocation3 + $0x1e8] sm:$0xff]
    %v2252 = vld [vmem:[#allocation3 + $0x1f0] sm:$0xff]
    %v2253 = vld [vmem:[#allocation3 + $0x1f8] sm:$0xff]
    %v2254 = vld [vmem:[#allocation3 + $0x200] sm:$0xff]
    %v2255 = vld [vmem:[#allocation3 + $0x208] sm:$0xff]
    %v2256 = vld [vmem:[#allocation3 + $0x210] sm:$0xff]
    %v2257 = vld [vmem:[#allocation3 + $0x218] sm:$0xff]
    %v2258 = vld [vmem:[#allocation3 + $0x220] sm:$0xff]
    %v2259 = vld [vmem:[#allocation3 + $0x228] sm:$0xff]
    %v2260 = vld [vmem:[#allocation3 + $0x230] sm:$0xff]
    %v2261 = vld [vmem:[#allocation3 + $0x238] sm:$0xff]
    %v2262 = vld [vmem:[#allocation3 + $0x240] sm:$0xff]
    %v2263 = vld [vmem:[#allocation3 + $0x248] sm:$0xff]
    %v2264 = vld [vmem:[#allocation3 + $0x250] sm:$0xff]
    %v2265 = vld [vmem:[#allocation3 + $0x258] sm:$0xff]
    %v2266 = vld [vmem:[#allocation3 + $0x260] sm:$0xff]
    %v2267 = vld [vmem:[#allocation3 + $0x268] sm:$0xff]
    %v2268 = vld [vmem:[#allocation3 + $0x270] sm:$0xff]
    %v2269 = vld [vmem:[#allocation3 + $0x278] sm:$0xff]
    %v2270 = vld [vmem:[#allocation3 + $0x280] sm:$0xff]
    %v2271 = vld [vmem:[#allocation3 + $0x288] sm:$0xff]
    %v2272 = vld [vmem:[#allocation3 + $0x290] sm:$0xff]
    %v2273 = vld [vmem:[#allocation3 + $0x298] sm:$0xff]
    %v2274 = vld [vmem:[#allocation3 + $0x2a0] sm:$0xff]
    %v2275 = vld [vmem:[#allocation3 + $0x2a8] sm:$0xff]
    %v2276 = vld [vmem:[#allocation3 + $0x2b0] sm:$0xff]
    %v2277 = vld [vmem:[#allocation3 + $0x2b8] sm:$0xff]
    %v2278 = vld [vmem:[#allocation3 + $0x2c0] sm:$0xff]
    %v2279 = vld [vmem:[#allocation3 + $0x2c8] sm:$0xff]
    %v2280 = vld [vmem:[#allocation3 + $0x2d0] sm:$0xff]
    %v2281 = vld [vmem:[#allocation3 + $0x2d8] sm:$0xff]
    %v2282 = vld [vmem:[#allocation3 + $0x2e0] sm:$0xff]
    %v2283 = vld [vmem:[#allocation3 + $0x2e8] sm:$0xff]
    %v2284 = vld [vmem:[#allocation3 + $0x2f0] sm:$0xff]
    %v2285 = vld [vmem:[#allocation3 + $0x2f8] sm:$0xff]
    %v2286 = vld [vmem:[#allocation3 + $0x300] sm:$0xff]
    %v2287 = vld [vmem:[#allocation3 + $0x308] sm:$0xff]
    %v2288 = vld [vmem:[#allocation3 + $0x310] sm:$0xff]
    %v2289 = vld [vmem:[#allocation3 + $0x318] sm:$0xff]
    %v2290 = vld [vmem:[#allocation3 + $0x320] sm:$0xff]
    %v2291 = vld [vmem:[#allocation3 + $0x328] sm:$0xff]
    %v2292 = vld [vmem:[#allocation3 + $0x330] sm:$0xff]
    %v2293 = vld [vmem:[#allocation3 + $0x338] sm:$0xff]
    %v2294 = vld [vmem:[#allocation3 + $0x340] sm:$0xff]
    %v2295 = vld [vmem:[#allocation3 + $0x348] sm:$0xff]
    %v2296 = vld [vmem:[#allocation3 + $0x350] sm:$0xff]
    %v2297 = vld [vmem:[#allocation3 + $0x358] sm:$0xff]
    %v2298 = vld [vmem:[#allocation3 + $0x360] sm:$0xff]
    %v2299 = vld [vmem:[#allocation3 + $0x368] sm:$0xff]
    %v2300 = vld [vmem:[#allocation3 + $0x370] sm:$0xff]
    %v2301 = vld [vmem:[#allocation3 + $0x378] sm:$0xff]
    %v2302 = vld [vmem:[#allocation3 + $0x380] sm:$0xff]
    %v2303 = vld [vmem:[#allocation3 + $0x388] sm:$0xff]
    %v2304 = vld [vmem:[#allocation3 + $0x390] sm:$0xff]
    %v2305 = vld [vmem:[#allocation3 + $0x398] sm:$0xff]
    %v2306 = vld [vmem:[#allocation3 + $0x3a0] sm:$0xff]
    %v2307 = vld [vmem:[#allocation3 + $0x3a8] sm:$0xff]
    %v2308 = vld [vmem:[#allocation3 + $0x3b0] sm:$0xff]
    %v2309 = vld [vmem:[#allocation3 + $0x3b8] sm:$0xff]
    %v2310 = vld [vmem:[#allocation3 + $0x3c0] sm:$0xff]
    %v2311 = vld [vmem:[#allocation3 + $0x3c8] sm:$0xff]
    %v2312 = vld [vmem:[#allocation3 + $0x3d0] sm:$0xff]
    %v2313 = vld [vmem:[#allocation3 + $0x3d8] sm:$0xff]
    %v2314 = vld [vmem:[#allocation3 + $0x3e0] sm:$0xff]
    %v2315 = vld [vmem:[#allocation3 + $0x3e8] sm:$0xff]
    %v2316 = vld [vmem:[#allocation3 + $0x3f0] sm:$0xff]
    %v2317 = vld [vmem:[#allocation3 + $0x3f8] sm:$0xff]
    %v2319 = vperm.slane %v165, 0
    %v2320 = vperm.slane %v165, 1
    %v2321 = vperm.slane %v165, 2
    %v2322 = vperm.slane %v165, 3
    %v2323 = vperm.slane %v165, 4
    %v2324 = vperm.slane %v165, 5
    %v2325 = vperm.slane %v165, 6
    %v2326 = vperm.slane %v165, 7
    %v2463 = vunpack.c.l.b16 %v2190
    %v2464 = vunpack.c.h.b16 %v2190
    %v2465 = vunpack.c.l.b16 %v2191
    %v2466 = vunpack.c.h.b16 %v2191
    %v2467 = vunpack.c.l.b16 %v2192
    %v2468 = vunpack.c.h.b16 %v2192
    %v2469 = vunpack.c.l.b16 %v2193
    %v2470 = vunpack.c.h.b16 %v2193
    %v2471 = vunpack.c.l.b16 %v2194
    %v2472 = vunpack.c.h.b16 %v2194
    %v2473 = vunpack.c.l.b16 %v2195
    %v2474 = vunpack.c.h.b16 %v2195
    %v2475 = vunpack.c.l.b16 %v2196
    %v2476 = vunpack.c.h.b16 %v2196
    %v2477 = vunpack.c.l.b16 %v2197
    %v2478 = vunpack.c.h.b16 %v2197
    %v2479 = vunpack.c.l.b16 %v2198
    %v2480 = vunpack.c.h.b16 %v2198
    %v2481 = vunpack.c.l.b16 %v2199
    %v2482 = vunpack.c.h.b16 %v2199
    %v2483 = vunpack.c.l.b16 %v2200
    %v2484 = vunpack.c.h.b16 %v2200
    %v2485 = vunpack.c.l.b16 %v2201
    %v2486 = vunpack.c.h.b16 %v2201
    %v2487 = vunpack.c.l.b16 %v2202
    %v2488 = vunpack.c.h.b16 %v2202
    %v2489 = vunpack.c.l.b16 %v2203
    %v2490 = vunpack.c.h.b16 %v2203
    %v2491 = vunpack.c.l.b16 %v2204
    %v2492 = vunpack.c.h.b16 %v2204
    %v2493 = vunpack.c.l.b16 %v2205
    %v2494 = vunpack.c.h.b16 %v2205
    %v2495 = vunpack.c.l.b16 %v2206
    %v2496 = vunpack.c.h.b16 %v2206
    %v2497 = vunpack.c.l.b16 %v2207
    %v2498 = vunpack.c.h.b16 %v2207
    %v2499 = vunpack.c.l.b16 %v2208
    %v2500 = vunpack.c.h.b16 %v2208
    %v2501 = vunpack.c.l.b16 %v2209
    %v2502 = vunpack.c.h.b16 %v2209
    %v2503 = vunpack.c.l.b16 %v2210
    %v2504 = vunpack.c.h.b16 %v2210
    %v2505 = vunpack.c.l.b16 %v2211
    %v2506 = vunpack.c.h.b16 %v2211
    %v2507 = vunpack.c.l.b16 %v2212
    %v2508 = vunpack.c.h.b16 %v2212
    %v2509 = vunpack.c.l.b16 %v2213
    %v2510 = vunpack.c.h.b16 %v2213
    %v2511 = vunpack.c.l.b16 %v2214
    %v2512 = vunpack.c.h.b16 %v2214
    %v2513 = vunpack.c.l.b16 %v2215
    %v2514 = vunpack.c.h.b16 %v2215
    %v2515 = vunpack.c.l.b16 %v2216
    %v2516 = vunpack.c.h.b16 %v2216
    %v2517 = vunpack.c.l.b16 %v2217
    %v2518 = vunpack.c.h.b16 %v2217
    %v2519 = vunpack.c.l.b16 %v2218
    %v2520 = vunpack.c.h.b16 %v2218
    %v2521 = vunpack.c.l.b16 %v2219
    %v2522 = vunpack.c.h.b16 %v2219
    %v2523 = vunpack.c.l.b16 %v2220
    %v2524 = vunpack.c.h.b16 %v2220
    %v2525 = vunpack.c.l.b16 %v2221
    %v2526 = vunpack.c.h.b16 %v2221
    %v2527 = vunpack.c.l.b16 %v2222
    %v2528 = vunpack.c.h.b16 %v2222
    %v2529 = vunpack.c.l.b16 %v2223
    %v2530 = vunpack.c.h.b16 %v2223
    %v2531 = vunpack.c.l.b16 %v2224
    %v2532 = vunpack.c.h.b16 %v2224
    %v2533 = vunpack.c.l.b16 %v2225
    %v2534 = vunpack.c.h.b16 %v2225
    %v2535 = vunpack.c.l.b16 %v2226
    %v2536 = vunpack.c.h.b16 %v2226
    %v2537 = vunpack.c.l.b16 %v2227
    %v2538 = vunpack.c.h.b16 %v2227
    %v2539 = vunpack.c.l.b16 %v2228
    %v2540 = vunpack.c.h.b16 %v2228
    %v2541 = vunpack.c.l.b16 %v2229
    %v2542 = vunpack.c.h.b16 %v2229
    %v2543 = vunpack.c.l.b16 %v2230
    %v2544 = vunpack.c.h.b16 %v2230
    %v2545 = vunpack.c.l.b16 %v2231
    %v2546 = vunpack.c.h.b16 %v2231
    %v2547 = vunpack.c.l.b16 %v2232
    %v2548 = vunpack.c.h.b16 %v2232
    %v2549 = vunpack.c.l.b16 %v2233
    %v2550 = vunpack.c.h.b16 %v2233
    %v2551 = vunpack.c.l.b16 %v2234
    %v2552 = vunpack.c.h.b16 %v2234
    %v2553 = vunpack.c.l.b16 %v2235
    %v2554 = vunpack.c.h.b16 %v2235
    %v2555 = vunpack.c.l.b16 %v2236
    %v2556 = vunpack.c.h.b16 %v2236
    %v2557 = vunpack.c.l.b16 %v2237
    %v2558 = vunpack.c.h.b16 %v2237
    %v2559 = vunpack.c.l.b16 %v2238
    %v2560 = vunpack.c.h.b16 %v2238
    %v2561 = vunpack.c.l.b16 %v2239
    %v2562 = vunpack.c.h.b16 %v2239
    %v2563 = vunpack.c.l.b16 %v2240
    %v2564 = vunpack.c.h.b16 %v2240
    %v2565 = vunpack.c.l.b16 %v2241
    %v2566 = vunpack.c.h.b16 %v2241
    %v2567 = vunpack.c.l.b16 %v2242
    %v2568 = vunpack.c.h.b16 %v2242
    %v2569 = vunpack.c.l.b16 %v2243
    %v2570 = vunpack.c.h.b16 %v2243
    %v2571 = vunpack.c.l.b16 %v2244
    %v2572 = vunpack.c.h.b16 %v2244
    %v2573 = vunpack.c.l.b16 %v2245
    %v2574 = vunpack.c.h.b16 %v2245
    %v2575 = vunpack.c.l.b16 %v2246
    %v2576 = vunpack.c.h.b16 %v2246
    %v2577 = vunpack.c.l.b16 %v2247
    %v2578 = vunpack.c.h.b16 %v2247
    %v2579 = vunpack.c.l.b16 %v2248
    %v2580 = vunpack.c.h.b16 %v2248
    %v2581 = vunpack.c.l.b16 %v2249
    %v2582 = vunpack.c.h.b16 %v2249
    %v2583 = vunpack.c.l.b16 %v2250
    %v2584 = vunpack.c.h.b16 %v2250
    %v2585 = vunpack.c.l.b16 %v2251
    %v2586 = vunpack.c.h.b16 %v2251
    %v2587 = vunpack.c.l.b16 %v2252
    %v2588 = vunpack.c.h.b16 %v2252
    %v2589 = vunpack.c.l.b16 %v2253
    %v2590 = vunpack.c.h.b16 %v2253
    %v2591 = vunpack.c.l.b16 %v2254
    %v2592 = vunpack.c.h.b16 %v2254
    %v2593 = vunpack.c.l.b16 %v2255
    %v2594 = vunpack.c.h.b16 %v2255
    %v2595 = vunpack.c.l.b16 %v2256
    %v2596 = vunpack.c.h.b16 %v2256
    %v2597 = vunpack.c.l.b16 %v2257
    %v2598 = vunpack.c.h.b16 %v2257
    %v2599 = vunpack.c.l.b16 %v2258
    %v2600 = vunpack.c.h.b16 %v2258
    %v2601 = vunpack.c.l.b16 %v2259
    %v2602 = vunpack.c.h.b16 %v2259
    %v2603 = vunpack.c.l.b16 %v2260
    %v2604 = vunpack.c.h.b16 %v2260
    %v2605 = vunpack.c.l.b16 %v2261
    %v2606 = vunpack.c.h.b16 %v2261
    %v2607 = vunpack.c.l.b16 %v2262
    %v2608 = vunpack.c.h.b16 %v2262
    %v2609 = vunpack.c.l.b16 %v2263
    %v2610 = vunpack.c.h.b16 %v2263
    %v2611 = vunpack.c.l.b16 %v2264
    %v2612 = vunpack.c.h.b16 %v2264
    %v2613 = vunpack.c.l.b16 %v2265
    %v2614 = vunpack.c.h.b16 %v2265
    %v2615 = vunpack.c.l.b16 %v2266
    %v2616 = vunpack.c.h.b16 %v2266
    %v2617 = vunpack.c.l.b16 %v2267
    %v2618 = vunpack.c.h.b16 %v2267
    %v2619 = vunpack.c.l.b16 %v2268
    %v2620 = vunpack.c.h.b16 %v2268
    %v2621 = vunpack.c.l.b16 %v2269
    %v2622 = vunpack.c.h.b16 %v2269
    %v2623 = vunpack.c.l.b16 %v2270
    %v2624 = vunpack.c.h.b16 %v2270
    %v2625 = vunpack.c.l.b16 %v2271
    %v2626 = vunpack.c.h.b16 %v2271
    %v2627 = vunpack.c.l.b16 %v2272
    %v2628 = vunpack.c.h.b16 %v2272
    %v2629 = vunpack.c.l.b16 %v2273
    %v2630 = vunpack.c.h.b16 %v2273
    %v2631 = vunpack.c.l.b16 %v2274
    %v2632 = vunpack.c.h.b16 %v2274
    %v2633 = vunpack.c.l.b16 %v2275
    %v2634 = vunpack.c.h.b16 %v2275
    %v2635 = vunpack.c.l.b16 %v2276
    %v2636 = vunpack.c.h.b16 %v2276
    %v2637 = vunpack.c.l.b16 %v2277
    %v2638 = vunpack.c.h.b16 %v2277
    %v2639 = vunpack.c.l.b16 %v2278
    %v2640 = vunpack.c.h.b16 %v2278
    %v2641 = vunpack.c.l.b16 %v2279
    %v2642 = vunpack.c.h.b16 %v2279
    %v2643 = vunpack.c.l.b16 %v2280
    %v2644 = vunpack.c.h.b16 %v2280
    %v2645 = vunpack.c.l.b16 %v2281
    %v2646 = vunpack.c.h.b16 %v2281
    %v2647 = vunpack.c.l.b16 %v2282
    %v2648 = vunpack.c.h.b16 %v2282
    %v2649 = vunpack.c.l.b16 %v2283
    %v2650 = vunpack.c.h.b16 %v2283
    %v2651 = vunpack.c.l.b16 %v2284
    %v2652 = vunpack.c.h.b16 %v2284
    %v2653 = vunpack.c.l.b16 %v2285
    %v2654 = vunpack.c.h.b16 %v2285
    %v2655 = vunpack.c.l.b16 %v2286
    %v2656 = vunpack.c.h.b16 %v2286
    %v2657 = vunpack.c.l.b16 %v2287
    %v2658 = vunpack.c.h.b16 %v2287
    %v2659 = vunpack.c.l.b16 %v2288
    %v2660 = vunpack.c.h.b16 %v2288
    %v2661 = vunpack.c.l.b16 %v2289
    %v2662 = vunpack.c.h.b16 %v2289
    %v2663 = vunpack.c.l.b16 %v2290
    %v2664 = vunpack.c.h.b16 %v2290
    %v2665 = vunpack.c.l.b16 %v2291
    %v2666 = vunpack.c.h.b16 %v2291
    %v2667 = vunpack.c.l.b16 %v2292
    %v2668 = vunpack.c.h.b16 %v2292
    %v2669 = vunpack.c.l.b16 %v2293
    %v2670 = vunpack.c.h.b16 %v2293
    %v2671 = vunpack.c.l.b16 %v2294
    %v2672 = vunpack.c.h.b16 %v2294
    %v2673 = vunpack.c.l.b16 %v2295
    %v2674 = vunpack.c.h.b16 %v2295
    %v2675 = vunpack.c.l.b16 %v2296
    %v2676 = vunpack.c.h.b16 %v2296
    %v2677 = vunpack.c.l.b16 %v2297
    %v2678 = vunpack.c.h.b16 %v2297
    %v2679 = vunpack.c.l.b16 %v2298
    %v2680 = vunpack.c.h.b16 %v2298
    %v2681 = vunpack.c.l.b16 %v2299
    %v2682 = vunpack.c.h.b16 %v2299
    %v2683 = vunpack.c.l.b16 %v2300
    %v2684 = vunpack.c.h.b16 %v2300
    %v2685 = vunpack.c.l.b16 %v2301
    %v2686 = vunpack.c.h.b16 %v2301
    %v2687 = vunpack.c.l.b16 %v2302
    %v2688 = vunpack.c.h.b16 %v2302
    %v2689 = vunpack.c.l.b16 %v2303
    %v2690 = vunpack.c.h.b16 %v2303
    %v2691 = vunpack.c.l.b16 %v2304
    %v2692 = vunpack.c.h.b16 %v2304
    %v2693 = vunpack.c.l.b16 %v2305
    %v2694 = vunpack.c.h.b16 %v2305
    %v2695 = vunpack.c.l.b16 %v2306
    %v2696 = vunpack.c.h.b16 %v2306
    %v2697 = vunpack.c.l.b16 %v2307
    %v2698 = vunpack.c.h.b16 %v2307
    %v2699 = vunpack.c.l.b16 %v2308
    %v2700 = vunpack.c.h.b16 %v2308
    %v2701 = vunpack.c.l.b16 %v2309
    %v2702 = vunpack.c.h.b16 %v2309
    %v2703 = vunpack.c.l.b16 %v2310
    %v2704 = vunpack.c.h.b16 %v2310
    %v2705 = vunpack.c.l.b16 %v2311
    %v2706 = vunpack.c.h.b16 %v2311
    %v2707 = vunpack.c.l.b16 %v2312
    %v2708 = vunpack.c.h.b16 %v2312
    %v2709 = vunpack.c.l.b16 %v2313
    %v2710 = vunpack.c.h.b16 %v2313
    %v2711 = vunpack.c.l.b16 %v2314
    %v2712 = vunpack.c.h.b16 %v2314
    %v2713 = vunpack.c.l.b16 %v2315
    %v2714 = vunpack.c.h.b16 %v2315
    %v2715 = vunpack.c.l.b16 %v2316
    %v2716 = vunpack.c.h.b16 %v2316
    %v2717 = vunpack.c.l.b16 %v2317
    %v2718 = vunpack.c.h.b16 %v2317
    %v2719 = vpack.c.b16 %v2471, %v2463
    %v2720 = vpack.c.b16 %v2472, %v2464
    %v2721 = vpack.c.b16 %v2473, %v2465
    %v2722 = vpack.c.b16 %v2474, %v2466
    %v2723 = vpack.c.b16 %v2475, %v2467
    %v2724 = vpack.c.b16 %v2476, %v2468
    %v2725 = vpack.c.b16 %v2477, %v2469
    %v2726 = vpack.c.b16 %v2478, %v2470
    %v2727 = vpack.c.b16 %v2487, %v2479
    %v2728 = vpack.c.b16 %v2488, %v2480
    %v2729 = vpack.c.b16 %v2489, %v2481
    %v2730 = vpack.c.b16 %v2490, %v2482
    %v2731 = vpack.c.b16 %v2491, %v2483
    %v2732 = vpack.c.b16 %v2492, %v2484
    %v2733 = vpack.c.b16 %v2493, %v2485
    %v2734 = vpack.c.b16 %v2494, %v2486
    %v2735 = vpack.c.b16 %v2503, %v2495
    %v2736 = vpack.c.b16 %v2504, %v2496
    %v2737 = vpack.c.b16 %v2505, %v2497
    %v2738 = vpack.c.b16 %v2506, %v2498
    %v2739 = vpack.c.b16 %v2507, %v2499
    %v2740 = vpack.c.b16 %v2508, %v2500
    %v2741 = vpack.c.b16 %v2509, %v2501
    %v2742 = vpack.c.b16 %v2510, %v2502
    %v2743 = vpack.c.b16 %v2519, %v2511
    %v2744 = vpack.c.b16 %v2520, %v2512
    %v2745 = vpack.c.b16 %v2521, %v2513
    %v2746 = vpack.c.b16 %v2522, %v2514
    %v2747 = vpack.c.b16 %v2523, %v2515
    %v2748 = vpack.c.b16 %v2524, %v2516
    %v2749 = vpack.c.b16 %v2525, %v2517
    %v2750 = vpack.c.b16 %v2526, %v2518
    %v2751 = vpack.c.b16 %v2535, %v2527
    %v2752 = vpack.c.b16 %v2536, %v2528
    %v2753 = vpack.c.b16 %v2537, %v2529
    %v2754 = vpack.c.b16 %v2538, %v2530
    %v2755 = vpack.c.b16 %v2539, %v2531
    %v2756 = vpack.c.b16 %v2540, %v2532
    %v2757 = vpack.c.b16 %v2541, %v2533
    %v2758 = vpack.c.b16 %v2542, %v2534
    %v2759 = vpack.c.b16 %v2551, %v2543
    %v2760 = vpack.c.b16 %v2552, %v2544
    %v2761 = vpack.c.b16 %v2553, %v2545
    %v2762 = vpack.c.b16 %v2554, %v2546
    %v2763 = vpack.c.b16 %v2555, %v2547
    %v2764 = vpack.c.b16 %v2556, %v2548
    %v2765 = vpack.c.b16 %v2557, %v2549
    %v2766 = vpack.c.b16 %v2558, %v2550
    %v2767 = vpack.c.b16 %v2567, %v2559
    %v2768 = vpack.c.b16 %v2568, %v2560
    %v2769 = vpack.c.b16 %v2569, %v2561
    %v2770 = vpack.c.b16 %v2570, %v2562
    %v2771 = vpack.c.b16 %v2571, %v2563
    %v2772 = vpack.c.b16 %v2572, %v2564
    %v2773 = vpack.c.b16 %v2573, %v2565
    %v2774 = vpack.c.b16 %v2574, %v2566
    %v2775 = vpack.c.b16 %v2583, %v2575
    %v2776 = vpack.c.b16 %v2584, %v2576
    %v2777 = vpack.c.b16 %v2585, %v2577
    %v2778 = vpack.c.b16 %v2586, %v2578
    %v2779 = vpack.c.b16 %v2587, %v2579
    %v2780 = vpack.c.b16 %v2588, %v2580
    %v2781 = vpack.c.b16 %v2589, %v2581
    %v2782 = vpack.c.b16 %v2590, %v2582
    %v2783 = vpack.c.b16 %v2599, %v2591
    %v2784 = vpack.c.b16 %v2600, %v2592
    %v2785 = vpack.c.b16 %v2601, %v2593
    %v2786 = vpack.c.b16 %v2602, %v2594
    %v2787 = vpack.c.b16 %v2603, %v2595
    %v2788 = vpack.c.b16 %v2604, %v2596
    %v2789 = vpack.c.b16 %v2605, %v2597
    %v2790 = vpack.c.b16 %v2606, %v2598
    %v2791 = vpack.c.b16 %v2615, %v2607
    %v2792 = vpack.c.b16 %v2616, %v2608
    %v2793 = vpack.c.b16 %v2617, %v2609
    %v2794 = vpack.c.b16 %v2618, %v2610
    %v2795 = vpack.c.b16 %v2619, %v2611
    %v2796 = vpack.c.b16 %v2620, %v2612
    %v2797 = vpack.c.b16 %v2621, %v2613
    %v2798 = vpack.c.b16 %v2622, %v2614
    %v2799 = vpack.c.b16 %v2631, %v2623
    %v2800 = vpack.c.b16 %v2632, %v2624
    %v2801 = vpack.c.b16 %v2633, %v2625
    %v2802 = vpack.c.b16 %v2634, %v2626
    %v2803 = vpack.c.b16 %v2635, %v2627
    %v2804 = vpack.c.b16 %v2636, %v2628
    %v2805 = vpack.c.b16 %v2637, %v2629
    %v2806 = vpack.c.b16 %v2638, %v2630
    %v2807 = vpack.c.b16 %v2647, %v2639
    %v2808 = vpack.c.b16 %v2648, %v2640
    %v2809 = vpack.c.b16 %v2649, %v2641
    %v2810 = vpack.c.b16 %v2650, %v2642
    %v2811 = vpack.c.b16 %v2651, %v2643
    %v2812 = vpack.c.b16 %v2652, %v2644
    %v2813 = vpack.c.b16 %v2653, %v2645
    %v2814 = vpack.c.b16 %v2654, %v2646
    %v2815 = vpack.c.b16 %v2663, %v2655
    %v2816 = vpack.c.b16 %v2664, %v2656
    %v2817 = vpack.c.b16 %v2665, %v2657
    %v2818 = vpack.c.b16 %v2666, %v2658
    %v2819 = vpack.c.b16 %v2667, %v2659
    %v2820 = vpack.c.b16 %v2668, %v2660
    %v2821 = vpack.c.b16 %v2669, %v2661
    %v2822 = vpack.c.b16 %v2670, %v2662
    %v2823 = vpack.c.b16 %v2679, %v2671
    %v2824 = vpack.c.b16 %v2680, %v2672
    %v2825 = vpack.c.b16 %v2681, %v2673
    %v2826 = vpack.c.b16 %v2682, %v2674
    %v2827 = vpack.c.b16 %v2683, %v2675
    %v2828 = vpack.c.b16 %v2684, %v2676
    %v2829 = vpack.c.b16 %v2685, %v2677
    %v2830 = vpack.c.b16 %v2686, %v2678
    %v2831 = vpack.c.b16 %v2695, %v2687
    %v2832 = vpack.c.b16 %v2696, %v2688
    %v2833 = vpack.c.b16 %v2697, %v2689
    %v2834 = vpack.c.b16 %v2698, %v2690
    %v2835 = vpack.c.b16 %v2699, %v2691
    %v2836 = vpack.c.b16 %v2700, %v2692
    %v2837 = vpack.c.b16 %v2701, %v2693
    %v2838 = vpack.c.b16 %v2702, %v2694
    %v2839 = vpack.c.b16 %v2711, %v2703
    %v2840 = vpack.c.b16 %v2712, %v2704
    %v2841 = vpack.c.b16 %v2713, %v2705
    %v2842 = vpack.c.b16 %v2714, %v2706
    %v2843 = vpack.c.b16 %v2715, %v2707
    %v2844 = vpack.c.b16 %v2716, %v2708
    %v2845 = vpack.c.b16 %v2717, %v2709
    %v2846 = vpack.c.b16 %v2718, %v2710
    %2975 = vmatpush.bf16.msra.mxu0 %v2775
    %2976 = vmatpush.bf16.msra.mxu0 %v2767
    %2977 = vmatpush.bf16.msra.mxu0 %v2759
    %2978 = vmatpush.bf16.msra.mxu0 %v2751
    %2979 = vmatpush.bf16.msra.mxu0 %v2743
    %2980 = vmatpush.bf16.msra.mxu0 %v2735
    %2981 = vmatpush.bf16.msra.mxu0 %v2727
    %2982 = vmatpush.bf16.msra.mxu0 %v2719
    %2983 = vmatmul.bf16.gmra.mxu0 %v2188
    %v2984 = vpop.f32.mrf.mxu0
    %v2985 = vadd.f32 %v2319, %v2984
    %v2986 = vpop.f32.mrf.mxu0
    %v2987 = vadd.f32 %v2319, %v2986
    %2988 = vdwg.mxu0
    %2989 = vmatpush.bf16.msra.mxu0 %v2839
    %2990 = vmatpush.bf16.msra.mxu0 %v2831
    %2991 = vmatpush.bf16.msra.mxu0 %v2823
    %2992 = vmatpush.bf16.msra.mxu0 %v2815
    %2993 = vmatpush.bf16.msra.mxu0 %v2807
    %2994 = vmatpush.bf16.msra.mxu0 %v2799
    %2995 = vmatpush.bf16.msra.mxu0 %v2791
    %2996 = vmatpush.bf16.msra.mxu0 %v2783
    %2997 = vmatmul.bf16.gmra.mxu0 %v2189
    %v2998 = vpop.f32.mrf.mxu0
    %v2999 = vadd.f32 %v2985, %v2998
    %v3000 = vpop.f32.mrf.mxu0
    %v3001 = vadd.f32 %v2987, %v3000
    %3002 = vdwg.mxu0
    %3003 = vmatpush.bf16.msra.mxu0 %v2776
    %3004 = vmatpush.bf16.msra.mxu0 %v2768
    %3005 = vmatpush.bf16.msra.mxu0 %v2760
    %3006 = vmatpush.bf16.msra.mxu0 %v2752
    %3007 = vmatpush.bf16.msra.mxu0 %v2744
    %3008 = vmatpush.bf16.msra.mxu0 %v2736
    %3009 = vmatpush.bf16.msra.mxu0 %v2728
    %3010 = vmatpush.bf16.msra.mxu0 %v2720
    %3011 = vmatmul.bf16.gmra.mxu0 %v2188
    %v3012 = vpop.f32.mrf.mxu0
    %v3013 = vadd.f32 %v2320, %v3012
    %v3014 = vpop.f32.mrf.mxu0
    %v3015 = vadd.f32 %v2320, %v3014
    %3016 = vdwg.mxu0
    %3017 = vmatpush.bf16.msra.mxu0 %v2840
    %3018 = vmatpush.bf16.msra.mxu0 %v2832
    %3019 = vmatpush.bf16.msra.mxu0 %v2824
    %3020 = vmatpush.bf16.msra.mxu0 %v2816
    %3021 = vmatpush.bf16.msra.mxu0 %v2808
    %3022 = vmatpush.bf16.msra.mxu0 %v2800
    %3023 = vmatpush.bf16.msra.mxu0 %v2792
    %3024 = vmatpush.bf16.msra.mxu0 %v2784
    %3025 = vmatmul.bf16.gmra.mxu0 %v2189
    %v3026 = vpop.f32.mrf.mxu0
    %v3027 = vadd.f32 %v3013, %v3026
    %v3028 = vpop.f32.mrf.mxu0
    %v3029 = vadd.f32 %v3015, %v3028
    %3030 = vdwg.mxu0
    %3031 = vmatpush.bf16.msra.mxu0 %v2777
    %3032 = vmatpush.bf16.msra.mxu0 %v2769
    %3033 = vmatpush.bf16.msra.mxu0 %v2761
    %3034 = vmatpush.bf16.msra.mxu0 %v2753
    %3035 = vmatpush.bf16.msra.mxu0 %v2745
    %3036 = vmatpush.bf16.msra.mxu0 %v2737
    %3037 = vmatpush.bf16.msra.mxu0 %v2729
    %3038 = vmatpush.bf16.msra.mxu0 %v2721
    %3039 = vmatmul.bf16.gmra.mxu0 %v2188
    %v3040 = vpop.f32.mrf.mxu0
    %v3041 = vadd.f32 %v2321, %v3040
    %v3042 = vpop.f32.mrf.mxu0
    %v3043 = vadd.f32 %v2321, %v3042
    %3044 = vdwg.mxu0
    %3045 = vmatpush.bf16.msra.mxu0 %v2841
    %3046 = vmatpush.bf16.msra.mxu0 %v2833
    %3047 = vmatpush.bf16.msra.mxu0 %v2825
    %3048 = vmatpush.bf16.msra.mxu0 %v2817
    %3049 = vmatpush.bf16.msra.mxu0 %v2809
    %3050 = vmatpush.bf16.msra.mxu0 %v2801
    %3051 = vmatpush.bf16.msra.mxu0 %v2793
    %3052 = vmatpush.bf16.msra.mxu0 %v2785
    %3053 = vmatmul.bf16.gmra.mxu0 %v2189
    %v3054 = vpop.f32.mrf.mxu0
    %v3055 = vadd.f32 %v3041, %v3054
    %v3056 = vpop.f32.mrf.mxu0
    %v3057 = vadd.f32 %v3043, %v3056
    %3058 = vdwg.mxu0
    %3059 = vmatpush.bf16.msra.mxu0 %v2778
    %3060 = vmatpush.bf16.msra.mxu0 %v2770
    %3061 = vmatpush.bf16.msra.mxu0 %v2762
    %3062 = vmatpush.bf16.msra.mxu0 %v2754
    %3063 = vmatpush.bf16.msra.mxu0 %v2746
    %3064 = vmatpush.bf16.msra.mxu0 %v2738
    %3065 = vmatpush.bf16.msra.mxu0 %v2730
    %3066 = vmatpush.bf16.msra.mxu0 %v2722
    %3067 = vmatmul.bf16.gmra.mxu0 %v2188
    %v3068 = vpop.f32.mrf.mxu0
    %v3069 = vadd.f32 %v2322, %v3068
    %v3070 = vpop.f32.mrf.mxu0
    %v3071 = vadd.f32 %v2322, %v3070
    %3072 = vdwg.mxu0
    %3073 = vmatpush.bf16.msra.mxu0 %v2842
    %3074 = vmatpush.bf16.msra.mxu0 %v2834
    %3075 = vmatpush.bf16.msra.mxu0 %v2826
    %3076 = vmatpush.bf16.msra.mxu0 %v2818
    %3077 = vmatpush.bf16.msra.mxu0 %v2810
    %3078 = vmatpush.bf16.msra.mxu0 %v2802
    %3079 = vmatpush.bf16.msra.mxu0 %v2794
    %3080 = vmatpush.bf16.msra.mxu0 %v2786
    %3081 = vmatmul.bf16.gmra.mxu0 %v2189
    %v3082 = vpop.f32.mrf.mxu0
    %v3083 = vadd.f32 %v3069, %v3082
    %v3084 = vpop.f32.mrf.mxu0
    %v3085 = vadd.f32 %v3071, %v3084
    %3086 = vdwg.mxu0
    %3087 = vmatpush.bf16.msra.mxu0 %v2779
    %3088 = vmatpush.bf16.msra.mxu0 %v2771
    %3089 = vmatpush.bf16.msra.mxu0 %v2763
    %3090 = vmatpush.bf16.msra.mxu0 %v2755
    %3091 = vmatpush.bf16.msra.mxu0 %v2747
    %3092 = vmatpush.bf16.msra.mxu0 %v2739
    %3093 = vmatpush.bf16.msra.mxu0 %v2731
    %3094 = vmatpush.bf16.msra.mxu0 %v2723
    %3095 = vmatmul.bf16.gmra.mxu0 %v2188
    %v3096 = vpop.f32.mrf.mxu0
    %v3097 = vadd.f32 %v2323, %v3096
    %v3098 = vpop.f32.mrf.mxu0
    %v3099 = vadd.f32 %v2323, %v3098
    %3100 = vdwg.mxu0
    %3101 = vmatpush.bf16.msra.mxu0 %v2843
    %3102 = vmatpush.bf16.msra.mxu0 %v2835
    %3103 = vmatpush.bf16.msra.mxu0 %v2827
    %3104 = vmatpush.bf16.msra.mxu0 %v2819
    %3105 = vmatpush.bf16.msra.mxu0 %v2811
    %3106 = vmatpush.bf16.msra.mxu0 %v2803
    %3107 = vmatpush.bf16.msra.mxu0 %v2795
    %3108 = vmatpush.bf16.msra.mxu0 %v2787
    %3109 = vmatmul.bf16.gmra.mxu0 %v2189
    %v3110 = vpop.f32.mrf.mxu0
    %v3111 = vadd.f32 %v3097, %v3110
    %v3112 = vpop.f32.mrf.mxu0
    %v3113 = vadd.f32 %v3099, %v3112
    %3114 = vdwg.mxu0
    %3115 = vmatpush.bf16.msra.mxu0 %v2780
    %3116 = vmatpush.bf16.msra.mxu0 %v2772
    %3117 = vmatpush.bf16.msra.mxu0 %v2764
    %3118 = vmatpush.bf16.msra.mxu0 %v2756
    %3119 = vmatpush.bf16.msra.mxu0 %v2748
    %3120 = vmatpush.bf16.msra.mxu0 %v2740
    %3121 = vmatpush.bf16.msra.mxu0 %v2732
    %3122 = vmatpush.bf16.msra.mxu0 %v2724
    %3123 = vmatmul.bf16.gmra.mxu0 %v2188
    %v3124 = vpop.f32.mrf.mxu0
    %v3125 = vadd.f32 %v2324, %v3124
    %v3126 = vpop.f32.mrf.mxu0
    %v3127 = vadd.f32 %v2324, %v3126
    %3128 = vdwg.mxu0
    %3129 = vmatpush.bf16.msra.mxu0 %v2844
    %3130 = vmatpush.bf16.msra.mxu0 %v2836
    %3131 = vmatpush.bf16.msra.mxu0 %v2828
    %3132 = vmatpush.bf16.msra.mxu0 %v2820
    %3133 = vmatpush.bf16.msra.mxu0 %v2812
    %3134 = vmatpush.bf16.msra.mxu0 %v2804
    %3135 = vmatpush.bf16.msra.mxu0 %v2796
    %3136 = vmatpush.bf16.msra.mxu0 %v2788
    %3137 = vmatmul.bf16.gmra.mxu0 %v2189
    %v3138 = vpop.f32.mrf.mxu0
    %v3139 = vadd.f32 %v3125, %v3138
    %v3140 = vpop.f32.mrf.mxu0
    %v3141 = vadd.f32 %v3127, %v3140
    %3142 = vdwg.mxu0
    %3143 = vmatpush.bf16.msra.mxu0 %v2781
    %3144 = vmatpush.bf16.msra.mxu0 %v2773
    %3145 = vmatpush.bf16.msra.mxu0 %v2765
    %3146 = vmatpush.bf16.msra.mxu0 %v2757
    %3147 = vmatpush.bf16.msra.mxu0 %v2749
    %3148 = vmatpush.bf16.msra.mxu0 %v2741
    %3149 = vmatpush.bf16.msra.mxu0 %v2733
    %3150 = vmatpush.bf16.msra.mxu0 %v2725
    %3151 = vmatmul.bf16.gmra.mxu0 %v2188
    %v3152 = vpop.f32.mrf.mxu0
    %v3153 = vadd.f32 %v2325, %v3152
    %v3154 = vpop.f32.mrf.mxu0
    %v3155 = vadd.f32 %v2325, %v3154
    %3156 = vdwg.mxu0
    %3157 = vmatpush.bf16.msra.mxu0 %v2845
    %3158 = vmatpush.bf16.msra.mxu0 %v2837
    %3159 = vmatpush.bf16.msra.mxu0 %v2829
    %3160 = vmatpush.bf16.msra.mxu0 %v2821
    %3161 = vmatpush.bf16.msra.mxu0 %v2813
    %3162 = vmatpush.bf16.msra.mxu0 %v2805
    %3163 = vmatpush.bf16.msra.mxu0 %v2797
    %3164 = vmatpush.bf16.msra.mxu0 %v2789
    %3165 = vmatmul.bf16.gmra.mxu0 %v2189
    %v3166 = vpop.f32.mrf.mxu0
    %v3167 = vadd.f32 %v3153, %v3166
    %v3168 = vpop.f32.mrf.mxu0
    %v3169 = vadd.f32 %v3155, %v3168
    %3170 = vdwg.mxu0
    %3171 = vmatpush.bf16.msra.mxu0 %v2782
    %3172 = vmatpush.bf16.msra.mxu0 %v2774
    %3173 = vmatpush.bf16.msra.mxu0 %v2766
    %3174 = vmatpush.bf16.msra.mxu0 %v2758
    %3175 = vmatpush.bf16.msra.mxu0 %v2750
    %3176 = vmatpush.bf16.msra.mxu0 %v2742
    %3177 = vmatpush.bf16.msra.mxu0 %v2734
    %3178 = vmatpush.bf16.msra.mxu0 %v2726
    %3179 = vmatmul.bf16.gmra.mxu0 %v2188
    %v3180 = vpop.f32.mrf.mxu0
    %v3181 = vadd.f32 %v2326, %v3180
    %v3182 = vpop.f32.mrf.mxu0
    %v3183 = vadd.f32 %v2326, %v3182
    %3184 = vdwg.mxu0
    %3185 = vmatpush.bf16.msra.mxu0 %v2846
    %3186 = vmatpush.bf16.msra.mxu0 %v2838
    %3187 = vmatpush.bf16.msra.mxu0 %v2830
    %3188 = vmatpush.bf16.msra.mxu0 %v2822
    %3189 = vmatpush.bf16.msra.mxu0 %v2814
    %3190 = vmatpush.bf16.msra.mxu0 %v2806
    %3191 = vmatpush.bf16.msra.mxu0 %v2798
    %3192 = vmatpush.bf16.msra.mxu0 %v2790
    %3193 = vmatmul.bf16.gmra.mxu0 %v2189
    %v3194 = vpop.f32.mrf.mxu0
    %v3195 = vadd.f32 %v3181, %v3194
    %v3196 = vpop.f32.mrf.mxu0
    %v3197 = vadd.f32 %v3183, %v3196
    %3198 = vdwg.mxu0
    %v3199 = vtanh.pop %v2999
    %v3200 = vtanh.pop %v3027
    %v3201 = vtanh.pop %v3055
    %v3202 = vtanh.pop %v3083
    %v3203 = vtanh.pop %v3111
    %v3204 = vtanh.pop %v3139
    %v3205 = vtanh.pop %v3167
    %v3206 = vtanh.pop %v3195
    %v3207 = vtanh.pop %v3001
    %v3208 = vtanh.pop %v3029
    %v3209 = vtanh.pop %v3057
    %v3210 = vtanh.pop %v3085
    %v3211 = vtanh.pop %v3113
    %v3212 = vtanh.pop %v3141
    %v3213 = vtanh.pop %v3169
    %v3214 = vtanh.pop %v3197
    %v3215 = vpack.c.bf16 %v3207, %v3199
    %v3216 = vpack.c.bf16 %v3208, %v3200
    %v3217 = vpack.c.bf16 %v3209, %v3201
    %v3218 = vpack.c.bf16 %v3210, %v3202
    %v3219 = vpack.c.bf16 %v3211, %v3203
    %v3220 = vpack.c.bf16 %v3212, %v3204
    %v3221 = vpack.c.bf16 %v3213, %v3205
    %v3222 = vpack.c.bf16 %v3214, %v3206
    %3223 = vmatpush.bf16.msra.mxu0 %v1714
    %3224 = vmatpush.bf16.msra.mxu0 %v1712
    %3225 = vmatpush.bf16.msra.mxu0 %v1710
    %3226 = vmatpush.bf16.msra.mxu0 %v1708
    %3227 = vmatpush.bf16.msra.mxu0 %v1706
    %3228 = vmatpush.bf16.msra.mxu0 %v1704
    %3229 = vmatpush.bf16.msra.mxu0 %v1702
    %3230 = vmatpush.bf16.msra.mxu0 %v1700
    %3231 = vmatmul.bf16.gmra.mxu0 %v3215
    %v3232 = vpop.f32.mrf.mxu0
    %v3233 = vadd.f32 0.0, %v3232
    %v3234 = vpop.f32.mrf.mxu0
    %v3235 = vadd.f32 0.0, %v3234
    %3236 = vdwg.mxu0
    %3237 = vmatpush.bf16.msra.mxu0 %v1730
    %3238 = vmatpush.bf16.msra.mxu0 %v1728
    %3239 = vmatpush.bf16.msra.mxu0 %v1726
    %3240 = vmatpush.bf16.msra.mxu0 %v1724
    %3241 = vmatpush.bf16.msra.mxu0 %v1722
    %3242 = vmatpush.bf16.msra.mxu0 %v1720
    %3243 = vmatpush.bf16.msra.mxu0 %v1718
    %3244 = vmatpush.bf16.msra.mxu0 %v1716
    %3245 = vmatmul.bf16.gmra.mxu0 %v3216
    %v3246 = vpop.f32.mrf.mxu0
    %v3247 = vadd.f32 %v3233, %v3246
    %v3248 = vpop.f32.mrf.mxu0
    %v3249 = vadd.f32 %v3235, %v3248
    %3250 = vdwg.mxu0
    %3251 = vmatpush.bf16.msra.mxu0 %v1746
    %3252 = vmatpush.bf16.msra.mxu0 %v1744
    %3253 = vmatpush.bf16.msra.mxu0 %v1742
    %3254 = vmatpush.bf16.msra.mxu0 %v1740
    %3255 = vmatpush.bf16.msra.mxu0 %v1738
    %3256 = vmatpush.bf16.msra.mxu0 %v1736
    %3257 = vmatpush.bf16.msra.mxu0 %v1734
    %3258 = vmatpush.bf16.msra.mxu0 %v1732
    %3259 = vmatmul.bf16.gmra.mxu0 %v3217
    %v3260 = vpop.f32.mrf.mxu0
    %v3261 = vadd.f32 %v3247, %v3260
    %v3262 = vpop.f32.mrf.mxu0
    %v3263 = vadd.f32 %v3249, %v3262
    %3264 = vdwg.mxu0
    %3265 = vmatpush.bf16.msra.mxu0 %v1762
    %3266 = vmatpush.bf16.msra.mxu0 %v1760
    %3267 = vmatpush.bf16.msra.mxu0 %v1758
    %3268 = vmatpush.bf16.msra.mxu0 %v1756
    %3269 = vmatpush.bf16.msra.mxu0 %v1754
    %3270 = vmatpush.bf16.msra.mxu0 %v1752
    %3271 = vmatpush.bf16.msra.mxu0 %v1750
    %3272 = vmatpush.bf16.msra.mxu0 %v1748
    %3273 = vmatmul.bf16.gmra.mxu0 %v3218
    %v3274 = vpop.f32.mrf.mxu0
    %v3275 = vadd.f32 %v3261, %v3274
    %v3276 = vpop.f32.mrf.mxu0
    %v3277 = vadd.f32 %v3263, %v3276
    %3278 = vdwg.mxu0
    %3279 = vmatpush.bf16.msra.mxu0 %v1778
    %3280 = vmatpush.bf16.msra.mxu0 %v1776
    %3281 = vmatpush.bf16.msra.mxu0 %v1774
    %3282 = vmatpush.bf16.msra.mxu0 %v1772
    %3283 = vmatpush.bf16.msra.mxu0 %v1770
    %3284 = vmatpush.bf16.msra.mxu0 %v1768
    %3285 = vmatpush.bf16.msra.mxu0 %v1766
    %3286 = vmatpush.bf16.msra.mxu0 %v1764
    %3287 = vmatmul.bf16.gmra.mxu0 %v3219
    %v3288 = vpop.f32.mrf.mxu0
    %v3289 = vadd.f32 %v3275, %v3288
    %v3290 = vpop.f32.mrf.mxu0
    %v3291 = vadd.f32 %v3277, %v3290
    %3292 = vdwg.mxu0
    %3293 = vmatpush.bf16.msra.mxu0 %v1794
    %3294 = vmatpush.bf16.msra.mxu0 %v1792
    %3295 = vmatpush.bf16.msra.mxu0 %v1790
    %3296 = vmatpush.bf16.msra.mxu0 %v1788
    %3297 = vmatpush.bf16.msra.mxu0 %v1786
    %3298 = vmatpush.bf16.msra.mxu0 %v1784
    %3299 = vmatpush.bf16.msra.mxu0 %v1782
    %3300 = vmatpush.bf16.msra.mxu0 %v1780
    %3301 = vmatmul.bf16.gmra.mxu0 %v3220
    %v3302 = vpop.f32.mrf.mxu0
    %v3303 = vadd.f32 %v3289, %v3302
    %v3304 = vpop.f32.mrf.mxu0
    %v3305 = vadd.f32 %v3291, %v3304
    %3306 = vdwg.mxu0
    %3307 = vmatpush.bf16.msra.mxu0 %v1810
    %3308 = vmatpush.bf16.msra.mxu0 %v1808
    %3309 = vmatpush.bf16.msra.mxu0 %v1806
    %3310 = vmatpush.bf16.msra.mxu0 %v1804
    %3311 = vmatpush.bf16.msra.mxu0 %v1802
    %3312 = vmatpush.bf16.msra.mxu0 %v1800
    %3313 = vmatpush.bf16.msra.mxu0 %v1798
    %3314 = vmatpush.bf16.msra.mxu0 %v1796
    %3315 = vmatmul.bf16.gmra.mxu0 %v3221
    %v3316 = vpop.f32.mrf.mxu0
    %v3317 = vadd.f32 %v3303, %v3316
    %v3318 = vpop.f32.mrf.mxu0
    %v3319 = vadd.f32 %v3305, %v3318
    %3320 = vdwg.mxu0
    %3321 = vmatpush.bf16.msra.mxu0 %v1826
    %3322 = vmatpush.bf16.msra.mxu0 %v1824
    %3323 = vmatpush.bf16.msra.mxu0 %v1822
    %3324 = vmatpush.bf16.msra.mxu0 %v1820
    %3325 = vmatpush.bf16.msra.mxu0 %v1818
    %3326 = vmatpush.bf16.msra.mxu0 %v1816
    %3327 = vmatpush.bf16.msra.mxu0 %v1814
    %3328 = vmatpush.bf16.msra.mxu0 %v1812
    %3329 = vmatmul.bf16.gmra.mxu0 %v3222
    %v3330 = vpop.f32.mrf.mxu0
    %v3331 = vadd.f32 %v3317, %v3330
    %v3332 = vpop.f32.mrf.mxu0
    %v3333 = vadd.f32 %v3319, %v3332
    %3334 = vdwg.mxu0
    %3335 = vmatpush.bf16.msra.mxu0 %v1715
    %3336 = vmatpush.bf16.msra.mxu0 %v1713
    %3337 = vmatpush.bf16.msra.mxu0 %v1711
    %3338 = vmatpush.bf16.msra.mxu0 %v1709
    %3339 = vmatpush.bf16.msra.mxu0 %v1707
    %3340 = vmatpush.bf16.msra.mxu0 %v1705
    %3341 = vmatpush.bf16.msra.mxu0 %v1703
    %3342 = vmatpush.bf16.msra.mxu0 %v1701
    %3343 = vmatmul.bf16.gmra.mxu0 %v3215
    %v3344 = vpop.f32.mrf.mxu0
    %v3345 = vadd.f32 0.0, %v3344
    %v3346 = vpop.f32.mrf.mxu0
    %v3347 = vadd.f32 0.0, %v3346
    %3348 = vdwg.mxu0
    %3349 = vmatpush.bf16.msra.mxu0 %v1731
    %3350 = vmatpush.bf16.msra.mxu0 %v1729
    %3351 = vmatpush.bf16.msra.mxu0 %v1727
    %3352 = vmatpush.bf16.msra.mxu0 %v1725
    %3353 = vmatpush.bf16.msra.mxu0 %v1723
    %3354 = vmatpush.bf16.msra.mxu0 %v1721
    %3355 = vmatpush.bf16.msra.mxu0 %v1719
    %3356 = vmatpush.bf16.msra.mxu0 %v1717
    %3357 = vmatmul.bf16.gmra.mxu0 %v3216
    %v3358 = vpop.f32.mrf.mxu0
    %v3359 = vadd.f32 %v3345, %v3358
    %v3360 = vpop.f32.mrf.mxu0
    %v3361 = vadd.f32 %v3347, %v3360
    %3362 = vdwg.mxu0
    %3363 = vmatpush.bf16.msra.mxu0 %v1747
    %3364 = vmatpush.bf16.msra.mxu0 %v1745
    %3365 = vmatpush.bf16.msra.mxu0 %v1743
    %3366 = vmatpush.bf16.msra.mxu0 %v1741
    %3367 = vmatpush.bf16.msra.mxu0 %v1739
    %3368 = vmatpush.bf16.msra.mxu0 %v1737
    %3369 = vmatpush.bf16.msra.mxu0 %v1735
    %3370 = vmatpush.bf16.msra.mxu0 %v1733
    %3371 = vmatmul.bf16.gmra.mxu0 %v3217
    %v3372 = vpop.f32.mrf.mxu0
    %v3373 = vadd.f32 %v3359, %v3372
    %v3374 = vpop.f32.mrf.mxu0
    %v3375 = vadd.f32 %v3361, %v3374
    %3376 = vdwg.mxu0
    %3377 = vmatpush.bf16.msra.mxu0 %v1763
    %3378 = vmatpush.bf16.msra.mxu0 %v1761
    %3379 = vmatpush.bf16.msra.mxu0 %v1759
    %3380 = vmatpush.bf16.msra.mxu0 %v1757
    %3381 = vmatpush.bf16.msra.mxu0 %v1755
    %3382 = vmatpush.bf16.msra.mxu0 %v1753
    %3383 = vmatpush.bf16.msra.mxu0 %v1751
    %3384 = vmatpush.bf16.msra.mxu0 %v1749
    %3385 = vmatmul.bf16.gmra.mxu0 %v3218
    %v3386 = vpop.f32.mrf.mxu0
    %v3387 = vadd.f32 %v3373, %v3386
    %v3388 = vpop.f32.mrf.mxu0
    %v3389 = vadd.f32 %v3375, %v3388
    %3390 = vdwg.mxu0
    %3391 = vmatpush.bf16.msra.mxu0 %v1779
    %3392 = vmatpush.bf16.msra.mxu0 %v1777
    %3393 = vmatpush.bf16.msra.mxu0 %v1775
    %3394 = vmatpush.bf16.msra.mxu0 %v1773
    %3395 = vmatpush.bf16.msra.mxu0 %v1771
    %3396 = vmatpush.bf16.msra.mxu0 %v1769
    %3397 = vmatpush.bf16.msra.mxu0 %v1767
    %3398 = vmatpush.bf16.msra.mxu0 %v1765
    %3399 = vmatmul.bf16.gmra.mxu0 %v3219
    %v3400 = vpop.f32.mrf.mxu0
    %v3401 = vadd.f32 %v3387, %v3400
    %v3402 = vpop.f32.mrf.mxu0
    %v3403 = vadd.f32 %v3389, %v3402
    %3404 = vdwg.mxu0
    %3405 = vmatpush.bf16.msra.mxu0 %v1795
    %3406 = vmatpush.bf16.msra.mxu0 %v1793
    %3407 = vmatpush.bf16.msra.mxu0 %v1791
    %3408 = vmatpush.bf16.msra.mxu0 %v1789
    %3409 = vmatpush.bf16.msra.mxu0 %v1787
    %3410 = vmatpush.bf16.msra.mxu0 %v1785
    %3411 = vmatpush.bf16.msra.mxu0 %v1783
    %3412 = vmatpush.bf16.msra.mxu0 %v1781
    %3413 = vmatmul.bf16.gmra.mxu0 %v3220
    %v3414 = vpop.f32.mrf.mxu0
    %v3415 = vadd.f32 %v3401, %v3414
    %v3416 = vpop.f32.mrf.mxu0
    %v3417 = vadd.f32 %v3403, %v3416
    %3418 = vdwg.mxu0
    %3419 = vmatpush.bf16.msra.mxu0 %v1811
    %3420 = vmatpush.bf16.msra.mxu0 %v1809
    %3421 = vmatpush.bf16.msra.mxu0 %v1807
    %3422 = vmatpush.bf16.msra.mxu0 %v1805
    %3423 = vmatpush.bf16.msra.mxu0 %v1803
    %3424 = vmatpush.bf16.msra.mxu0 %v1801
    %3425 = vmatpush.bf16.msra.mxu0 %v1799
    %3426 = vmatpush.bf16.msra.mxu0 %v1797
    %3427 = vmatmul.bf16.gmra.mxu0 %v3221
    %v3428 = vpop.f32.mrf.mxu0
    %v3429 = vadd.f32 %v3415, %v3428
    %v3430 = vpop.f32.mrf.mxu0
    %v3431 = vadd.f32 %v3417, %v3430
    %3432 = vdwg.mxu0
    %3433 = vmatpush.bf16.msra.mxu0 %v1827
    %3434 = vmatpush.bf16.msra.mxu0 %v1825
    %3435 = vmatpush.bf16.msra.mxu0 %v1823
    %3436 = vmatpush.bf16.msra.mxu0 %v1821
    %3437 = vmatpush.bf16.msra.mxu0 %v1819
    %3438 = vmatpush.bf16.msra.mxu0 %v1817
    %3439 = vmatpush.bf16.msra.mxu0 %v1815
    %3440 = vmatpush.bf16.msra.mxu0 %v1813
    %3441 = vmatmul.bf16.gmra.mxu0 %v3222
    %v3442 = vpop.f32.mrf.mxu0
    %v3443 = vadd.f32 %v3429, %v3442
    %v3444 = vpop.f32.mrf.mxu0
    %v3445 = vadd.f32 %v3431, %v3444
    %3446 = vdwg.mxu0
    %v3447 = vadd.f32 %v1056, %v3331
    %v3448 = vadd.f32 %v1168, %v3443
    %v3449 = vadd.f32 %v1058, %v3333
    %v3450 = vadd.f32 %v1170, %v3445
    %v3451 = vadd.f32 %v2184, %v3447
    %v3452 = vadd.f32 %v2185, %v3448
    %v3453 = vadd.f32 %v2186, %v3449
    %v3454 = vadd.f32 %v2187, %v3450
    %v3455 = vpack.c.bf16 %v3453, %v3451
    %v3456 = vpack.c.bf16 %v3454, %v3452
    %3457 = vmatpush.bf16.msra.mxu0 %v2775
    %3458 = vmatpush.bf16.msra.mxu0 %v2767
    %3459 = vmatpush.bf16.msra.mxu0 %v2759
    %3460 = vmatpush.bf16.msra.mxu0 %v2751
    %3461 = vmatpush.bf16.msra.mxu0 %v2743
    %3462 = vmatpush.bf16.msra.mxu0 %v2735
    %3463 = vmatpush.bf16.msra.mxu0 %v2727
    %3464 = vmatpush.bf16.msra.mxu0 %v2719
    %3465 = vmatmul.bf16.gmra.mxu0 %v3455
    %v3466 = vpop.f32.mrf.mxu0
    %v3467 = vadd.f32 %v2319, %v3466
    %v3468 = vpop.f32.mrf.mxu0
    %v3469 = vadd.f32 %v2319, %v3468
    %3470 = vdwg.mxu0
    %3471 = vmatpush.bf16.msra.mxu0 %v2839
    %3472 = vmatpush.bf16.msra.mxu0 %v2831
    %3473 = vmatpush.bf16.msra.mxu0 %v2823
    %3474 = vmatpush.bf16.msra.mxu0 %v2815
    %3475 = vmatpush.bf16.msra.mxu0 %v2807
    %3476 = vmatpush.bf16.msra.mxu0 %v2799
    %3477 = vmatpush.bf16.msra.mxu0 %v2791
    %3478 = vmatpush.bf16.msra.mxu0 %v2783
    %3479 = vmatmul.bf16.gmra.mxu0 %v3456
    %v3480 = vpop.f32.mrf.mxu0
    %v3481 = vadd.f32 %v3467, %v3480
    %v3482 = vpop.f32.mrf.mxu0
    %v3483 = vadd.f32 %v3469, %v3482
    %3484 = vdwg.mxu0
    %3485 = vmatpush.bf16.msra.mxu0 %v2776
    %3486 = vmatpush.bf16.msra.mxu0 %v2768
    %3487 = vmatpush.bf16.msra.mxu0 %v2760
    %3488 = vmatpush.bf16.msra.mxu0 %v2752
    %3489 = vmatpush.bf16.msra.mxu0 %v2744
    %3490 = vmatpush.bf16.msra.mxu0 %v2736
    %3491 = vmatpush.bf16.msra.mxu0 %v2728
    %3492 = vmatpush.bf16.msra.mxu0 %v2720
    %3493 = vmatmul.bf16.gmra.mxu0 %v3455
    %v3494 = vpop.f32.mrf.mxu0
    %v3495 = vadd.f32 %v2320, %v3494
    %v3496 = vpop.f32.mrf.mxu0
    %v3497 = vadd.f32 %v2320, %v3496
    %3498 = vdwg.mxu0
    %3499 = vmatpush.bf16.msra.mxu0 %v2840
    %3500 = vmatpush.bf16.msra.mxu0 %v2832
    %3501 = vmatpush.bf16.msra.mxu0 %v2824
    %3502 = vmatpush.bf16.msra.mxu0 %v2816
    %3503 = vmatpush.bf16.msra.mxu0 %v2808
    %3504 = vmatpush.bf16.msra.mxu0 %v2800
    %3505 = vmatpush.bf16.msra.mxu0 %v2792
    %3506 = vmatpush.bf16.msra.mxu0 %v2784
    %3507 = vmatmul.bf16.gmra.mxu0 %v3456
    %v3508 = vpop.f32.mrf.mxu0
    %v3509 = vadd.f32 %v3495, %v3508
    %v3510 = vpop.f32.mrf.mxu0
    %v3511 = vadd.f32 %v3497, %v3510
    %3512 = vdwg.mxu0
    %3513 = vmatpush.bf16.msra.mxu0 %v2777
    %3514 = vmatpush.bf16.msra.mxu0 %v2769
    %3515 = vmatpush.bf16.msra.mxu0 %v2761
    %3516 = vmatpush.bf16.msra.mxu0 %v2753
    %3517 = vmatpush.bf16.msra.mxu0 %v2745
    %3518 = vmatpush.bf16.msra.mxu0 %v2737
    %3519 = vmatpush.bf16.msra.mxu0 %v2729
    %3520 = vmatpush.bf16.msra.mxu0 %v2721
    %3521 = vmatmul.bf16.gmra.mxu0 %v3455
    %v3522 = vpop.f32.mrf.mxu0
    %v3523 = vadd.f32 %v2321, %v3522
    %v3524 = vpop.f32.mrf.mxu0
    %v3525 = vadd.f32 %v2321, %v3524
    %3526 = vdwg.mxu0
    %3527 = vmatpush.bf16.msra.mxu0 %v2841
    %3528 = vmatpush.bf16.msra.mxu0 %v2833
    %3529 = vmatpush.bf16.msra.mxu0 %v2825
    %3530 = vmatpush.bf16.msra.mxu0 %v2817
    %3531 = vmatpush.bf16.msra.mxu0 %v2809
    %3532 = vmatpush.bf16.msra.mxu0 %v2801
    %3533 = vmatpush.bf16.msra.mxu0 %v2793
    %3534 = vmatpush.bf16.msra.mxu0 %v2785
    %3535 = vmatmul.bf16.gmra.mxu0 %v3456
    %v3536 = vpop.f32.mrf.mxu0
    %v3537 = vadd.f32 %v3523, %v3536
    %v3538 = vpop.f32.mrf.mxu0
    %v3539 = vadd.f32 %v3525, %v3538
    %3540 = vdwg.mxu0
    %3541 = vmatpush.bf16.msra.mxu0 %v2778
    %3542 = vmatpush.bf16.msra.mxu0 %v2770
    %3543 = vmatpush.bf16.msra.mxu0 %v2762
    %3544 = vmatpush.bf16.msra.mxu0 %v2754
    %3545 = vmatpush.bf16.msra.mxu0 %v2746
    %3546 = vmatpush.bf16.msra.mxu0 %v2738
    %3547 = vmatpush.bf16.msra.mxu0 %v2730
    %3548 = vmatpush.bf16.msra.mxu0 %v2722
    %3549 = vmatmul.bf16.gmra.mxu0 %v3455
    %v3550 = vpop.f32.mrf.mxu0
    %v3551 = vadd.f32 %v2322, %v3550
    %v3552 = vpop.f32.mrf.mxu0
    %v3553 = vadd.f32 %v2322, %v3552
    %3554 = vdwg.mxu0
    %3555 = vmatpush.bf16.msra.mxu0 %v2842
    %3556 = vmatpush.bf16.msra.mxu0 %v2834
    %3557 = vmatpush.bf16.msra.mxu0 %v2826
    %3558 = vmatpush.bf16.msra.mxu0 %v2818
    %3559 = vmatpush.bf16.msra.mxu0 %v2810
    %3560 = vmatpush.bf16.msra.mxu0 %v2802
    %3561 = vmatpush.bf16.msra.mxu0 %v2794
    %3562 = vmatpush.bf16.msra.mxu0 %v2786
    %3563 = vmatmul.bf16.gmra.mxu0 %v3456
    %v3564 = vpop.f32.mrf.mxu0
    %v3565 = vadd.f32 %v3551, %v3564
    %v3566 = vpop.f32.mrf.mxu0
    %v3567 = vadd.f32 %v3553, %v3566
    %3568 = vdwg.mxu0
    %3569 = vmatpush.bf16.msra.mxu0 %v2779
    %3570 = vmatpush.bf16.msra.mxu0 %v2771
    %3571 = vmatpush.bf16.msra.mxu0 %v2763
    %3572 = vmatpush.bf16.msra.mxu0 %v2755
    %3573 = vmatpush.bf16.msra.mxu0 %v2747
    %3574 = vmatpush.bf16.msra.mxu0 %v2739
    %3575 = vmatpush.bf16.msra.mxu0 %v2731
    %3576 = vmatpush.bf16.msra.mxu0 %v2723
    %3577 = vmatmul.bf16.gmra.mxu0 %v3455
    %v3578 = vpop.f32.mrf.mxu0
    %v3579 = vadd.f32 %v2323, %v3578
    %v3580 = vpop.f32.mrf.mxu0
    %v3581 = vadd.f32 %v2323, %v3580
    %3582 = vdwg.mxu0
    %3583 = vmatpush.bf16.msra.mxu0 %v2843
    %3584 = vmatpush.bf16.msra.mxu0 %v2835
    %3585 = vmatpush.bf16.msra.mxu0 %v2827
    %3586 = vmatpush.bf16.msra.mxu0 %v2819
    %3587 = vmatpush.bf16.msra.mxu0 %v2811
    %3588 = vmatpush.bf16.msra.mxu0 %v2803
    %3589 = vmatpush.bf16.msra.mxu0 %v2795
    %3590 = vmatpush.bf16.msra.mxu0 %v2787
    %3591 = vmatmul.bf16.gmra.mxu0 %v3456
    %v3592 = vpop.f32.mrf.mxu0
    %v3593 = vadd.f32 %v3579, %v3592
    %v3594 = vpop.f32.mrf.mxu0
    %v3595 = vadd.f32 %v3581, %v3594
    %3596 = vdwg.mxu0
    %3597 = vmatpush.bf16.msra.mxu0 %v2780
    %3598 = vmatpush.bf16.msra.mxu0 %v2772
    %3599 = vmatpush.bf16.msra.mxu0 %v2764
    %3600 = vmatpush.bf16.msra.mxu0 %v2756
    %3601 = vmatpush.bf16.msra.mxu0 %v2748
    %3602 = vmatpush.bf16.msra.mxu0 %v2740
    %3603 = vmatpush.bf16.msra.mxu0 %v2732
    %3604 = vmatpush.bf16.msra.mxu0 %v2724
    %3605 = vmatmul.bf16.gmra.mxu0 %v3455
    %v3606 = vpop.f32.mrf.mxu0
    %v3607 = vadd.f32 %v2324, %v3606
    %v3608 = vpop.f32.mrf.mxu0
    %v3609 = vadd.f32 %v2324, %v3608
    %3610 = vdwg.mxu0
    %3611 = vmatpush.bf16.msra.mxu0 %v2844
    %3612 = vmatpush.bf16.msra.mxu0 %v2836
    %3613 = vmatpush.bf16.msra.mxu0 %v2828
    %3614 = vmatpush.bf16.msra.mxu0 %v2820
    %3615 = vmatpush.bf16.msra.mxu0 %v2812
    %3616 = vmatpush.bf16.msra.mxu0 %v2804
    %3617 = vmatpush.bf16.msra.mxu0 %v2796
    %3618 = vmatpush.bf16.msra.mxu0 %v2788
    %3619 = vmatmul.bf16.gmra.mxu0 %v3456
    %v3620 = vpop.f32.mrf.mxu0
    %v3621 = vadd.f32 %v3607, %v3620
    %v3622 = vpop.f32.mrf.mxu0
    %v3623 = vadd.f32 %v3609, %v3622
    %3624 = vdwg.mxu0
    %3625 = vmatpush.bf16.msra.mxu0 %v2781
    %3626 = vmatpush.bf16.msra.mxu0 %v2773
    %3627 = vmatpush.bf16.msra.mxu0 %v2765
    %3628 = vmatpush.bf16.msra.mxu0 %v2757
    %3629 = vmatpush.bf16.msra.mxu0 %v2749
    %3630 = vmatpush.bf16.msra.mxu0 %v2741
    %3631 = vmatpush.bf16.msra.mxu0 %v2733
    %3632 = vmatpush.bf16.msra.mxu0 %v2725
    %3633 = vmatmul.bf16.gmra.mxu0 %v3455
    %v3634 = vpop.f32.mrf.mxu0
    %v3635 = vadd.f32 %v2325, %v3634
    %v3636 = vpop.f32.mrf.mxu0
    %v3637 = vadd.f32 %v2325, %v3636
    %3638 = vdwg.mxu0
    %3639 = vmatpush.bf16.msra.mxu0 %v2845
    %3640 = vmatpush.bf16.msra.mxu0 %v2837
    %3641 = vmatpush.bf16.msra.mxu0 %v2829
    %3642 = vmatpush.bf16.msra.mxu0 %v2821
    %3643 = vmatpush.bf16.msra.mxu0 %v2813
    %3644 = vmatpush.bf16.msra.mxu0 %v2805
    %3645 = vmatpush.bf16.msra.mxu0 %v2797
    %3646 = vmatpush.bf16.msra.mxu0 %v2789
    %3647 = vmatmul.bf16.gmra.mxu0 %v3456
    %v3648 = vpop.f32.mrf.mxu0
    %v3649 = vadd.f32 %v3635, %v3648
    %v3650 = vpop.f32.mrf.mxu0
    %v3651 = vadd.f32 %v3637, %v3650
    %3652 = vdwg.mxu0
    %3653 = vmatpush.bf16.msra.mxu0 %v2782
    %3654 = vmatpush.bf16.msra.mxu0 %v2774
    %3655 = vmatpush.bf16.msra.mxu0 %v2766
    %3656 = vmatpush.bf16.msra.mxu0 %v2758
    %3657 = vmatpush.bf16.msra.mxu0 %v2750
    %3658 = vmatpush.bf16.msra.mxu0 %v2742
    %3659 = vmatpush.bf16.msra.mxu0 %v2734
    %3660 = vmatpush.bf16.msra.mxu0 %v2726
    %3661 = vmatmul.bf16.gmra.mxu0 %v3455
    %v3662 = vpop.f32.mrf.mxu0
    %v3663 = vadd.f32 %v2326, %v3662
    %v3664 = vpop.f32.mrf.mxu0
    %v3665 = vadd.f32 %v2326, %v3664
    %3666 = vdwg.mxu0
    %3667 = vmatpush.bf16.msra.mxu0 %v2846
    %3668 = vmatpush.bf16.msra.mxu0 %v2838
    %3669 = vmatpush.bf16.msra.mxu0 %v2830
    %3670 = vmatpush.bf16.msra.mxu0 %v2822
    %3671 = vmatpush.bf16.msra.mxu0 %v2814
    %3672 = vmatpush.bf16.msra.mxu0 %v2806
    %3673 = vmatpush.bf16.msra.mxu0 %v2798
    %3674 = vmatpush.bf16.msra.mxu0 %v2790
    %3675 = vmatmul.bf16.gmra.mxu0 %v3456
    %v3676 = vpop.f32.mrf.mxu0
    %v3677 = vadd.f32 %v3663, %v3676
    %v3678 = vpop.f32.mrf.mxu0
    %v3679 = vadd.f32 %v3665, %v3678
    %3680 = vdwg.mxu0
    %v3681 = vtanh.pop %v3481
    %v3682 = vtanh.pop %v3509
    %v3683 = vtanh.pop %v3537
    %v3684 = vtanh.pop %v3565
    %v3685 = vtanh.pop %v3593
    %v3686 = vtanh.pop %v3621
    %v3687 = vtanh.pop %v3649
    %v3688 = vtanh.pop %v3677
    %v3689 = vtanh.pop %v3483
    %v3690 = vtanh.pop %v3511
    %v3691 = vtanh.pop %v3539
    %v3692 = vtanh.pop %v3567
    %v3693 = vtanh.pop %v3595
    %v3694 = vtanh.pop %v3623
    %v3695 = vtanh.pop %v3651
    %v3696 = vtanh.pop %v3679
    %v3697 = vpack.c.bf16 %v3689, %v3681
    %v3698 = vpack.c.bf16 %v3690, %v3682
    %v3699 = vpack.c.bf16 %v3691, %v3683
    %v3700 = vpack.c.bf16 %v3692, %v3684
    %v3701 = vpack.c.bf16 %v3693, %v3685
    %v3702 = vpack.c.bf16 %v3694, %v3686
    %v3703 = vpack.c.bf16 %v3695, %v3687
    %v3704 = vpack.c.bf16 %v3696, %v3688
    %3705 = vmatpush.bf16.msra.mxu0 %v1714
    %3706 = vmatpush.bf16.msra.mxu0 %v1712
    %3707 = vmatpush.bf16.msra.mxu0 %v1710
    %3708 = vmatpush.bf16.msra.mxu0 %v1708
    %3709 = vmatpush.bf16.msra.mxu0 %v1706
    %3710 = vmatpush.bf16.msra.mxu0 %v1704
    %3711 = vmatpush.bf16.msra.mxu0 %v1702
    %3712 = vmatpush.bf16.msra.mxu0 %v1700
    %3713 = vmatmul.bf16.gmra.mxu0 %v3697
    %v3714 = vpop.f32.mrf.mxu0
    %v3715 = vadd.f32 0.0, %v3714
    %v3716 = vpop.f32.mrf.mxu0
    %v3717 = vadd.f32 0.0, %v3716
    %3718 = vdwg.mxu0
    %3719 = vmatpush.bf16.msra.mxu0 %v1730
    %3720 = vmatpush.bf16.msra.mxu0 %v1728
    %3721 = vmatpush.bf16.msra.mxu0 %v1726
    %3722 = vmatpush.bf16.msra.mxu0 %v1724
    %3723 = vmatpush.bf16.msra.mxu0 %v1722
    %3724 = vmatpush.bf16.msra.mxu0 %v1720
    %3725 = vmatpush.bf16.msra.mxu0 %v1718
    %3726 = vmatpush.bf16.msra.mxu0 %v1716
    %3727 = vmatmul.bf16.gmra.mxu0 %v3698
    %v3728 = vpop.f32.mrf.mxu0
    %v3729 = vadd.f32 %v3715, %v3728
    %v3730 = vpop.f32.mrf.mxu0
    %v3731 = vadd.f32 %v3717, %v3730
    %3732 = vdwg.mxu0
    %3733 = vmatpush.bf16.msra.mxu0 %v1746
    %3734 = vmatpush.bf16.msra.mxu0 %v1744
    %3735 = vmatpush.bf16.msra.mxu0 %v1742
    %3736 = vmatpush.bf16.msra.mxu0 %v1740
    %3737 = vmatpush.bf16.msra.mxu0 %v1738
    %3738 = vmatpush.bf16.msra.mxu0 %v1736
    %3739 = vmatpush.bf16.msra.mxu0 %v1734
    %3740 = vmatpush.bf16.msra.mxu0 %v1732
    %3741 = vmatmul.bf16.gmra.mxu0 %v3699
    %v3742 = vpop.f32.mrf.mxu0
    %v3743 = vadd.f32 %v3729, %v3742
    %v3744 = vpop.f32.mrf.mxu0
    %v3745 = vadd.f32 %v3731, %v3744
    %3746 = vdwg.mxu0
    %3747 = vmatpush.bf16.msra.mxu0 %v1762
    %3748 = vmatpush.bf16.msra.mxu0 %v1760
    %3749 = vmatpush.bf16.msra.mxu0 %v1758
    %3750 = vmatpush.bf16.msra.mxu0 %v1756
    %3751 = vmatpush.bf16.msra.mxu0 %v1754
    %3752 = vmatpush.bf16.msra.mxu0 %v1752
    %3753 = vmatpush.bf16.msra.mxu0 %v1750
    %3754 = vmatpush.bf16.msra.mxu0 %v1748
    %3755 = vmatmul.bf16.gmra.mxu0 %v3700
    %v3756 = vpop.f32.mrf.mxu0
    %v3757 = vadd.f32 %v3743, %v3756
    %v3758 = vpop.f32.mrf.mxu0
    %v3759 = vadd.f32 %v3745, %v3758
    %3760 = vdwg.mxu0
    %3761 = vmatpush.bf16.msra.mxu0 %v1778
    %3762 = vmatpush.bf16.msra.mxu0 %v1776
    %3763 = vmatpush.bf16.msra.mxu0 %v1774
    %3764 = vmatpush.bf16.msra.mxu0 %v1772
    %3765 = vmatpush.bf16.msra.mxu0 %v1770
    %3766 = vmatpush.bf16.msra.mxu0 %v1768
    %3767 = vmatpush.bf16.msra.mxu0 %v1766
    %3768 = vmatpush.bf16.msra.mxu0 %v1764
    %3769 = vmatmul.bf16.gmra.mxu0 %v3701
    %v3770 = vpop.f32.mrf.mxu0
    %v3771 = vadd.f32 %v3757, %v3770
    %v3772 = vpop.f32.mrf.mxu0
    %v3773 = vadd.f32 %v3759, %v3772
    %3774 = vdwg.mxu0
    %3775 = vmatpush.bf16.msra.mxu0 %v1794
    %3776 = vmatpush.bf16.msra.mxu0 %v1792
    %3777 = vmatpush.bf16.msra.mxu0 %v1790
    %3778 = vmatpush.bf16.msra.mxu0 %v1788
    %3779 = vmatpush.bf16.msra.mxu0 %v1786
    %3780 = vmatpush.bf16.msra.mxu0 %v1784
    %3781 = vmatpush.bf16.msra.mxu0 %v1782
    %3782 = vmatpush.bf16.msra.mxu0 %v1780
    %3783 = vmatmul.bf16.gmra.mxu0 %v3702
    %v3784 = vpop.f32.mrf.mxu0
    %v3785 = vadd.f32 %v3771, %v3784
    %v3786 = vpop.f32.mrf.mxu0
    %v3787 = vadd.f32 %v3773, %v3786
    %3788 = vdwg.mxu0
    %3789 = vmatpush.bf16.msra.mxu0 %v1810
    %3790 = vmatpush.bf16.msra.mxu0 %v1808
    %3791 = vmatpush.bf16.msra.mxu0 %v1806
    %3792 = vmatpush.bf16.msra.mxu0 %v1804
    %3793 = vmatpush.bf16.msra.mxu0 %v1802
    %3794 = vmatpush.bf16.msra.mxu0 %v1800
    %3795 = vmatpush.bf16.msra.mxu0 %v1798
    %3796 = vmatpush.bf16.msra.mxu0 %v1796
    %3797 = vmatmul.bf16.gmra.mxu0 %v3703
    %v3798 = vpop.f32.mrf.mxu0
    %v3799 = vadd.f32 %v3785, %v3798
    %v3800 = vpop.f32.mrf.mxu0
    %v3801 = vadd.f32 %v3787, %v3800
    %3802 = vdwg.mxu0
    %3803 = vmatpush.bf16.msra.mxu0 %v1826
    %3804 = vmatpush.bf16.msra.mxu0 %v1824
    %3805 = vmatpush.bf16.msra.mxu0 %v1822
    %3806 = vmatpush.bf16.msra.mxu0 %v1820
    %3807 = vmatpush.bf16.msra.mxu0 %v1818
    %3808 = vmatpush.bf16.msra.mxu0 %v1816
    %3809 = vmatpush.bf16.msra.mxu0 %v1814
    %3810 = vmatpush.bf16.msra.mxu0 %v1812
    %3811 = vmatmul.bf16.gmra.mxu0 %v3704
    %v3812 = vpop.f32.mrf.mxu0
    %v3813 = vadd.f32 %v3799, %v3812
    %v3814 = vpop.f32.mrf.mxu0
    %v3815 = vadd.f32 %v3801, %v3814
    %3816 = vdwg.mxu0
    %3817 = vmatpush.bf16.msra.mxu0 %v1715
    %3818 = vmatpush.bf16.msra.mxu0 %v1713
    %3819 = vmatpush.bf16.msra.mxu0 %v1711
    %3820 = vmatpush.bf16.msra.mxu0 %v1709
    %3821 = vmatpush.bf16.msra.mxu0 %v1707
    %3822 = vmatpush.bf16.msra.mxu0 %v1705
    %3823 = vmatpush.bf16.msra.mxu0 %v1703
    %3824 = vmatpush.bf16.msra.mxu0 %v1701
    %3825 = vmatmul.bf16.gmra.mxu0 %v3697
    %v3826 = vpop.f32.mrf.mxu0
    %v3827 = vadd.f32 0.0, %v3826
    %v3828 = vpop.f32.mrf.mxu0
    %v3829 = vadd.f32 0.0, %v3828
    %3830 = vdwg.mxu0
    %3831 = vmatpush.bf16.msra.mxu0 %v1731
    %3832 = vmatpush.bf16.msra.mxu0 %v1729
    %3833 = vmatpush.bf16.msra.mxu0 %v1727
    %3834 = vmatpush.bf16.msra.mxu0 %v1725
    %3835 = vmatpush.bf16.msra.mxu0 %v1723
    %3836 = vmatpush.bf16.msra.mxu0 %v1721
    %3837 = vmatpush.bf16.msra.mxu0 %v1719
    %3838 = vmatpush.bf16.msra.mxu0 %v1717
    %3839 = vmatmul.bf16.gmra.mxu0 %v3698
    %v3840 = vpop.f32.mrf.mxu0
    %v3841 = vadd.f32 %v3827, %v3840
    %v3842 = vpop.f32.mrf.mxu0
    %v3843 = vadd.f32 %v3829, %v3842
    %3844 = vdwg.mxu0
    %3845 = vmatpush.bf16.msra.mxu0 %v1747
    %3846 = vmatpush.bf16.msra.mxu0 %v1745
    %3847 = vmatpush.bf16.msra.mxu0 %v1743
    %3848 = vmatpush.bf16.msra.mxu0 %v1741
    %3849 = vmatpush.bf16.msra.mxu0 %v1739
    %3850 = vmatpush.bf16.msra.mxu0 %v1737
    %3851 = vmatpush.bf16.msra.mxu0 %v1735
    %3852 = vmatpush.bf16.msra.mxu0 %v1733
    %3853 = vmatmul.bf16.gmra.mxu0 %v3699
    %v3854 = vpop.f32.mrf.mxu0
    %v3855 = vadd.f32 %v3841, %v3854
    %v3856 = vpop.f32.mrf.mxu0
    %v3857 = vadd.f32 %v3843, %v3856
    %3858 = vdwg.mxu0
    %3859 = vmatpush.bf16.msra.mxu0 %v1763
    %3860 = vmatpush.bf16.msra.mxu0 %v1761
    %3861 = vmatpush.bf16.msra.mxu0 %v1759
    %3862 = vmatpush.bf16.msra.mxu0 %v1757
    %3863 = vmatpush.bf16.msra.mxu0 %v1755
    %3864 = vmatpush.bf16.msra.mxu0 %v1753
    %3865 = vmatpush.bf16.msra.mxu0 %v1751
    %3866 = vmatpush.bf16.msra.mxu0 %v1749
    %3867 = vmatmul.bf16.gmra.mxu0 %v3700
    %v3868 = vpop.f32.mrf.mxu0
    %v3869 = vadd.f32 %v3855, %v3868
    %v3870 = vpop.f32.mrf.mxu0
    %v3871 = vadd.f32 %v3857, %v3870
    %3872 = vdwg.mxu0
    %3873 = vmatpush.bf16.msra.mxu0 %v1779
    %3874 = vmatpush.bf16.msra.mxu0 %v1777
    %3875 = vmatpush.bf16.msra.mxu0 %v1775
    %3876 = vmatpush.bf16.msra.mxu0 %v1773
    %3877 = vmatpush.bf16.msra.mxu0 %v1771
    %3878 = vmatpush.bf16.msra.mxu0 %v1769
    %3879 = vmatpush.bf16.msra.mxu0 %v1767
    %3880 = vmatpush.bf16.msra.mxu0 %v1765
    %3881 = vmatmul.bf16.gmra.mxu0 %v3701
    %v3882 = vpop.f32.mrf.mxu0
    %v3883 = vadd.f32 %v3869, %v3882
    %v3884 = vpop.f32.mrf.mxu0
    %v3885 = vadd.f32 %v3871, %v3884
    %3886 = vdwg.mxu0
    %3887 = vmatpush.bf16.msra.mxu0 %v1795
    %3888 = vmatpush.bf16.msra.mxu0 %v1793
    %3889 = vmatpush.bf16.msra.mxu0 %v1791
    %3890 = vmatpush.bf16.msra.mxu0 %v1789
    %3891 = vmatpush.bf16.msra.mxu0 %v1787
    %3892 = vmatpush.bf16.msra.mxu0 %v1785
    %3893 = vmatpush.bf16.msra.mxu0 %v1783
    %3894 = vmatpush.bf16.msra.mxu0 %v1781
    %3895 = vmatmul.bf16.gmra.mxu0 %v3702
    %v3896 = vpop.f32.mrf.mxu0
    %v3897 = vadd.f32 %v3883, %v3896
    %v3898 = vpop.f32.mrf.mxu0
    %v3899 = vadd.f32 %v3885, %v3898
    %3900 = vdwg.mxu0
    %3901 = vmatpush.bf16.msra.mxu0 %v1811
    %3902 = vmatpush.bf16.msra.mxu0 %v1809
    %3903 = vmatpush.bf16.msra.mxu0 %v1807
    %3904 = vmatpush.bf16.msra.mxu0 %v1805
    %3905 = vmatpush.bf16.msra.mxu0 %v1803
    %3906 = vmatpush.bf16.msra.mxu0 %v1801
    %3907 = vmatpush.bf16.msra.mxu0 %v1799
    %3908 = vmatpush.bf16.msra.mxu0 %v1797
    %3909 = vmatmul.bf16.gmra.mxu0 %v3703
    %v3910 = vpop.f32.mrf.mxu0
    %v3911 = vadd.f32 %v3897, %v3910
    %v3912 = vpop.f32.mrf.mxu0
    %v3913 = vadd.f32 %v3899, %v3912
    %3914 = vdwg.mxu0
    %3915 = vmatpush.bf16.msra.mxu0 %v1827
    %3916 = vmatpush.bf16.msra.mxu0 %v1825
    %3917 = vmatpush.bf16.msra.mxu0 %v1823
    %3918 = vmatpush.bf16.msra.mxu0 %v1821
    %3919 = vmatpush.bf16.msra.mxu0 %v1819
    %3920 = vmatpush.bf16.msra.mxu0 %v1817
    %3921 = vmatpush.bf16.msra.mxu0 %v1815
    %3922 = vmatpush.bf16.msra.mxu0 %v1813
    %3923 = vmatmul.bf16.gmra.mxu0 %v3704
    %v3924 = vpop.f32.mrf.mxu0
    %v3925 = vadd.f32 %v3911, %v3924
    %v3926 = vpop.f32.mrf.mxu0
    %v3927 = vadd.f32 %v3913, %v3926
    %3928 = vdwg.mxu0
    %v3929 = vadd.f32 %v1056, %v3813
    %v3930 = vadd.f32 %v1168, %v3925
    %v3931 = vadd.f32 %v1058, %v3815
    %v3932 = vadd.f32 %v1170, %v3927
    %v3933 = vadd.f32 %v3451, %v3929
    %v3934 = vadd.f32 %v3452, %v3930
    %v3935 = vadd.f32 %v3453, %v3931
    %v3936 = vadd.f32 %v3454, %v3932
    %3937 = vst [vmem:[#allocation14] sm:$0xff] %v3933
    %3938 = vst [vmem:[#allocation14 + $0x8] sm:$0xff] %v3934
    %3939 = vst [vmem:[#allocation14 + $0x10] sm:$0xff] %v3935
    %3940 = vst [vmem:[#allocation14 + $0x18] sm:$0xff] %v3936
    // Predicated region
    $region54: #{tpu_custom_call.1} parent=1 // pred_check
      _
    $region55: #{tpu_custom_call.1} parent=1 // pred_check_branch
      %3942 = sbr.rel (0) target = $region57
    $region56: #{tpu_custom_call.1} parent=1 // pred_region
      %3944 = vsyncadd [#allocation7], 0
      %s3945 = sshll.u32 [#allocation14], 4
      %s3946 = int_to_ptr.vmem [resolvable:$true] %s3945
      %s3947 = sshll.u32 %s8, 4
      %s3948 = int_to_ptr.hbm [resolvable:$true] %s3947
      %3953 = dma.vmem_to_hbm [thread:$0]  %s3946, 512, %s3948, [#allocation7], 256, 256, 16
    $region57: #{tpu_custom_call.1} parent=1 // pred_fallthru
      _
    // Predicated region
    $region58: #{tpu_custom_call.1} parent=1 // pred_check
      _
    $region59: #{tpu_custom_call.1} parent=1 // pred_check_branch
      %3955 = sbr.rel (0) target = $region61
    $region60: #{tpu_custom_call.1} parent=1 // pred_region
      %3957 = dma.done [#allocation7], 512
    $region61: #{tpu_custom_call.1} parent=1 // pred_fallthru
      _
    %3958 = vsyncpa [#allocation6], 1
    %3959 = vsyncpa [#allocation9], 1
    %3960 = vsyncpa [#allocation12], 1
    %3961 = vsyncpa [#allocation7], 1
  %3962 = vsyncmov [#allocation4]
  %s3963 = vpop.sfrf %3962
  %p3964 = scmp.eq.s32.totalorder %s3963, 0
  %p3965 = pneg %p3964
  %3967 = shalt.err (%p3965)
  %s3968 = scalar_lea.sflag [#allocation4], 1
  %3969 = vsyncmov %s3968
  %s3970 = vpop.sfrf %3969
  %p3971 = scmp.eq.s32.totalorder %s3970, 0
  %p3972 = pneg %p3971
  %3974 = shalt.err (%p3972)

</llo_original>
